<compile_context>
chip_gen: v5e
topology: v5e:2x2
jax: 0.10.0
libtpu: 0.0.40
codegen_flags: <defaults>
</compile_context>

<pallas_src>
import functools
import math

import jax
import jax.numpy as jnp
from jax.experimental import pallas as pl
from jax.experimental.pallas import tpu as pltpu

_TQ_TARGET = 256  # amortizes ~0.35us per-grid-step overhead on v5e/v6e; fits 128MiB VMEM


def encoder_block_kernel(
    xq_ref, xfull_ref, bias_ref,
    wq_ref, bq_ref, wk_ref, bk_ref, wv_ref, bv_ref, wo_ref, bo_ref,
    g1_ref, be1_ref,
    w1_ref, b1_ref, w2_ref, b2_ref,
    g2_ref, be2_ref,
    o_ref,
    k_scr, v_scr, ctx_scr,
    *, num_heads,
):
    qi = pl.program_id(1)
    tq = xq_ref.shape[1]
    S = xfull_ref.shape[1]
    D = xq_ref.shape[2]
    dh = D // num_heads
    scale = 1.0 / math.sqrt(dh)

    # K/V projection over the full (padded) sequence: computed once per batch row
    # (first q-tile; the q axis is "arbitrary" so this runs sequentially on one core)
    # and kept resident in bf16 VMEM scratch across the q-tile axis.
    @pl.when(qi == 0)
    def _():
        xf = xfull_ref[0]                                                # (S, D) bf16
        k = jnp.dot(xf, wk_ref[...], preferred_element_type=jnp.float32) + bk_ref[...]
        v = jnp.dot(xf, wv_ref[...], preferred_element_type=jnp.float32) + bv_ref[...]
        k_scr[...] = k.astype(jnp.bfloat16)
        v_scr[...] = v.astype(jnp.bfloat16)

    x = xq_ref[0]                                                        # (tq, D) f32 residual path
    x_bf = x.astype(jnp.bfloat16)

    # Q projection; fold 1/sqrt(dh) into q once (O(tq*D)) instead of scaling logits.
    q = jnp.dot(x_bf, wq_ref[...], preferred_element_type=jnp.float32) + bq_ref[...]
    q_bf = (q * scale).astype(jnp.bfloat16)                              # (tq, D)

    # Hoisted additive-mask broadcast (JAX does not CSE broadcast_in_dim).
    bias_tq = jnp.broadcast_to(bias_ref[0], (tq, S))                     # (tq, S) f32

    k_all = k_scr[...]                                                   # (S, D) bf16
    v_all = v_scr[...]                                                   # (S, D) bf16

    # Per-head attention; never materializes (H, S, S) and does no head transposes.
    # Each head's context is written into its lane slice of a (tq, D) bf16 buffer so
    # the output projection below runs as a single full-K=D MXU matmul.
    # TODO(synk): for num_heads >= 8 / large S switch to lax.fori_loop with pl.ds
    # slices to bound live ranges; prefer configs with dh=128 to avoid lane shuffles.
    for h in range(num_heads):
        lo = h * dh
        qh = q_bf[:, lo:lo + dh]                                         # (tq, dh)
        kh = k_all[:, lo:lo + dh]                                        # (S, dh)
        vh = v_all[:, lo:lo + dh]                                        # (S, dh)
        logits = jax.lax.dot_general(                                    # q @ k^T, f32 acc
            qh, kh, (((1,), (1,)), ((), ())),
            preferred_element_type=jnp.float32) + bias_tq                # (tq, S)
        m = jnp.max(logits, axis=-1, keepdims=True)
        p = jnp.exp(logits - m)
        l = jnp.sum(p, axis=-1, keepdims=True)
        w = p * pl.reciprocal(l, approx=True)                            # softmax weights
        oh = jnp.dot(w.astype(jnp.bfloat16), vh,
                     preferred_element_type=jnp.float32)                 # (tq, dh)
        ctx_scr[:, lo:lo + dh] = oh.astype(jnp.bfloat16)

    # Single output projection: concat(heads) @ Wo with full contraction dim D.
    attended = jnp.dot(ctx_scr[...], wo_ref[...],
                       preferred_element_type=jnp.float32) + bo_ref[...]

    # residual + LayerNorm1 (dropout1 == identity); statistics in f32.
    hpre = x + attended
    mu = jnp.mean(hpre, axis=-1, keepdims=True)
    var = jnp.mean((hpre - mu) ** 2, axis=-1, keepdims=True)
    h1 = (hpre - mu) * jax.lax.rsqrt(var + 1e-5) * g1_ref[...] + be1_ref[...]

    # position-wise FFN (Linear -> Dropout(id) -> ReLU -> Linear), bf16 MXU / f32 acc.
    ff = jnp.dot(h1.astype(jnp.bfloat16), w1_ref[...],
                 preferred_element_type=jnp.float32) + b1_ref[...]
    ff = jnp.maximum(ff, 0.0)
    ff = jnp.dot(ff.astype(jnp.bfloat16), w2_ref[...],
                 preferred_element_type=jnp.float32) + b2_ref[...]

    # residual + LayerNorm2 (dropout2 == identity).
    y = h1 + ff
    mu2 = jnp.mean(y, axis=-1, keepdims=True)
    var2 = jnp.mean((y - mu2) ** 2, axis=-1, keepdims=True)
    y = (y - mu2) * jax.lax.rsqrt(var2 + 1e-5) * g2_ref[...] + be2_ref[...]

    o_ref[0] = y.astype(o_ref.dtype)


def _vmem_cap_bytes():
    # Generation-aware cap: ~85% of physical VMEM (64 MiB on v7x, 128 MiB v5e/v6e).
    try:
        return int(pltpu.get_tpu_info().vmem_capacity_bytes * 0.85)
    except Exception:
        return 54 << 20  # conservative fallback (fits v7x)


def _encoder_block_impl(x, bias, params, *, num_heads, tq, single_buffer_weights):
    B, S, D = x.shape
    d_ff = params["w1"].shape[1]
    n_q = S // tq

    bf16 = jnp.bfloat16
    cast = lambda name: params[name].astype(bf16)       # MXU operands in bf16

    # Weight / bias / LN-param blocks have a constant block index (DMA'd once); with
    # Buffered(1) the pipeliner also drops their second (useless) VMEM buffer.
    if single_buffer_weights:
        full2d = lambda shape: pl.BlockSpec(shape, lambda b, qi: (0, 0),
                                            pipeline_mode=pl.Buffered(1))
    else:
        full2d = lambda shape: pl.BlockSpec(shape, lambda b, qi: (0, 0))

    kernel = functools.partial(encoder_block_kernel, num_heads=num_heads)

    # Per-step VMEM budget, clamped to the chip's physical VMEM.
    w_bytes = (4 * D * D + 2 * D * d_ff) * 2                     # bf16 weights
    w_bufs = 1 if single_buffer_weights else 2
    misc_bytes = ((7 * D + d_ff) * 4 + S * 4) * 2                # biases / LN params / mask
    act_bytes = (2 * tq * D * 4 + 2 * tq * D * 4                 # xq tile + out tile (dbuf)
                 + 2 * S * D * 2                                 # xfull bf16 (dbuf)
                 + 2 * S * D * 2 + tq * D * 2                    # K/V/ctx scratch bf16
                 + (4 * tq * D + 2 * tq * d_ff + 3 * tq * S) * 4)  # live f32 temporaries
    vmem_budget = w_bufs * w_bytes + misc_bytes + act_bytes + (4 << 20)
    vmem_budget = int(max(16 << 20, min(vmem_budget, _vmem_cap_bytes())))

    cost = pl.CostEstimate(
        flops=int(2 * B * S * (4 * D * D + 2 * D * d_ff) + 4 * B * S * S * D),
        transcendentals=int(B * num_heads * S * S),
        bytes_accessed=int(B * S * D * 4           # x q-tiles (f32)
                           + B * S * D * 2         # full-seq x (bf16), once per batch row
                           + B * S * D * 4         # output write
                           + B * S * 4             # additive mask bias
                           + w_bytes),
    )

    return pl.pallas_call(
        kernel,
        out_shape=jax.ShapeDtypeStruct((B, S, D), jnp.float32),
        grid_spec=pltpu.PrefetchScalarGridSpec(
            num_scalar_prefetch=0,
            grid=(B, n_q),
            in_specs=[
                pl.BlockSpec((1, tq, D), lambda b, qi: (b, qi, 0)),   # x (q tile, f32)
                pl.BlockSpec((1, S, D), lambda b, qi: (b, 0, 0)),     # x (full seq, bf16 -> K/V)
                pl.BlockSpec((1, 1, S), lambda b, qi: (b, 0, 0)),     # additive mask bias
                full2d((D, D)), full2d((1, D)),                       # wq, bq
                full2d((D, D)), full2d((1, D)),                       # wk, bk
                full2d((D, D)), full2d((1, D)),                       # wv, bv
                full2d((D, D)), full2d((1, D)),                       # wo, bo
                full2d((1, D)), full2d((1, D)),                       # ln1 gamma, beta
                full2d((D, d_ff)), full2d((1, d_ff)),                 # w1, b1
                full2d((d_ff, D)), full2d((1, D)),                    # w2, b2
                full2d((1, D)), full2d((1, D)),                       # ln2 gamma, beta
            ],
            out_specs=pl.BlockSpec((1, tq, D), lambda b, qi: (b, qi, 0)),
            scratch_shapes=[
                pltpu.VMEM((S, D), jnp.bfloat16),    # K, full sequence
                pltpu.VMEM((S, D), jnp.bfloat16),    # V, full sequence
                pltpu.VMEM((tq, D), jnp.bfloat16),   # concat-head context for Wo matmul
            ],
        ),
        compiler_params=pltpu.CompilerParams(
            # q axis MUST stay "arbitrary": K/V scratch is written at qi == 0 and
            # reused across the q tiles of the same batch row.
            dimension_semantics=("parallel", "arbitrary"),
            vmem_limit_bytes=vmem_budget,
        ),
        cost_estimate=cost,
    )(
        x, x.astype(bf16), bias,
        cast("wq"), params["bq"], cast("wk"), params["bk"],
        cast("wv"), params["bv"], cast("wo"), params["bo"],
        params["g1"], params["be1"],
        cast("w1"), params["b1"], cast("w2"), params["b2"],
        params["g2"], params["be2"],
    )


def encoder_block(x, mask, params, *, num_heads):
    B, S0, D = x.shape
    assert D % num_heads == 0

    # Additive attention bias: 0 where keep, -1e9 where padded (replaces compare+select
    # over the logits; same softmax result as masked_fill(-9e15) for 0/1 masks).
    mask2d = mask.reshape(B, S0).astype(jnp.float32)
    bias = jnp.where(mask2d == 0.0, jnp.float32(-1e9), jnp.float32(0.0))

    # q tile: keep it large; pad S (and mask columns) instead of collapsing the tile.
    if S0 <= _TQ_TARGET:
        S, tq = S0, S0
    else:
        tq = _TQ_TARGET
        S = pl.cdiv(S0, tq) * tq
    if S != S0:
        x = jnp.pad(x, ((0, 0), (0, S - S0), (0, 0)))
        bias = jnp.pad(bias, ((0, 0), (0, S - S0)), constant_values=-1e9)
    bias = bias.reshape(B, 1, S)

    try:
        out = _encoder_block_impl(x, bias, params, num_heads=num_heads, tq=tq,
                                  single_buffer_weights=True)
    except Exception:
        # pipeline_mode=pl.Buffered(1) not supported by this jax build; fall back to
        # default double-buffered weight specs (correctness is unaffected).
        out = _encoder_block_impl(x, bias, params, num_heads=num_heads, tq=tq,
                                  single_buffer_weights=False)
    return out[:, :S0, :] if S != S0 else out


def _xavier(key, fan_in, fan_out):
    limit = math.sqrt(6.0 / (fan_in + fan_out))
    # stored transposed: (in, out) so kernels/reference do x @ W
    return jax.random.uniform(key, (fan_in, fan_out), jnp.float32, -limit, limit)


def make_params(key, d_model, d_ff):
    ks = jax.random.split(key, 6)
    zero = lambda n: jnp.zeros((1, n), jnp.float32)
    one = lambda n: jnp.ones((1, n), jnp.float32)
    return {
        "wq": _xavier(ks[0], d_model, d_model), "bq": zero(d_model),
        "wk": _xavier(ks[1], d_model, d_model), "bk": zero(d_model),
        "wv": _xavier(ks[2], d_model, d_model), "bv": zero(d_model),
        "wo": _xavier(ks[3], d_model, d_model), "bo": zero(d_model),
        "g1": one(d_model), "be1": zero(d_model),
        "w1": _xavier(ks[4], d_model, d_ff),    "b1": zero(d_ff),
        "w2": _xavier(ks[5], d_ff, d_model),    "b2": zero(d_model),
        "g2": one(d_model), "be2": zero(d_model),
    }


def encoder_block_ref(x, mask, params, *, num_heads):
    """Pure-JAX f32 reference mirroring the PyTorch module."""
    B, S, D = x.shape
    dh = D // num_heads
    lin = lambda v, w, b: v @ w + b
    q = lin(x, params["wq"], params["bq"]).reshape(B, S, num_heads, dh).transpose(0, 2, 1, 3)
    k = lin(x, params["wk"], params["bk"]).reshape(B, S, num_heads, dh).transpose(0, 2, 1, 3)
    v = lin(x, params["wv"], params["bv"]).reshape(B, S, num_heads, dh).transpose(0, 2, 1, 3)
    logits = jnp.einsum("bhsd,bhtd->bhst", q, k) / math.sqrt(dh)
    logits = jnp.where(mask.reshape(B, 1, 1, S) == 0.0, -9e15, logits)
    w = jax.nn.softmax(logits, axis=-1)
    attn = jnp.einsum("bhst,bhtd->bhsd", w, v).transpose(0, 2, 1, 3).reshape(B, S, D)
    attended = lin(attn, params["wo"], params["bo"])

    def ln(h, g, b):
        mu = jnp.mean(h, axis=-1, keepdims=True)
        var = jnp.mean((h - mu) ** 2, axis=-1, keepdims=True)
        return (h - mu) * jax.lax.rsqrt(var + 1e-5) * g + b

    h = ln(x + attended, params["g1"], params["be1"])
    ff = lin(jnp.maximum(lin(h, params["w1"], params["b1"]), 0.0),
             params["w2"], params["b2"])
    return ln(h + ff, params["g2"], params["be2"])


if __name__ == "__main__":
    B, S, D, H, D_FF = 2, 8, 32, 4, 64

    key = jax.random.PRNGKey(0)
    kx, kp = jax.random.split(key)
    x = jax.random.normal(kx, (B, S, D), jnp.float32)
    # padding mask: 1 = keep, 0 = pad (last two positions of batch 1 padded)
    mask = jnp.ones((B, 1, S), jnp.float32).at[1, 0, -2:].set(0.0)

    params = make_params(kp, D, D_FF)

    out = jax.block_until_ready(encoder_block(x, mask, params, num_heads=H))
    ref = encoder_block_ref(x, mask, params, num_heads=H)

    assert out.shape == (B, S, D)
    max_err = float(jnp.max(jnp.abs(out - ref)))
    # bf16 MXU operands + approx reciprocal => relaxed tolerance vs f32 reference.
    assert jnp.allclose(out, ref, atol=5e-2, rtol=5e-2), f"mismatch vs reference, max|err|={max_err}"

    print("KERNEL_OK")
</pallas_src>

<mosaic_0001>
module attributes {stable_mosaic.version = 11 : i64} {
  func.func @encoder_block_kernel(%arg0: i32, %arg1: i32, %arg2: memref<1x8x32xf32, #tpu.memory_space<vmem>>, %arg3: memref<1x8x32xbf16, #tpu.memory_space<vmem>>, %arg4: memref<1x1x8xf32, #tpu.memory_space<vmem>>, %arg5: memref<32x32xbf16, #tpu.memory_space<vmem>>, %arg6: memref<1x32xf32, #tpu.memory_space<vmem>>, %arg7: memref<32x32xbf16, #tpu.memory_space<vmem>>, %arg8: memref<1x32xf32, #tpu.memory_space<vmem>>, %arg9: memref<32x32xbf16, #tpu.memory_space<vmem>>, %arg10: memref<1x32xf32, #tpu.memory_space<vmem>>, %arg11: memref<32x32xbf16, #tpu.memory_space<vmem>>, %arg12: memref<1x32xf32, #tpu.memory_space<vmem>>, %arg13: memref<1x32xf32, #tpu.memory_space<vmem>>, %arg14: memref<1x32xf32, #tpu.memory_space<vmem>>, %arg15: memref<32x64xbf16, #tpu.memory_space<vmem>>, %arg16: memref<1x64xf32, #tpu.memory_space<vmem>>, %arg17: memref<64x32xbf16, #tpu.memory_space<vmem>>, %arg18: memref<1x32xf32, #tpu.memory_space<vmem>>, %arg19: memref<1x32xf32, #tpu.memory_space<vmem>>, %arg20: memref<1x32xf32, #tpu.memory_space<vmem>>, %arg21: memref<1x8x32xf32, #tpu.memory_space<vmem>>, %arg22: memref<8x32xbf16, #tpu.memory_space<vmem>>, %arg23: memref<8x32xbf16, #tpu.memory_space<vmem>>, %arg24: memref<8x32xbf16, #tpu.memory_space<vmem>>) attributes {dimension_semantics = [#tpu.dimension_semantics<parallel>, #tpu.dimension_semantics<arbitrary>], iteration_bounds = array<i64: 2, 1>, scalar_prefetch = 0 : i64, scratch_operands = 3 : i64, tpu.core_type = #tpu.core_type<tc>, window_params = [{transform_indices = @transform_0, window_bounds = array<i64: 1, 8, 32>}, {transform_indices = @transform_1, window_bounds = array<i64: 1, 8, 32>}, {transform_indices = @transform_2, window_bounds = array<i64: 1, 1, 8>}, {pipeline_mode = #tpu.pipeline_mode<synchronous>, transform_indices = @transform_3, window_bounds = array<i64: 32, 32>}, {pipeline_mode = #tpu.pipeline_mode<synchronous>, transform_indices = @transform_4, window_bounds = array<i64: 1, 32>}, {pipeline_mode = #tpu.pipeline_mode<synchronous>, transform_indices = @transform_5, window_bounds = array<i64: 32, 32>}, {pipeline_mode = #tpu.pipeline_mode<synchronous>, transform_indices = @transform_6, window_bounds = array<i64: 1, 32>}, {pipeline_mode = #tpu.pipeline_mode<synchronous>, transform_indices = @transform_7, window_bounds = array<i64: 32, 32>}, {pipeline_mode = #tpu.pipeline_mode<synchronous>, transform_indices = @transform_8, window_bounds = array<i64: 1, 32>}, {pipeline_mode = #tpu.pipeline_mode<synchronous>, transform_indices = @transform_9, window_bounds = array<i64: 32, 32>}, {pipeline_mode = #tpu.pipeline_mode<synchronous>, transform_indices = @transform_10, window_bounds = array<i64: 1, 32>}, {pipeline_mode = #tpu.pipeline_mode<synchronous>, transform_indices = @transform_11, window_bounds = array<i64: 1, 32>}, {pipeline_mode = #tpu.pipeline_mode<synchronous>, transform_indices = @transform_12, window_bounds = array<i64: 1, 32>}, {pipeline_mode = #tpu.pipeline_mode<synchronous>, transform_indices = @transform_13, window_bounds = array<i64: 32, 64>}, {pipeline_mode = #tpu.pipeline_mode<synchronous>, transform_indices = @transform_14, window_bounds = array<i64: 1, 64>}, {pipeline_mode = #tpu.pipeline_mode<synchronous>, transform_indices = @transform_15, window_bounds = array<i64: 64, 32>}, {pipeline_mode = #tpu.pipeline_mode<synchronous>, transform_indices = @transform_16, window_bounds = array<i64: 1, 32>}, {pipeline_mode = #tpu.pipeline_mode<synchronous>, transform_indices = @transform_17, window_bounds = array<i64: 1, 32>}, {pipeline_mode = #tpu.pipeline_mode<synchronous>, transform_indices = @transform_18, window_bounds = array<i64: 1, 32>}, {transform_indices = @transform_19, window_bounds = array<i64: 1, 8, 32>}]} {
    %c0_i32 = arith.constant 0 : i32
    %0 = arith.cmpi eq, %arg1, %c0_i32 : i32
    %1 = arith.extui %0 : i1 to i32
    %c0_i32_0 = arith.constant 0 : i32
    %2 = arith.cmpi ne, %1, %c0_i32_0 : i32
    scf.if %2 {
      %c0_75 = arith.constant 0 : index
      %c0_76 = arith.constant 0 : index
      %c0_77 = arith.constant 0 : index
      %169 = vector.load %arg3[%c0_75, %c0_76, %c0_77] : memref<1x8x32xbf16, #tpu.memory_space<vmem>>, vector<1x8x32xbf16>
      %170 = vector.shape_cast %169 : vector<1x8x32xbf16> to vector<8x32xbf16>
      %c0_78 = arith.constant 0 : index
      %c0_79 = arith.constant 0 : index
      %171 = vector.load %arg7[%c0_78, %c0_79] : memref<32x32xbf16, #tpu.memory_space<vmem>>, vector<32x32xbf16>
      %cst_80 = arith.constant dense<0.000000e+00> : vector<8x32xf32>
      %172 = tpu.matmul %170, %171, %cst_80 {dimension_numbers = #tpu.dot_dimension_numbers<[1], [0], [0], [1], [0, 0, 1, 1], [], []>} : vector<8x32xbf16>, vector<32x32xbf16>, vector<8x32xf32> -> vector<8x32xf32>
      %c0_81 = arith.constant 0 : index
      %c0_82 = arith.constant 0 : index
      %173 = vector.load %arg8[%c0_81, %c0_82] : memref<1x32xf32, #tpu.memory_space<vmem>>, vector<1x32xf32>
      %174 = vector.broadcast %173 : vector<1x32xf32> to vector<8x32xf32>
      %175 = arith.addf %172, %174 : vector<8x32xf32>
      %c0_83 = arith.constant 0 : index
      %c0_84 = arith.constant 0 : index
      %176 = vector.load %arg9[%c0_83, %c0_84] : memref<32x32xbf16, #tpu.memory_space<vmem>>, vector<32x32xbf16>
      %cst_85 = arith.constant dense<0.000000e+00> : vector<8x32xf32>
      %177 = tpu.matmul %170, %176, %cst_85 {dimension_numbers = #tpu.dot_dimension_numbers<[1], [0], [0], [1], [0, 0, 1, 1], [], []>} : vector<8x32xbf16>, vector<32x32xbf16>, vector<8x32xf32> -> vector<8x32xf32>
      %c0_86 = arith.constant 0 : index
      %c0_87 = arith.constant 0 : index
      %178 = vector.load %arg10[%c0_86, %c0_87] : memref<1x32xf32, #tpu.memory_space<vmem>>, vector<1x32xf32>
      %179 = vector.broadcast %178 : vector<1x32xf32> to vector<8x32xf32>
      %180 = arith.addf %177, %179 : vector<8x32xf32>
      %181 = arith.truncf %175 : vector<8x32xf32> to vector<8x32xbf16>
      %c0_88 = arith.constant 0 : index
      %c0_89 = arith.constant 0 : index
      %182 = vector.load %arg22[%c0_88, %c0_89] : memref<8x32xbf16, #tpu.memory_space<vmem>>, vector<8x32xbf16>
      tpu.vector_store %arg22[%c0_88, %c0_89], %181 {strides = array<i32>} : memref<8x32xbf16, #tpu.memory_space<vmem>>, vector<8x32xbf16>,
      %183 = arith.truncf %180 : vector<8x32xf32> to vector<8x32xbf16>
      %c0_90 = arith.constant 0 : index
      %c0_91 = arith.constant 0 : index
      %184 = vector.load %arg23[%c0_90, %c0_91] : memref<8x32xbf16, #tpu.memory_space<vmem>>, vector<8x32xbf16>
      tpu.vector_store %arg23[%c0_90, %c0_91], %183 {strides = array<i32>} : memref<8x32xbf16, #tpu.memory_space<vmem>>, vector<8x32xbf16>,
    } else {
    }
    %c0 = arith.constant 0 : index
    %c0_1 = arith.constant 0 : index
    %c0_2 = arith.constant 0 : index
    %3 = vector.load %arg2[%c0, %c0_1, %c0_2] : memref<1x8x32xf32, #tpu.memory_space<vmem>>, vector<1x8x32xf32>
    %4 = vector.shape_cast %3 : vector<1x8x32xf32> to vector<8x32xf32>
    %5 = arith.truncf %4 : vector<8x32xf32> to vector<8x32xbf16>
    %c0_3 = arith.constant 0 : index
    %c0_4 = arith.constant 0 : index
    %6 = vector.load %arg5[%c0_3, %c0_4] : memref<32x32xbf16, #tpu.memory_space<vmem>>, vector<32x32xbf16>
    %cst = arith.constant dense<0.000000e+00> : vector<8x32xf32>
    %7 = tpu.matmul %5, %6, %cst {dimension_numbers = #tpu.dot_dimension_numbers<[1], [0], [0], [1], [0, 0, 1, 1], [], []>} : vector<8x32xbf16>, vector<32x32xbf16>, vector<8x32xf32> -> vector<8x32xf32>
    %c0_5 = arith.constant 0 : index
    %c0_6 = arith.constant 0 : index
    %8 = vector.load %arg6[%c0_5, %c0_6] : memref<1x32xf32, #tpu.memory_space<vmem>>, vector<1x32xf32>
    %9 = vector.broadcast %8 : vector<1x32xf32> to vector<8x32xf32>
    %10 = arith.addf %7, %9 : vector<8x32xf32>
    %cst_7 = arith.constant 0.353553385 : f32
    %11 = vector.broadcast %cst_7 : f32 to vector<8x32xf32>
    %12 = arith.mulf %10, %11 : vector<8x32xf32>
    %13 = arith.truncf %12 : vector<8x32xf32> to vector<8x32xbf16>
    %c0_8 = arith.constant 0 : index
    %c0_9 = arith.constant 0 : index
    %c0_10 = arith.constant 0 : index
    %14 = vector.load %arg4[%c0_8, %c0_9, %c0_10] : memref<1x1x8xf32, #tpu.memory_space<vmem>>, vector<1x1x8xf32>
    %15 = vector.shape_cast %14 : vector<1x1x8xf32> to vector<1x8xf32>
    %16 = vector.shape_cast %15 : vector<1x8xf32> to vector<1x8xf32>
    %17 = vector.broadcast %16 : vector<1x8xf32> to vector<8x8xf32>
    %c0_11 = arith.constant 0 : index
    %c0_12 = arith.constant 0 : index
    %18 = vector.load %arg22[%c0_11, %c0_12] : memref<8x32xbf16, #tpu.memory_space<vmem>>, vector<8x32xbf16>
    %c0_13 = arith.constant 0 : index
    %c0_14 = arith.constant 0 : index
    %19 = vector.load %arg23[%c0_13, %c0_14] : memref<8x32xbf16, #tpu.memory_space<vmem>>, vector<8x32xbf16>
    %20 = vector.extract_strided_slice %13 {offsets = [0, 0], sizes = [8, 8], strides = [1, 1]} : vector<8x32xbf16> to vector<8x8xbf16>
    %21 = vector.extract_strided_slice %18 {offsets = [0, 0], sizes = [8, 8], strides = [1, 1]} : vector<8x32xbf16> to vector<8x8xbf16>
    %22 = vector.extract_strided_slice %19 {offsets = [0, 0], sizes = [8, 8], strides = [1, 1]} : vector<8x32xbf16> to vector<8x8xbf16>
    %cst_15 = arith.constant dense<0.000000e+00> : vector<8x8xf32>
    %23 = tpu.matmul %20, %21, %cst_15 {dimension_numbers = #tpu.dot_dimension_numbers<[1], [1], [0], [0], [0, 0, 1, 0], [], []>} : vector<8x8xbf16>, vector<8x8xbf16>, vector<8x8xf32> -> vector<8x8xf32>
    %24 = arith.addf %23, %17 : vector<8x8xf32>
    %cst_16 = arith.constant dense<0xFF800000> : vector<8xf32>
    %25 = vector.multi_reduction <maximumf>, %24, %cst_16 [1] : vector<8x8xf32> to vector<8xf32>
    %26 = vector.shape_cast %25 : vector<8xf32> to vector<8x1xf32>
    %27 = vector.broadcast %26 : vector<8x1xf32> to vector<8x8xf32>
    %28 = arith.subf %24, %27 : vector<8x8xf32>
    %29 = math.exp %28 : vector<8x8xf32>
    %cst_17 = arith.constant dense<0.000000e+00> : vector<8xf32>
    %30 = vector.multi_reduction <add>, %29, %cst_17 [1] : vector<8x8xf32> to vector<8xf32>
    %31 = vector.shape_cast %30 : vector<8xf32> to vector<8x1xf32>
    %32 = tpu.reciprocal %31 {approx = true} : vector<8x1xf32> -> vector<8x1xf32>
    %33 = vector.broadcast %32 : vector<8x1xf32> to vector<8x8xf32>
    %34 = arith.mulf %29, %33 : vector<8x8xf32>
    %35 = arith.truncf %34 : vector<8x8xf32> to vector<8x8xbf16>
    %cst_18 = arith.constant dense<0.000000e+00> : vector<8x8xf32>
    %36 = tpu.matmul %35, %22, %cst_18 {dimension_numbers = #tpu.dot_dimension_numbers<[1], [0], [0], [1], [0, 0, 1, 1], [], []>} : vector<8x8xbf16>, vector<8x8xbf16>, vector<8x8xf32> -> vector<8x8xf32>
    %37 = arith.truncf %36 : vector<8x8xf32> to vector<8x8xbf16>
    %c0_19 = arith.constant 0 : index
    %c0_20 = arith.constant 0 : index
    %38 = vector.load %arg24[%c0_19, %c0_20] : memref<8x32xbf16, #tpu.memory_space<vmem>>, vector<8x8xbf16>
    tpu.vector_store %arg24[%c0_19, %c0_20], %37 {strides = array<i32>} : memref<8x32xbf16, #tpu.memory_space<vmem>>, vector<8x8xbf16>,
    %39 = vector.extract_strided_slice %13 {offsets = [0, 8], sizes = [8, 8], strides = [1, 1]} : vector<8x32xbf16> to vector<8x8xbf16>
    %40 = vector.extract_strided_slice %18 {offsets = [0, 8], sizes = [8, 8], strides = [1, 1]} : vector<8x32xbf16> to vector<8x8xbf16>
    %41 = vector.extract_strided_slice %19 {offsets = [0, 8], sizes = [8, 8], strides = [1, 1]} : vector<8x32xbf16> to vector<8x8xbf16>
    %cst_21 = arith.constant dense<0.000000e+00> : vector<8x8xf32>
    %42 = tpu.matmul %39, %40, %cst_21 {dimension_numbers = #tpu.dot_dimension_numbers<[1], [1], [0], [0], [0, 0, 1, 0], [], []>} : vector<8x8xbf16>, vector<8x8xbf16>, vector<8x8xf32> -> vector<8x8xf32>
    %43 = arith.addf %42, %17 : vector<8x8xf32>
    %cst_22 = arith.constant dense<0xFF800000> : vector<8xf32>
    %44 = vector.multi_reduction <maximumf>, %43, %cst_22 [1] : vector<8x8xf32> to vector<8xf32>
    %45 = vector.shape_cast %44 : vector<8xf32> to vector<8x1xf32>
    %46 = vector.broadcast %45 : vector<8x1xf32> to vector<8x8xf32>
    %47 = arith.subf %43, %46 : vector<8x8xf32>
    %48 = math.exp %47 : vector<8x8xf32>
    %cst_23 = arith.constant dense<0.000000e+00> : vector<8xf32>
    %49 = vector.multi_reduction <add>, %48, %cst_23 [1] : vector<8x8xf32> to vector<8xf32>
    %50 = vector.shape_cast %49 : vector<8xf32> to vector<8x1xf32>
    %51 = tpu.reciprocal %50 {approx = true} : vector<8x1xf32> -> vector<8x1xf32>
    %52 = vector.broadcast %51 : vector<8x1xf32> to vector<8x8xf32>
    %53 = arith.mulf %48, %52 : vector<8x8xf32>
    %54 = arith.truncf %53 : vector<8x8xf32> to vector<8x8xbf16>
    %cst_24 = arith.constant dense<0.000000e+00> : vector<8x8xf32>
    %55 = tpu.matmul %54, %41, %cst_24 {dimension_numbers = #tpu.dot_dimension_numbers<[1], [0], [0], [1], [0, 0, 1, 1], [], []>} : vector<8x8xbf16>, vector<8x8xbf16>, vector<8x8xf32> -> vector<8x8xf32>
    %56 = arith.truncf %55 : vector<8x8xf32> to vector<8x8xbf16>
    %c0_25 = arith.constant 0 : index
    %c8 = arith.constant 8 : index
    %57 = vector.load %arg24[%c0_25, %c8] : memref<8x32xbf16, #tpu.memory_space<vmem>>, vector<8x8xbf16>
    tpu.vector_store %arg24[%c0_25, %c8], %56 {strides = array<i32>} : memref<8x32xbf16, #tpu.memory_space<vmem>>, vector<8x8xbf16>,
    %58 = vector.extract_strided_slice %13 {offsets = [0, 16], sizes = [8, 8], strides = [1, 1]} : vector<8x32xbf16> to vector<8x8xbf16>
    %59 = vector.extract_strided_slice %18 {offsets = [0, 16], sizes = [8, 8], strides = [1, 1]} : vector<8x32xbf16> to vector<8x8xbf16>
    %60 = vector.extract_strided_slice %19 {offsets = [0, 16], sizes = [8, 8], strides = [1, 1]} : vector<8x32xbf16> to vector<8x8xbf16>
    %cst_26 = arith.constant dense<0.000000e+00> : vector<8x8xf32>
    %61 = tpu.matmul %58, %59, %cst_26 {dimension_numbers = #tpu.dot_dimension_numbers<[1], [1], [0], [0], [0, 0, 1, 0], [], []>} : vector<8x8xbf16>, vector<8x8xbf16>, vector<8x8xf32> -> vector<8x8xf32>
    %62 = arith.addf %61, %17 : vector<8x8xf32>
    %cst_27 = arith.constant dense<0xFF800000> : vector<8xf32>
    %63 = vector.multi_reduction <maximumf>, %62, %cst_27 [1] : vector<8x8xf32> to vector<8xf32>
    %64 = vector.shape_cast %63 : vector<8xf32> to vector<8x1xf32>
    %65 = vector.broadcast %64 : vector<8x1xf32> to vector<8x8xf32>
    %66 = arith.subf %62, %65 : vector<8x8xf32>
    %67 = math.exp %66 : vector<8x8xf32>
    %cst_28 = arith.constant dense<0.000000e+00> : vector<8xf32>
    %68 = vector.multi_reduction <add>, %67, %cst_28 [1] : vector<8x8xf32> to vector<8xf32>
    %69 = vector.shape_cast %68 : vector<8xf32> to vector<8x1xf32>
    %70 = tpu.reciprocal %69 {approx = true} : vector<8x1xf32> -> vector<8x1xf32>
    %71 = vector.broadcast %70 : vector<8x1xf32> to vector<8x8xf32>
    %72 = arith.mulf %67, %71 : vector<8x8xf32>
    %73 = arith.truncf %72 : vector<8x8xf32> to vector<8x8xbf16>
    %cst_29 = arith.constant dense<0.000000e+00> : vector<8x8xf32>
    %74 = tpu.matmul %73, %60, %cst_29 {dimension_numbers = #tpu.dot_dimension_numbers<[1], [0], [0], [1], [0, 0, 1, 1], [], []>} : vector<8x8xbf16>, vector<8x8xbf16>, vector<8x8xf32> -> vector<8x8xf32>
    %75 = arith.truncf %74 : vector<8x8xf32> to vector<8x8xbf16>
    %c0_30 = arith.constant 0 : index
    %c16 = arith.constant 16 : index
    %76 = vector.load %arg24[%c0_30, %c16] : memref<8x32xbf16, #tpu.memory_space<vmem>>, vector<8x8xbf16>
    tpu.vector_store %arg24[%c0_30, %c16], %75 {strides = array<i32>} : memref<8x32xbf16, #tpu.memory_space<vmem>>, vector<8x8xbf16>,
    %77 = vector.extract_strided_slice %13 {offsets = [0, 24], sizes = [8, 8], strides = [1, 1]} : vector<8x32xbf16> to vector<8x8xbf16>
    %78 = vector.extract_strided_slice %18 {offsets = [0, 24], sizes = [8, 8], strides = [1, 1]} : vector<8x32xbf16> to vector<8x8xbf16>
    %79 = vector.extract_strided_slice %19 {offsets = [0, 24], sizes = [8, 8], strides = [1, 1]} : vector<8x32xbf16> to vector<8x8xbf16>
    %cst_31 = arith.constant dense<0.000000e+00> : vector<8x8xf32>
    %80 = tpu.matmul %77, %78, %cst_31 {dimension_numbers = #tpu.dot_dimension_numbers<[1], [1], [0], [0], [0, 0, 1, 0], [], []>} : vector<8x8xbf16>, vector<8x8xbf16>, vector<8x8xf32> -> vector<8x8xf32>
    %81 = arith.addf %80, %17 : vector<8x8xf32>
    %cst_32 = arith.constant dense<0xFF800000> : vector<8xf32>
    %82 = vector.multi_reduction <maximumf>, %81, %cst_32 [1] : vector<8x8xf32> to vector<8xf32>
    %83 = vector.shape_cast %82 : vector<8xf32> to vector<8x1xf32>
    %84 = vector.broadcast %83 : vector<8x1xf32> to vector<8x8xf32>
    %85 = arith.subf %81, %84 : vector<8x8xf32>
    %86 = math.exp %85 : vector<8x8xf32>
    %cst_33 = arith.constant dense<0.000000e+00> : vector<8xf32>
    %87 = vector.multi_reduction <add>, %86, %cst_33 [1] : vector<8x8xf32> to vector<8xf32>
    %88 = vector.shape_cast %87 : vector<8xf32> to vector<8x1xf32>
    %89 = tpu.reciprocal %88 {approx = true} : vector<8x1xf32> -> vector<8x1xf32>
    %90 = vector.broadcast %89 : vector<8x1xf32> to vector<8x8xf32>
    %91 = arith.mulf %86, %90 : vector<8x8xf32>
    %92 = arith.truncf %91 : vector<8x8xf32> to vector<8x8xbf16>
    %cst_34 = arith.constant dense<0.000000e+00> : vector<8x8xf32>
    %93 = tpu.matmul %92, %79, %cst_34 {dimension_numbers = #tpu.dot_dimension_numbers<[1], [0], [0], [1], [0, 0, 1, 1], [], []>} : vector<8x8xbf16>, vector<8x8xbf16>, vector<8x8xf32> -> vector<8x8xf32>
    %94 = arith.truncf %93 : vector<8x8xf32> to vector<8x8xbf16>
    %c0_35 = arith.constant 0 : index
    %c24 = arith.constant 24 : index
    %95 = vector.load %arg24[%c0_35, %c24] : memref<8x32xbf16, #tpu.memory_space<vmem>>, vector<8x8xbf16>
    tpu.vector_store %arg24[%c0_35, %c24], %94 {strides = array<i32>} : memref<8x32xbf16, #tpu.memory_space<vmem>>, vector<8x8xbf16>,
    %c0_36 = arith.constant 0 : index
    %c0_37 = arith.constant 0 : index
    %96 = vector.load %arg24[%c0_36, %c0_37] : memref<8x32xbf16, #tpu.memory_space<vmem>>, vector<8x32xbf16>
    %c0_38 = arith.constant 0 : index
    %c0_39 = arith.constant 0 : index
    %97 = vector.load %arg11[%c0_38, %c0_39] : memref<32x32xbf16, #tpu.memory_space<vmem>>, vector<32x32xbf16>
    %cst_40 = arith.constant dense<0.000000e+00> : vector<8x32xf32>
    %98 = tpu.matmul %96, %97, %cst_40 {dimension_numbers = #tpu.dot_dimension_numbers<[1], [0], [0], [1], [0, 0, 1, 1], [], []>} : vector<8x32xbf16>, vector<32x32xbf16>, vector<8x32xf32> -> vector<8x32xf32>
    %c0_41 = arith.constant 0 : index
    %c0_42 = arith.constant 0 : index
    %99 = vector.load %arg12[%c0_41, %c0_42] : memref<1x32xf32, #tpu.memory_space<vmem>>, vector<1x32xf32>
    %100 = vector.broadcast %99 : vector<1x32xf32> to vector<8x32xf32>
    %101 = arith.addf %98, %100 : vector<8x32xf32>
    %102 = arith.addf %4, %101 : vector<8x32xf32>
    %cst_43 = arith.constant dense<0.000000e+00> : vector<8xf32>
    %103 = vector.multi_reduction <add>, %102, %cst_43 [1] : vector<8x32xf32> to vector<8xf32>
    %104 = vector.shape_cast %103 : vector<8xf32> to vector<8x1xf32>
    %cst_44 = arith.constant 3.200000e+01 : f32
    %105 = vector.broadcast %cst_44 : f32 to vector<8x1xf32>
    %106 = arith.divf %104, %105 : vector<8x1xf32>
    %107 = vector.broadcast %106 : vector<8x1xf32> to vector<8x32xf32>
    %108 = arith.subf %102, %107 : vector<8x32xf32>
    %109 = arith.mulf %108, %108 : vector<8x32xf32>
    %cst_45 = arith.constant dense<0.000000e+00> : vector<8xf32>
    %110 = vector.multi_reduction <add>, %109, %cst_45 [1] : vector<8x32xf32> to vector<8xf32>
    %111 = vector.shape_cast %110 : vector<8xf32> to vector<8x1xf32>
    %cst_46 = arith.constant 3.200000e+01 : f32
    %112 = vector.broadcast %cst_46 : f32 to vector<8x1xf32>
    %113 = arith.divf %111, %112 : vector<8x1xf32>
    %114 = vector.broadcast %106 : vector<8x1xf32> to vector<8x32xf32>
    %115 = arith.subf %102, %114 : vector<8x32xf32>
    %cst_47 = arith.constant 9.99999974E-6 : f32
    %116 = vector.broadcast %cst_47 : f32 to vector<8x1xf32>
    %117 = arith.addf %113, %116 : vector<8x1xf32>
    %118 = math.rsqrt %117 : vector<8x1xf32>
    %119 = vector.broadcast %118 : vector<8x1xf32> to vector<8x32xf32>
    %120 = arith.mulf %115, %119 : vector<8x32xf32>
    %c0_48 = arith.constant 0 : index
    %c0_49 = arith.constant 0 : index
    %121 = vector.load %arg13[%c0_48, %c0_49] : memref<1x32xf32, #tpu.memory_space<vmem>>, vector<1x32xf32>
    %122 = vector.broadcast %121 : vector<1x32xf32> to vector<8x32xf32>
    %123 = arith.mulf %120, %122 : vector<8x32xf32>
    %c0_50 = arith.constant 0 : index
    %c0_51 = arith.constant 0 : index
    %124 = vector.load %arg14[%c0_50, %c0_51] : memref<1x32xf32, #tpu.memory_space<vmem>>, vector<1x32xf32>
    %125 = vector.broadcast %124 : vector<1x32xf32> to vector<8x32xf32>
    %126 = arith.addf %123, %125 : vector<8x32xf32>
    %127 = arith.truncf %126 : vector<8x32xf32> to vector<8x32xbf16>
    %c0_52 = arith.constant 0 : index
    %c0_53 = arith.constant 0 : index
    %128 = vector.load %arg15[%c0_52, %c0_53] : memref<32x64xbf16, #tpu.memory_space<vmem>>, vector<32x64xbf16>
    %cst_54 = arith.constant dense<0.000000e+00> : vector<8x64xf32>
    %129 = tpu.matmul %127, %128, %cst_54 {dimension_numbers = #tpu.dot_dimension_numbers<[1], [0], [0], [1], [0, 0, 1, 1], [], []>} : vector<8x32xbf16>, vector<32x64xbf16>, vector<8x64xf32> -> vector<8x64xf32>
    %c0_55 = arith.constant 0 : index
    %c0_56 = arith.constant 0 : index
    %130 = vector.load %arg16[%c0_55, %c0_56] : memref<1x64xf32, #tpu.memory_space<vmem>>, vector<1x64xf32>
    %131 = vector.broadcast %130 : vector<1x64xf32> to vector<8x64xf32>
    %132 = arith.addf %129, %131 : vector<8x64xf32>
    %cst_57 = arith.constant 0.000000e+00 : f32
    %133 = vector.broadcast %cst_57 : f32 to vector<8x64xf32>
    %134 = arith.maximumf %132, %133 : vector<8x64xf32>
    %135 = arith.truncf %134 : vector<8x64xf32> to vector<8x64xbf16>
    %c0_58 = arith.constant 0 : index
    %c0_59 = arith.constant 0 : index
    %136 = vector.load %arg17[%c0_58, %c0_59] : memref<64x32xbf16, #tpu.memory_space<vmem>>, vector<64x32xbf16>
    %cst_60 = arith.constant dense<0.000000e+00> : vector<8x32xf32>
    %137 = tpu.matmul %135, %136, %cst_60 {dimension_numbers = #tpu.dot_dimension_numbers<[1], [0], [0], [1], [0, 0, 1, 1], [], []>} : vector<8x64xbf16>, vector<64x32xbf16>, vector<8x32xf32> -> vector<8x32xf32>
    %c0_61 = arith.constant 0 : index
    %c0_62 = arith.constant 0 : index
    %138 = vector.load %arg18[%c0_61, %c0_62] : memref<1x32xf32, #tpu.memory_space<vmem>>, vector<1x32xf32>
    %139 = vector.broadcast %138 : vector<1x32xf32> to vector<8x32xf32>
    %140 = arith.addf %137, %139 : vector<8x32xf32>
    %141 = arith.addf %126, %140 : vector<8x32xf32>
    %cst_63 = arith.constant dense<0.000000e+00> : vector<8xf32>
    %142 = vector.multi_reduction <add>, %141, %cst_63 [1] : vector<8x32xf32> to vector<8xf32>
    %143 = vector.shape_cast %142 : vector<8xf32> to vector<8x1xf32>
    %cst_64 = arith.constant 3.200000e+01 : f32
    %144 = vector.broadcast %cst_64 : f32 to vector<8x1xf32>
    %145 = arith.divf %143, %144 : vector<8x1xf32>
    %146 = vector.broadcast %145 : vector<8x1xf32> to vector<8x32xf32>
    %147 = arith.subf %141, %146 : vector<8x32xf32>
    %148 = arith.mulf %147, %147 : vector<8x32xf32>
    %cst_65 = arith.constant dense<0.000000e+00> : vector<8xf32>
    %149 = vector.multi_reduction <add>, %148, %cst_65 [1] : vector<8x32xf32> to vector<8xf32>
    %150 = vector.shape_cast %149 : vector<8xf32> to vector<8x1xf32>
    %cst_66 = arith.constant 3.200000e+01 : f32
    %151 = vector.broadcast %cst_66 : f32 to vector<8x1xf32>
    %152 = arith.divf %150, %151 : vector<8x1xf32>
    %153 = vector.broadcast %145 : vector<8x1xf32> to vector<8x32xf32>
    %154 = arith.subf %141, %153 : vector<8x32xf32>
    %cst_67 = arith.constant 9.99999974E-6 : f32
    %155 = vector.broadcast %cst_67 : f32 to vector<8x1xf32>
    %156 = arith.addf %152, %155 : vector<8x1xf32>
    %157 = math.rsqrt %156 : vector<8x1xf32>
    %158 = vector.broadcast %157 : vector<8x1xf32> to vector<8x32xf32>
    %159 = arith.mulf %154, %158 : vector<8x32xf32>
    %c0_68 = arith.constant 0 : index
    %c0_69 = arith.constant 0 : index
    %160 = vector.load %arg19[%c0_68, %c0_69] : memref<1x32xf32, #tpu.memory_space<vmem>>, vector<1x32xf32>
    %161 = vector.broadcast %160 : vector<1x32xf32> to vector<8x32xf32>
    %162 = arith.mulf %159, %161 : vector<8x32xf32>
    %c0_70 = arith.constant 0 : index
    %c0_71 = arith.constant 0 : index
    %163 = vector.load %arg20[%c0_70, %c0_71] : memref<1x32xf32, #tpu.memory_space<vmem>>, vector<1x32xf32>
    %164 = vector.broadcast %163 : vector<1x32xf32> to vector<8x32xf32>
    %165 = arith.addf %162, %164 : vector<8x32xf32>
    %c0_72 = arith.constant 0 : index
    %c0_73 = arith.constant 0 : index
    %c0_74 = arith.constant 0 : index
    %166 = vector.load %arg21[%c0_72, %c0_73, %c0_74] : memref<1x8x32xf32, #tpu.memory_space<vmem>>, vector<1x8x32xf32>
    %167 = vector.shape_cast %166 : vector<1x8x32xf32> to vector<8x32xf32>
    %168 = vector.shape_cast %165 : vector<8x32xf32> to vector<1x8x32xf32>
    tpu.vector_store %arg21[%c0_72, %c0_73, %c0_74], %168 {strides = array<i32>} : memref<1x8x32xf32, #tpu.memory_space<vmem>>, vector<1x8x32xf32>,
    return
  }
  func.func @transform_0(%arg0: i32, %arg1: i32) -> (i32, i32, i32) {
    %c0_i32 = arith.constant 0 : i32
    %c0_i32_0 = arith.constant 0 : i32
    return %arg0, %arg1, %c0_i32 : i32, i32, i32
  }
  func.func @transform_1(%arg0: i32, %arg1: i32) -> (i32, i32, i32) {
    %c0_i32 = arith.constant 0 : i32
    %c0_i32_0 = arith.constant 0 : i32
    %c0_i32_1 = arith.constant 0 : i32
    return %arg0, %c0_i32, %c0_i32_0 : i32, i32, i32
  }
  func.func @transform_2(%arg0: i32, %arg1: i32) -> (i32, i32, i32) {
    %c0_i32 = arith.constant 0 : i32
    %c0_i32_0 = arith.constant 0 : i32
    %c0_i32_1 = arith.constant 0 : i32
    return %arg0, %c0_i32, %c0_i32_0 : i32, i32, i32
  }
  func.func @transform_3(%arg0: i32, %arg1: i32) -> (i32, i32) {
    %c0_i32 = arith.constant 0 : i32
    %c0_i32_0 = arith.constant 0 : i32
    %c0_i32_1 = arith.constant 0 : i32
    return %c0_i32, %c0_i32_0 : i32, i32
  }
  func.func @transform_4(%arg0: i32, %arg1: i32) -> (i32, i32) {
    %c0_i32 = arith.constant 0 : i32
    %c0_i32_0 = arith.constant 0 : i32
    %c0_i32_1 = arith.constant 0 : i32
    return %c0_i32, %c0_i32_0 : i32, i32
  }
  func.func @transform_5(%arg0: i32, %arg1: i32) -> (i32, i32) {
    %c0_i32 = arith.constant 0 : i32
    %c0_i32_0 = arith.constant 0 : i32
    %c0_i32_1 = arith.constant 0 : i32
    return %c0_i32, %c0_i32_0 : i32, i32
  }
  func.func @transform_6(%arg0: i32, %arg1: i32) -> (i32, i32) {
    %c0_i32 = arith.constant 0 : i32
    %c0_i32_0 = arith.constant 0 : i32
    %c0_i32_1 = arith.constant 0 : i32
    return %c0_i32, %c0_i32_0 : i32, i32
  }
  func.func @transform_7(%arg0: i32, %arg1: i32) -> (i32, i32) {
    %c0_i32 = arith.constant 0 : i32
    %c0_i32_0 = arith.constant 0 : i32
    %c0_i32_1 = arith.constant 0 : i32
    return %c0_i32, %c0_i32_0 : i32, i32
  }
  func.func @transform_8(%arg0: i32, %arg1: i32) -> (i32, i32) {
    %c0_i32 = arith.constant 0 : i32
    %c0_i32_0 = arith.constant 0 : i32
    %c0_i32_1 = arith.constant 0 : i32
    return %c0_i32, %c0_i32_0 : i32, i32
  }
  func.func @transform_9(%arg0: i32, %arg1: i32) -> (i32, i32) {
    %c0_i32 = arith.constant 0 : i32
    %c0_i32_0 = arith.constant 0 : i32
    %c0_i32_1 = arith.constant 0 : i32
    return %c0_i32, %c0_i32_0 : i32, i32
  }
  func.func @transform_10(%arg0: i32, %arg1: i32) -> (i32, i32) {
    %c0_i32 = arith.constant 0 : i32
    %c0_i32_0 = arith.constant 0 : i32
    %c0_i32_1 = arith.constant 0 : i32
    return %c0_i32, %c0_i32_0 : i32, i32
  }
  func.func @transform_11(%arg0: i32, %arg1: i32) -> (i32, i32) {
    %c0_i32 = arith.constant 0 : i32
    %c0_i32_0 = arith.constant 0 : i32
    %c0_i32_1 = arith.constant 0 : i32
    return %c0_i32, %c0_i32_0 : i32, i32
  }
  func.func @transform_12(%arg0: i32, %arg1: i32) -> (i32, i32) {
    %c0_i32 = arith.constant 0 : i32
    %c0_i32_0 = arith.constant 0 : i32
    %c0_i32_1 = arith.constant 0 : i32
    return %c0_i32, %c0_i32_0 : i32, i32
  }
  func.func @transform_13(%arg0: i32, %arg1: i32) -> (i32, i32) {
    %c0_i32 = arith.constant 0 : i32
    %c0_i32_0 = arith.constant 0 : i32
    %c0_i32_1 = arith.constant 0 : i32
    return %c0_i32, %c0_i32_0 : i32, i32
  }
  func.func @transform_14(%arg0: i32, %arg1: i32) -> (i32, i32) {
    %c0_i32 = arith.constant 0 : i32
    %c0_i32_0 = arith.constant 0 : i32
    %c0_i32_1 = arith.constant 0 : i32
    return %c0_i32, %c0_i32_0 : i32, i32
  }
  func.func @transform_15(%arg0: i32, %arg1: i32) -> (i32, i32) {
    %c0_i32 = arith.constant 0 : i32
    %c0_i32_0 = arith.constant 0 : i32
    %c0_i32_1 = arith.constant 0 : i32
    return %c0_i32, %c0_i32_0 : i32, i32
  }
  func.func @transform_16(%arg0: i32, %arg1: i32) -> (i32, i32) {
    %c0_i32 = arith.constant 0 : i32
    %c0_i32_0 = arith.constant 0 : i32
    %c0_i32_1 = arith.constant 0 : i32
    return %c0_i32, %c0_i32_0 : i32, i32
  }
  func.func @transform_17(%arg0: i32, %arg1: i32) -> (i32, i32) {
    %c0_i32 = arith.constant 0 : i32
    %c0_i32_0 = arith.constant 0 : i32
    %c0_i32_1 = arith.constant 0 : i32
    return %c0_i32, %c0_i32_0 : i32, i32
  }
  func.func @transform_18(%arg0: i32, %arg1: i32) -> (i32, i32) {
    %c0_i32 = arith.constant 0 : i32
    %c0_i32_0 = arith.constant 0 : i32
    %c0_i32_1 = arith.constant 0 : i32
    return %c0_i32, %c0_i32_0 : i32, i32
  }
  func.func @transform_19(%arg0: i32, %arg1: i32) -> (i32, i32, i32) {
    %c0_i32 = arith.constant 0 : i32
    %c0_i32_0 = arith.constant 0 : i32
    return %arg0, %arg1, %c0_i32 : i32, i32, i32
  }
}

module attributes {stable_mosaic.version = 11 : i64} {
  func.func @encoder_block_kernel(%arg0: i32, %arg1: i32, %arg2: memref<1x8x32xf32, #tpu.memory_space<vmem>>, %arg3: memref<1x8x32xbf16, #tpu.memory_space<vmem>>, %arg4: memref<1x1x8xf32, #tpu.memory_space<vmem>>, %arg5: memref<32x32xbf16, #tpu.memory_space<vmem>>, %arg6: memref<1x32xf32, #tpu.memory_space<vmem>>, %arg7: memref<32x32xbf16, #tpu.memory_space<vmem>>, %arg8: memref<1x32xf32, #tpu.memory_space<vmem>>, %arg9: memref<32x32xbf16, #tpu.memory_space<vmem>>, %arg10: memref<1x32xf32, #tpu.memory_space<vmem>>, %arg11: memref<32x32xbf16, #tpu.memory_space<vmem>>, %arg12: memref<1x32xf32, #tpu.memory_space<vmem>>, %arg13: memref<1x32xf32, #tpu.memory_space<vmem>>, %arg14: memref<1x32xf32, #tpu.memory_space<vmem>>, %arg15: memref<32x64xbf16, #tpu.memory_space<vmem>>, %arg16: memref<1x64xf32, #tpu.memory_space<vmem>>, %arg17: memref<64x32xbf16, #tpu.memory_space<vmem>>, %arg18: memref<1x32xf32, #tpu.memory_space<vmem>>, %arg19: memref<1x32xf32, #tpu.memory_space<vmem>>, %arg20: memref<1x32xf32, #tpu.memory_space<vmem>>, %arg21: memref<1x8x32xf32, #tpu.memory_space<vmem>>, %arg22: memref<8x32xbf16, #tpu.memory_space<vmem>>, %arg23: memref<8x32xbf16, #tpu.memory_space<vmem>>, %arg24: memref<8x32xbf16, #tpu.memory_space<vmem>>) attributes {dimension_semantics = [#tpu.dimension_semantics<parallel>, #tpu.dimension_semantics<arbitrary>], iteration_bounds = array<i64: 2, 1>, scalar_prefetch = 0 : i64, scratch_operands = 3 : i64, tpu.core_type = #tpu.core_type<tc>, window_params = [{transform_indices = @transform_0, window_bounds = array<i64: 1, 8, 32>}, {transform_indices = @transform_1, window_bounds = array<i64: 1, 8, 32>}, {transform_indices = @transform_2, window_bounds = array<i64: 1, 1, 8>}, {pipeline_mode = #tpu.pipeline_mode<synchronous>, transform_indices = @transform_3, window_bounds = array<i64: 32, 32>}, {pipeline_mode = #tpu.pipeline_mode<synchronous>, transform_indices = @transform_4, window_bounds = array<i64: 1, 32>}, {pipeline_mode = #tpu.pipeline_mode<synchronous>, transform_indices = @transform_5, window_bounds = array<i64: 32, 32>}, {pipeline_mode = #tpu.pipeline_mode<synchronous>, transform_indices = @transform_6, window_bounds = array<i64: 1, 32>}, {pipeline_mode = #tpu.pipeline_mode<synchronous>, transform_indices = @transform_7, window_bounds = array<i64: 32, 32>}, {pipeline_mode = #tpu.pipeline_mode<synchronous>, transform_indices = @transform_8, window_bounds = array<i64: 1, 32>}, {pipeline_mode = #tpu.pipeline_mode<synchronous>, transform_indices = @transform_9, window_bounds = array<i64: 32, 32>}, {pipeline_mode = #tpu.pipeline_mode<synchronous>, transform_indices = @transform_10, window_bounds = array<i64: 1, 32>}, {pipeline_mode = #tpu.pipeline_mode<synchronous>, transform_indices = @transform_11, window_bounds = array<i64: 1, 32>}, {pipeline_mode = #tpu.pipeline_mode<synchronous>, transform_indices = @transform_12, window_bounds = array<i64: 1, 32>}, {pipeline_mode = #tpu.pipeline_mode<synchronous>, transform_indices = @transform_13, window_bounds = array<i64: 32, 64>}, {pipeline_mode = #tpu.pipeline_mode<synchronous>, transform_indices = @transform_14, window_bounds = array<i64: 1, 64>}, {pipeline_mode = #tpu.pipeline_mode<synchronous>, transform_indices = @transform_15, window_bounds = array<i64: 64, 32>}, {pipeline_mode = #tpu.pipeline_mode<synchronous>, transform_indices = @transform_16, window_bounds = array<i64: 1, 32>}, {pipeline_mode = #tpu.pipeline_mode<synchronous>, transform_indices = @transform_17, window_bounds = array<i64: 1, 32>}, {pipeline_mode = #tpu.pipeline_mode<synchronous>, transform_indices = @transform_18, window_bounds = array<i64: 1, 32>}, {transform_indices = @transform_19, window_bounds = array<i64: 1, 8, 32>}]} {
    %c0_i32 = arith.constant 0 : i32
    %0 = arith.cmpi eq, %arg1, %c0_i32 : i32
    %1 = arith.extui %0 : i1 to i32
    %c0_i32_0 = arith.constant 0 : i32
    %2 = arith.cmpi ne, %1, %c0_i32_0 : i32
    scf.if %2 {
      %c0_75 = arith.constant 0 : index
      %c0_76 = arith.constant 0 : index
      %c0_77 = arith.constant 0 : index
      %169 = vector.load %arg3[%c0_75, %c0_76, %c0_77] : memref<1x8x32xbf16, #tpu.memory_space<vmem>>, vector<1x8x32xbf16>
      %170 = vector.shape_cast %169 : vector<1x8x32xbf16> to vector<8x32xbf16>
      %c0_78 = arith.constant 0 : index
      %c0_79 = arith.constant 0 : index
      %171 = vector.load %arg7[%c0_78, %c0_79] : memref<32x32xbf16, #tpu.memory_space<vmem>>, vector<32x32xbf16>
      %cst_80 = arith.constant dense<0.000000e+00> : vector<8x32xf32>
      %172 = tpu.matmul %170, %171, %cst_80 {dimension_numbers = #tpu.dot_dimension_numbers<[1], [0], [0], [1], [0, 0, 1, 1], [], []>} : vector<8x32xbf16>, vector<32x32xbf16>, vector<8x32xf32> -> vector<8x32xf32>
      %c0_81 = arith.constant 0 : index
      %c0_82 = arith.constant 0 : index
      %173 = vector.load %arg8[%c0_81, %c0_82] : memref<1x32xf32, #tpu.memory_space<vmem>>, vector<1x32xf32>
      %174 = vector.broadcast %173 : vector<1x32xf32> to vector<8x32xf32>
      %175 = arith.addf %172, %174 : vector<8x32xf32>
      %c0_83 = arith.constant 0 : index
      %c0_84 = arith.constant 0 : index
      %176 = vector.load %arg9[%c0_83, %c0_84] : memref<32x32xbf16, #tpu.memory_space<vmem>>, vector<32x32xbf16>
      %cst_85 = arith.constant dense<0.000000e+00> : vector<8x32xf32>
      %177 = tpu.matmul %170, %176, %cst_85 {dimension_numbers = #tpu.dot_dimension_numbers<[1], [0], [0], [1], [0, 0, 1, 1], [], []>} : vector<8x32xbf16>, vector<32x32xbf16>, vector<8x32xf32> -> vector<8x32xf32>
      %c0_86 = arith.constant 0 : index
      %c0_87 = arith.constant 0 : index
      %178 = vector.load %arg10[%c0_86, %c0_87] : memref<1x32xf32, #tpu.memory_space<vmem>>, vector<1x32xf32>
      %179 = vector.broadcast %178 : vector<1x32xf32> to vector<8x32xf32>
      %180 = arith.addf %177, %179 : vector<8x32xf32>
      %181 = arith.truncf %175 : vector<8x32xf32> to vector<8x32xbf16>
      %c0_88 = arith.constant 0 : index
      %c0_89 = arith.constant 0 : index
      %182 = vector.load %arg22[%c0_88, %c0_89] : memref<8x32xbf16, #tpu.memory_space<vmem>>, vector<8x32xbf16>
      tpu.vector_store %arg22[%c0_88, %c0_89], %181 {strides = array<i32>} : memref<8x32xbf16, #tpu.memory_space<vmem>>, vector<8x32xbf16>,
      %183 = arith.truncf %180 : vector<8x32xf32> to vector<8x32xbf16>
      %c0_90 = arith.constant 0 : index
      %c0_91 = arith.constant 0 : index
      %184 = vector.load %arg23[%c0_90, %c0_91] : memref<8x32xbf16, #tpu.memory_space<vmem>>, vector<8x32xbf16>
      tpu.vector_store %arg23[%c0_90, %c0_91], %183 {strides = array<i32>} : memref<8x32xbf16, #tpu.memory_space<vmem>>, vector<8x32xbf16>,
    } else {
    }
    %c0 = arith.constant 0 : index
    %c0_1 = arith.constant 0 : index
    %c0_2 = arith.constant 0 : index
    %3 = vector.load %arg2[%c0, %c0_1, %c0_2] : memref<1x8x32xf32, #tpu.memory_space<vmem>>, vector<1x8x32xf32>
    %4 = vector.shape_cast %3 : vector<1x8x32xf32> to vector<8x32xf32>
    %5 = arith.truncf %4 : vector<8x32xf32> to vector<8x32xbf16>
    %c0_3 = arith.constant 0 : index
    %c0_4 = arith.constant 0 : index
    %6 = vector.load %arg5[%c0_3, %c0_4] : memref<32x32xbf16, #tpu.memory_space<vmem>>, vector<32x32xbf16>
    %cst = arith.constant dense<0.000000e+00> : vector<8x32xf32>
    %7 = tpu.matmul %5, %6, %cst {dimension_numbers = #tpu.dot_dimension_numbers<[1], [0], [0], [1], [0, 0, 1, 1], [], []>} : vector<8x32xbf16>, vector<32x32xbf16>, vector<8x32xf32> -> vector<8x32xf32>
    %c0_5 = arith.constant 0 : index
    %c0_6 = arith.constant 0 : index
    %8 = vector.load %arg6[%c0_5, %c0_6] : memref<1x32xf32, #tpu.memory_space<vmem>>, vector<1x32xf32>
    %9 = vector.broadcast %8 : vector<1x32xf32> to vector<8x32xf32>
    %10 = arith.addf %7, %9 : vector<8x32xf32>
    %cst_7 = arith.constant 0.353553385 : f32
    %11 = vector.broadcast %cst_7 : f32 to vector<8x32xf32>
    %12 = arith.mulf %10, %11 : vector<8x32xf32>
    %13 = arith.truncf %12 : vector<8x32xf32> to vector<8x32xbf16>
    %c0_8 = arith.constant 0 : index
    %c0_9 = arith.constant 0 : index
    %c0_10 = arith.constant 0 : index
    %14 = vector.load %arg4[%c0_8, %c0_9, %c0_10] : memref<1x1x8xf32, #tpu.memory_space<vmem>>, vector<1x1x8xf32>
    %15 = vector.shape_cast %14 : vector<1x1x8xf32> to vector<1x8xf32>
    %16 = vector.shape_cast %15 : vector<1x8xf32> to vector<1x8xf32>
    %17 = vector.broadcast %16 : vector<1x8xf32> to vector<8x8xf32>
    %c0_11 = arith.constant 0 : index
    %c0_12 = arith.constant 0 : index
    %18 = vector.load %arg22[%c0_11, %c0_12] : memref<8x32xbf16, #tpu.memory_space<vmem>>, vector<8x32xbf16>
    %c0_13 = arith.constant 0 : index
    %c0_14 = arith.constant 0 : index
    %19 = vector.load %arg23[%c0_13, %c0_14] : memref<8x32xbf16, #tpu.memory_space<vmem>>, vector<8x32xbf16>
    %20 = vector.extract_strided_slice %13 {offsets = [0, 0], sizes = [8, 8], strides = [1, 1]} : vector<8x32xbf16> to vector<8x8xbf16>
    %21 = vector.extract_strided_slice %18 {offsets = [0, 0], sizes = [8, 8], strides = [1, 1]} : vector<8x32xbf16> to vector<8x8xbf16>
    %22 = vector.extract_strided_slice %19 {offsets = [0, 0], sizes = [8, 8], strides = [1, 1]} : vector<8x32xbf16> to vector<8x8xbf16>
    %cst_15 = arith.constant dense<0.000000e+00> : vector<8x8xf32>
    %23 = tpu.matmul %20, %21, %cst_15 {dimension_numbers = #tpu.dot_dimension_numbers<[1], [1], [0], [0], [0, 0, 1, 0], [], []>} : vector<8x8xbf16>, vector<8x8xbf16>, vector<8x8xf32> -> vector<8x8xf32>
    %24 = arith.addf %23, %17 : vector<8x8xf32>
    %cst_16 = arith.constant dense<0xFF800000> : vector<8xf32>
    %25 = vector.multi_reduction <maximumf>, %24, %cst_16 [1] : vector<8x8xf32> to vector<8xf32>
    %26 = vector.shape_cast %25 : vector<8xf32> to vector<8x1xf32>
    %27 = vector.broadcast %26 : vector<8x1xf32> to vector<8x8xf32>
    %28 = arith.subf %24, %27 : vector<8x8xf32>
    %29 = math.exp %28 : vector<8x8xf32>
    %cst_17 = arith.constant dense<0.000000e+00> : vector<8xf32>
    %30 = vector.multi_reduction <add>, %29, %cst_17 [1] : vector<8x8xf32> to vector<8xf32>
    %31 = vector.shape_cast %30 : vector<8xf32> to vector<8x1xf32>
    %32 = tpu.reciprocal %31 {approx = true} : vector<8x1xf32> -> vector<8x1xf32>
    %33 = vector.broadcast %32 : vector<8x1xf32> to vector<8x8xf32>
    %34 = arith.mulf %29, %33 : vector<8x8xf32>
    %35 = arith.truncf %34 : vector<8x8xf32> to vector<8x8xbf16>
    %cst_18 = arith.constant dense<0.000000e+00> : vector<8x8xf32>
    %36 = tpu.matmul %35, %22, %cst_18 {dimension_numbers = #tpu.dot_dimension_numbers<[1], [0], [0], [1], [0, 0, 1, 1], [], []>} : vector<8x8xbf16>, vector<8x8xbf16>, vector<8x8xf32> -> vector<8x8xf32>
    %37 = arith.truncf %36 : vector<8x8xf32> to vector<8x8xbf16>
    %c0_19 = arith.constant 0 : index
    %c0_20 = arith.constant 0 : index
    %38 = vector.load %arg24[%c0_19, %c0_20] : memref<8x32xbf16, #tpu.memory_space<vmem>>, vector<8x8xbf16>
    tpu.vector_store %arg24[%c0_19, %c0_20], %37 {strides = array<i32>} : memref<8x32xbf16, #tpu.memory_space<vmem>>, vector<8x8xbf16>,
    %39 = vector.extract_strided_slice %13 {offsets = [0, 8], sizes = [8, 8], strides = [1, 1]} : vector<8x32xbf16> to vector<8x8xbf16>
    %40 = vector.extract_strided_slice %18 {offsets = [0, 8], sizes = [8, 8], strides = [1, 1]} : vector<8x32xbf16> to vector<8x8xbf16>
    %41 = vector.extract_strided_slice %19 {offsets = [0, 8], sizes = [8, 8], strides = [1, 1]} : vector<8x32xbf16> to vector<8x8xbf16>
    %cst_21 = arith.constant dense<0.000000e+00> : vector<8x8xf32>
    %42 = tpu.matmul %39, %40, %cst_21 {dimension_numbers = #tpu.dot_dimension_numbers<[1], [1], [0], [0], [0, 0, 1, 0], [], []>} : vector<8x8xbf16>, vector<8x8xbf16>, vector<8x8xf32> -> vector<8x8xf32>
    %43 = arith.addf %42, %17 : vector<8x8xf32>
    %cst_22 = arith.constant dense<0xFF800000> : vector<8xf32>
    %44 = vector.multi_reduction <maximumf>, %43, %cst_22 [1] : vector<8x8xf32> to vector<8xf32>
    %45 = vector.shape_cast %44 : vector<8xf32> to vector<8x1xf32>
    %46 = vector.broadcast %45 : vector<8x1xf32> to vector<8x8xf32>
    %47 = arith.subf %43, %46 : vector<8x8xf32>
    %48 = math.exp %47 : vector<8x8xf32>
    %cst_23 = arith.constant dense<0.000000e+00> : vector<8xf32>
    %49 = vector.multi_reduction <add>, %48, %cst_23 [1] : vector<8x8xf32> to vector<8xf32>
    %50 = vector.shape_cast %49 : vector<8xf32> to vector<8x1xf32>
    %51 = tpu.reciprocal %50 {approx = true} : vector<8x1xf32> -> vector<8x1xf32>
    %52 = vector.broadcast %51 : vector<8x1xf32> to vector<8x8xf32>
    %53 = arith.mulf %48, %52 : vector<8x8xf32>
    %54 = arith.truncf %53 : vector<8x8xf32> to vector<8x8xbf16>
    %cst_24 = arith.constant dense<0.000000e+00> : vector<8x8xf32>
    %55 = tpu.matmul %54, %41, %cst_24 {dimension_numbers = #tpu.dot_dimension_numbers<[1], [0], [0], [1], [0, 0, 1, 1], [], []>} : vector<8x8xbf16>, vector<8x8xbf16>, vector<8x8xf32> -> vector<8x8xf32>
    %56 = arith.truncf %55 : vector<8x8xf32> to vector<8x8xbf16>
    %c0_25 = arith.constant 0 : index
    %c8 = arith.constant 8 : index
    %57 = vector.load %arg24[%c0_25, %c8] : memref<8x32xbf16, #tpu.memory_space<vmem>>, vector<8x8xbf16>
    tpu.vector_store %arg24[%c0_25, %c8], %56 {strides = array<i32>} : memref<8x32xbf16, #tpu.memory_space<vmem>>, vector<8x8xbf16>,
    %58 = vector.extract_strided_slice %13 {offsets = [0, 16], sizes = [8, 8], strides = [1, 1]} : vector<8x32xbf16> to vector<8x8xbf16>
    %59 = vector.extract_strided_slice %18 {offsets = [0, 16], sizes = [8, 8], strides = [1, 1]} : vector<8x32xbf16> to vector<8x8xbf16>
    %60 = vector.extract_strided_slice %19 {offsets = [0, 16], sizes = [8, 8], strides = [1, 1]} : vector<8x32xbf16> to vector<8x8xbf16>
    %cst_26 = arith.constant dense<0.000000e+00> : vector<8x8xf32>
    %61 = tpu.matmul %58, %59, %cst_26 {dimension_numbers = #tpu.dot_dimension_numbers<[1], [1], [0], [0], [0, 0, 1, 0], [], []>} : vector<8x8xbf16>, vector<8x8xbf16>, vector<8x8xf32> -> vector<8x8xf32>
    %62 = arith.addf %61, %17 : vector<8x8xf32>
    %cst_27 = arith.constant dense<0xFF800000> : vector<8xf32>
    %63 = vector.multi_reduction <maximumf>, %62, %cst_27 [1] : vector<8x8xf32> to vector<8xf32>
    %64 = vector.shape_cast %63 : vector<8xf32> to vector<8x1xf32>
    %65 = vector.broadcast %64 : vector<8x1xf32> to vector<8x8xf32>
    %66 = arith.subf %62, %65 : vector<8x8xf32>
    %67 = math.exp %66 : vector<8x8xf32>
    %cst_28 = arith.constant dense<0.000000e+00> : vector<8xf32>
    %68 = vector.multi_reduction <add>, %67, %cst_28 [1] : vector<8x8xf32> to vector<8xf32>
    %69 = vector.shape_cast %68 : vector<8xf32> to vector<8x1xf32>
    %70 = tpu.reciprocal %69 {approx = true} : vector<8x1xf32> -> vector<8x1xf32>
    %71 = vector.broadcast %70 : vector<8x1xf32> to vector<8x8xf32>
    %72 = arith.mulf %67, %71 : vector<8x8xf32>
    %73 = arith.truncf %72 : vector<8x8xf32> to vector<8x8xbf16>
    %cst_29 = arith.constant dense<0.000000e+00> : vector<8x8xf32>
    %74 = tpu.matmul %73, %60, %cst_29 {dimension_numbers = #tpu.dot_dimension_numbers<[1], [0], [0], [1], [0, 0, 1, 1], [], []>} : vector<8x8xbf16>, vector<8x8xbf16>, vector<8x8xf32> -> vector<8x8xf32>
    %75 = arith.truncf %74 : vector<8x8xf32> to vector<8x8xbf16>
    %c0_30 = arith.constant 0 : index
    %c16 = arith.constant 16 : index
    %76 = vector.load %arg24[%c0_30, %c16] : memref<8x32xbf16, #tpu.memory_space<vmem>>, vector<8x8xbf16>
    tpu.vector_store %arg24[%c0_30, %c16], %75 {strides = array<i32>} : memref<8x32xbf16, #tpu.memory_space<vmem>>, vector<8x8xbf16>,
    %77 = vector.extract_strided_slice %13 {offsets = [0, 24], sizes = [8, 8], strides = [1, 1]} : vector<8x32xbf16> to vector<8x8xbf16>
    %78 = vector.extract_strided_slice %18 {offsets = [0, 24], sizes = [8, 8], strides = [1, 1]} : vector<8x32xbf16> to vector<8x8xbf16>
    %79 = vector.extract_strided_slice %19 {offsets = [0, 24], sizes = [8, 8], strides = [1, 1]} : vector<8x32xbf16> to vector<8x8xbf16>
    %cst_31 = arith.constant dense<0.000000e+00> : vector<8x8xf32>
    %80 = tpu.matmul %77, %78, %cst_31 {dimension_numbers = #tpu.dot_dimension_numbers<[1], [1], [0], [0], [0, 0, 1, 0], [], []>} : vector<8x8xbf16>, vector<8x8xbf16>, vector<8x8xf32> -> vector<8x8xf32>
    %81 = arith.addf %80, %17 : vector<8x8xf32>
    %cst_32 = arith.constant dense<0xFF800000> : vector<8xf32>
    %82 = vector.multi_reduction <maximumf>, %81, %cst_32 [1] : vector<8x8xf32> to vector<8xf32>
    %83 = vector.shape_cast %82 : vector<8xf32> to vector<8x1xf32>
    %84 = vector.broadcast %83 : vector<8x1xf32> to vector<8x8xf32>
    %85 = arith.subf %81, %84 : vector<8x8xf32>
    %86 = math.exp %85 : vector<8x8xf32>
    %cst_33 = arith.constant dense<0.000000e+00> : vector<8xf32>
    %87 = vector.multi_reduction <add>, %86, %cst_33 [1] : vector<8x8xf32> to vector<8xf32>
    %88 = vector.shape_cast %87 : vector<8xf32> to vector<8x1xf32>
    %89 = tpu.reciprocal %88 {approx = true} : vector<8x1xf32> -> vector<8x1xf32>
    %90 = vector.broadcast %89 : vector<8x1xf32> to vector<8x8xf32>
    %91 = arith.mulf %86, %90 : vector<8x8xf32>
    %92 = arith.truncf %91 : vector<8x8xf32> to vector<8x8xbf16>
    %cst_34 = arith.constant dense<0.000000e+00> : vector<8x8xf32>
    %93 = tpu.matmul %92, %79, %cst_34 {dimension_numbers = #tpu.dot_dimension_numbers<[1], [0], [0], [1], [0, 0, 1, 1], [], []>} : vector<8x8xbf16>, vector<8x8xbf16>, vector<8x8xf32> -> vector<8x8xf32>
    %94 = arith.truncf %93 : vector<8x8xf32> to vector<8x8xbf16>
    %c0_35 = arith.constant 0 : index
    %c24 = arith.constant 24 : index
    %95 = vector.load %arg24[%c0_35, %c24] : memref<8x32xbf16, #tpu.memory_space<vmem>>, vector<8x8xbf16>
    tpu.vector_store %arg24[%c0_35, %c24], %94 {strides = array<i32>} : memref<8x32xbf16, #tpu.memory_space<vmem>>, vector<8x8xbf16>,
    %c0_36 = arith.constant 0 : index
    %c0_37 = arith.constant 0 : index
    %96 = vector.load %arg24[%c0_36, %c0_37] : memref<8x32xbf16, #tpu.memory_space<vmem>>, vector<8x32xbf16>
    %c0_38 = arith.constant 0 : index
    %c0_39 = arith.constant 0 : index
    %97 = vector.load %arg11[%c0_38, %c0_39] : memref<32x32xbf16, #tpu.memory_space<vmem>>, vector<32x32xbf16>
    %cst_40 = arith.constant dense<0.000000e+00> : vector<8x32xf32>
    %98 = tpu.matmul %96, %97, %cst_40 {dimension_numbers = #tpu.dot_dimension_numbers<[1], [0], [0], [1], [0, 0, 1, 1], [], []>} : vector<8x32xbf16>, vector<32x32xbf16>, vector<8x32xf32> -> vector<8x32xf32>
    %c0_41 = arith.constant 0 : index
    %c0_42 = arith.constant 0 : index
    %99 = vector.load %arg12[%c0_41, %c0_42] : memref<1x32xf32, #tpu.memory_space<vmem>>, vector<1x32xf32>
    %100 = vector.broadcast %99 : vector<1x32xf32> to vector<8x32xf32>
    %101 = arith.addf %98, %100 : vector<8x32xf32>
    %102 = arith.addf %4, %101 : vector<8x32xf32>
    %cst_43 = arith.constant dense<0.000000e+00> : vector<8xf32>
    %103 = vector.multi_reduction <add>, %102, %cst_43 [1] : vector<8x32xf32> to vector<8xf32>
    %104 = vector.shape_cast %103 : vector<8xf32> to vector<8x1xf32>
    %cst_44 = arith.constant 3.200000e+01 : f32
    %105 = vector.broadcast %cst_44 : f32 to vector<8x1xf32>
    %106 = arith.divf %104, %105 : vector<8x1xf32>
    %107 = vector.broadcast %106 : vector<8x1xf32> to vector<8x32xf32>
    %108 = arith.subf %102, %107 : vector<8x32xf32>
    %109 = arith.mulf %108, %108 : vector<8x32xf32>
    %cst_45 = arith.constant dense<0.000000e+00> : vector<8xf32>
    %110 = vector.multi_reduction <add>, %109, %cst_45 [1] : vector<8x32xf32> to vector<8xf32>
    %111 = vector.shape_cast %110 : vector<8xf32> to vector<8x1xf32>
    %cst_46 = arith.constant 3.200000e+01 : f32
    %112 = vector.broadcast %cst_46 : f32 to vector<8x1xf32>
    %113 = arith.divf %111, %112 : vector<8x1xf32>
    %114 = vector.broadcast %106 : vector<8x1xf32> to vector<8x32xf32>
    %115 = arith.subf %102, %114 : vector<8x32xf32>
    %cst_47 = arith.constant 9.99999974E-6 : f32
    %116 = vector.broadcast %cst_47 : f32 to vector<8x1xf32>
    %117 = arith.addf %113, %116 : vector<8x1xf32>
    %118 = math.rsqrt %117 : vector<8x1xf32>
    %119 = vector.broadcast %118 : vector<8x1xf32> to vector<8x32xf32>
    %120 = arith.mulf %115, %119 : vector<8x32xf32>
    %c0_48 = arith.constant 0 : index
    %c0_49 = arith.constant 0 : index
    %121 = vector.load %arg13[%c0_48, %c0_49] : memref<1x32xf32, #tpu.memory_space<vmem>>, vector<1x32xf32>
    %122 = vector.broadcast %121 : vector<1x32xf32> to vector<8x32xf32>
    %123 = arith.mulf %120, %122 : vector<8x32xf32>
    %c0_50 = arith.constant 0 : index
    %c0_51 = arith.constant 0 : index
    %124 = vector.load %arg14[%c0_50, %c0_51] : memref<1x32xf32, #tpu.memory_space<vmem>>, vector<1x32xf32>
    %125 = vector.broadcast %124 : vector<1x32xf32> to vector<8x32xf32>
    %126 = arith.addf %123, %125 : vector<8x32xf32>
    %127 = arith.truncf %126 : vector<8x32xf32> to vector<8x32xbf16>
    %c0_52 = arith.constant 0 : index
    %c0_53 = arith.constant 0 : index
    %128 = vector.load %arg15[%c0_52, %c0_53] : memref<32x64xbf16, #tpu.memory_space<vmem>>, vector<32x64xbf16>
    %cst_54 = arith.constant dense<0.000000e+00> : vector<8x64xf32>
    %129 = tpu.matmul %127, %128, %cst_54 {dimension_numbers = #tpu.dot_dimension_numbers<[1], [0], [0], [1], [0, 0, 1, 1], [], []>} : vector<8x32xbf16>, vector<32x64xbf16>, vector<8x64xf32> -> vector<8x64xf32>
    %c0_55 = arith.constant 0 : index
    %c0_56 = arith.constant 0 : index
    %130 = vector.load %arg16[%c0_55, %c0_56] : memref<1x64xf32, #tpu.memory_space<vmem>>, vector<1x64xf32>
    %131 = vector.broadcast %130 : vector<1x64xf32> to vector<8x64xf32>
    %132 = arith.addf %129, %131 : vector<8x64xf32>
    %cst_57 = arith.constant 0.000000e+00 : f32
    %133 = vector.broadcast %cst_57 : f32 to vector<8x64xf32>
    %134 = arith.maximumf %132, %133 : vector<8x64xf32>
    %135 = arith.truncf %134 : vector<8x64xf32> to vector<8x64xbf16>
    %c0_58 = arith.constant 0 : index
    %c0_59 = arith.constant 0 : index
    %136 = vector.load %arg17[%c0_58, %c0_59] : memref<64x32xbf16, #tpu.memory_space<vmem>>, vector<64x32xbf16>
    %cst_60 = arith.constant dense<0.000000e+00> : vector<8x32xf32>
    %137 = tpu.matmul %135, %136, %cst_60 {dimension_numbers = #tpu.dot_dimension_numbers<[1], [0], [0], [1], [0, 0, 1, 1], [], []>} : vector<8x64xbf16>, vector<64x32xbf16>, vector<8x32xf32> -> vector<8x32xf32>
    %c0_61 = arith.constant 0 : index
    %c0_62 = arith.constant 0 : index
    %138 = vector.load %arg18[%c0_61, %c0_62] : memref<1x32xf32, #tpu.memory_space<vmem>>, vector<1x32xf32>
    %139 = vector.broadcast %138 : vector<1x32xf32> to vector<8x32xf32>
    %140 = arith.addf %137, %139 : vector<8x32xf32>
    %141 = arith.addf %126, %140 : vector<8x32xf32>
    %cst_63 = arith.constant dense<0.000000e+00> : vector<8xf32>
    %142 = vector.multi_reduction <add>, %141, %cst_63 [1] : vector<8x32xf32> to vector<8xf32>
    %143 = vector.shape_cast %142 : vector<8xf32> to vector<8x1xf32>
    %cst_64 = arith.constant 3.200000e+01 : f32
    %144 = vector.broadcast %cst_64 : f32 to vector<8x1xf32>
    %145 = arith.divf %143, %144 : vector<8x1xf32>
    %146 = vector.broadcast %145 : vector<8x1xf32> to vector<8x32xf32>
    %147 = arith.subf %141, %146 : vector<8x32xf32>
    %148 = arith.mulf %147, %147 : vector<8x32xf32>
    %cst_65 = arith.constant dense<0.000000e+00> : vector<8xf32>
    %149 = vector.multi_reduction <add>, %148, %cst_65 [1] : vector<8x32xf32> to vector<8xf32>
    %150 = vector.shape_cast %149 : vector<8xf32> to vector<8x1xf32>
    %cst_66 = arith.constant 3.200000e+01 : f32
    %151 = vector.broadcast %cst_66 : f32 to vector<8x1xf32>
    %152 = arith.divf %150, %151 : vector<8x1xf32>
    %153 = vector.broadcast %145 : vector<8x1xf32> to vector<8x32xf32>
    %154 = arith.subf %141, %153 : vector<8x32xf32>
    %cst_67 = arith.constant 9.99999974E-6 : f32
    %155 = vector.broadcast %cst_67 : f32 to vector<8x1xf32>
    %156 = arith.addf %152, %155 : vector<8x1xf32>
    %157 = math.rsqrt %156 : vector<8x1xf32>
    %158 = vector.broadcast %157 : vector<8x1xf32> to vector<8x32xf32>
    %159 = arith.mulf %154, %158 : vector<8x32xf32>
    %c0_68 = arith.constant 0 : index
    %c0_69 = arith.constant 0 : index
    %160 = vector.load %arg19[%c0_68, %c0_69] : memref<1x32xf32, #tpu.memory_space<vmem>>, vector<1x32xf32>
    %161 = vector.broadcast %160 : vector<1x32xf32> to vector<8x32xf32>
    %162 = arith.mulf %159, %161 : vector<8x32xf32>
    %c0_70 = arith.constant 0 : index
    %c0_71 = arith.constant 0 : index
    %163 = vector.load %arg20[%c0_70, %c0_71] : memref<1x32xf32, #tpu.memory_space<vmem>>, vector<1x32xf32>
    %164 = vector.broadcast %163 : vector<1x32xf32> to vector<8x32xf32>
    %165 = arith.addf %162, %164 : vector<8x32xf32>
    %c0_72 = arith.constant 0 : index
    %c0_73 = arith.constant 0 : index
    %c0_74 = arith.constant 0 : index
    %166 = vector.load %arg21[%c0_72, %c0_73, %c0_74] : memref<1x8x32xf32, #tpu.memory_space<vmem>>, vector<1x8x32xf32>
    %167 = vector.shape_cast %166 : vector<1x8x32xf32> to vector<8x32xf32>
    %168 = vector.shape_cast %165 : vector<8x32xf32> to vector<1x8x32xf32>
    tpu.vector_store %arg21[%c0_72, %c0_73, %c0_74], %168 {strides = array<i32>} : memref<1x8x32xf32, #tpu.memory_space<vmem>>, vector<1x8x32xf32>,
    return
  }
  func.func @transform_0(%arg0: i32, %arg1: i32) -> (i32, i32, i32) {
    %c0_i32 = arith.constant 0 : i32
    %c0_i32_0 = arith.constant 0 : i32
    return %arg0, %arg1, %c0_i32 : i32, i32, i32
  }
  func.func @transform_1(%arg0: i32, %arg1: i32) -> (i32, i32, i32) {
    %c0_i32 = arith.constant 0 : i32
    %c0_i32_0 = arith.constant 0 : i32
    %c0_i32_1 = arith.constant 0 : i32
    return %arg0, %c0_i32, %c0_i32_0 : i32, i32, i32
  }
  func.func @transform_2(%arg0: i32, %arg1: i32) -> (i32, i32, i32) {
    %c0_i32 = arith.constant 0 : i32
    %c0_i32_0 = arith.constant 0 : i32
    %c0_i32_1 = arith.constant 0 : i32
    return %arg0, %c0_i32, %c0_i32_0 : i32, i32, i32
  }
  func.func @transform_3(%arg0: i32, %arg1: i32) -> (i32, i32) {
    %c0_i32 = arith.constant 0 : i32
    %c0_i32_0 = arith.constant 0 : i32
    %c0_i32_1 = arith.constant 0 : i32
    return %c0_i32, %c0_i32_0 : i32, i32
  }
  func.func @transform_4(%arg0: i32, %arg1: i32) -> (i32, i32) {
    %c0_i32 = arith.constant 0 : i32
    %c0_i32_0 = arith.constant 0 : i32
    %c0_i32_1 = arith.constant 0 : i32
    return %c0_i32, %c0_i32_0 : i32, i32
  }
  func.func @transform_5(%arg0: i32, %arg1: i32) -> (i32, i32) {
    %c0_i32 = arith.constant 0 : i32
    %c0_i32_0 = arith.constant 0 : i32
    %c0_i32_1 = arith.constant 0 : i32
    return %c0_i32, %c0_i32_0 : i32, i32
  }
  func.func @transform_6(%arg0: i32, %arg1: i32) -> (i32, i32) {
    %c0_i32 = arith.constant 0 : i32
    %c0_i32_0 = arith.constant 0 : i32
    %c0_i32_1 = arith.constant 0 : i32
    return %c0_i32, %c0_i32_0 : i32, i32
  }
  func.func @transform_7(%arg0: i32, %arg1: i32) -> (i32, i32) {
    %c0_i32 = arith.constant 0 : i32
    %c0_i32_0 = arith.constant 0 : i32
    %c0_i32_1 = arith.constant 0 : i32
    return %c0_i32, %c0_i32_0 : i32, i32
  }
  func.func @transform_8(%arg0: i32, %arg1: i32) -> (i32, i32) {
    %c0_i32 = arith.constant 0 : i32
    %c0_i32_0 = arith.constant 0 : i32
    %c0_i32_1 = arith.constant 0 : i32
    return %c0_i32, %c0_i32_0 : i32, i32
  }
  func.func @transform_9(%arg0: i32, %arg1: i32) -> (i32, i32) {
    %c0_i32 = arith.constant 0 : i32
    %c0_i32_0 = arith.constant 0 : i32
    %c0_i32_1 = arith.constant 0 : i32
    return %c0_i32, %c0_i32_0 : i32, i32
  }
  func.func @transform_10(%arg0: i32, %arg1: i32) -> (i32, i32) {
    %c0_i32 = arith.constant 0 : i32
    %c0_i32_0 = arith.constant 0 : i32
    %c0_i32_1 = arith.constant 0 : i32
    return %c0_i32, %c0_i32_0 : i32, i32
  }
  func.func @transform_11(%arg0: i32, %arg1: i32) -> (i32, i32) {
    %c0_i32 = arith.constant 0 : i32
    %c0_i32_0 = arith.constant 0 : i32
    %c0_i32_1 = arith.constant 0 : i32
    return %c0_i32, %c0_i32_0 : i32, i32
  }
  func.func @transform_12(%arg0: i32, %arg1: i32) -> (i32, i32) {
    %c0_i32 = arith.constant 0 : i32
    %c0_i32_0 = arith.constant 0 : i32
    %c0_i32_1 = arith.constant 0 : i32
    return %c0_i32, %c0_i32_0 : i32, i32
  }
  func.func @transform_13(%arg0: i32, %arg1: i32) -> (i32, i32) {
    %c0_i32 = arith.constant 0 : i32
    %c0_i32_0 = arith.constant 0 : i32
    %c0_i32_1 = arith.constant 0 : i32
    return %c0_i32, %c0_i32_0 : i32, i32
  }
  func.func @transform_14(%arg0: i32, %arg1: i32) -> (i32, i32) {
    %c0_i32 = arith.constant 0 : i32
    %c0_i32_0 = arith.constant 0 : i32
    %c0_i32_1 = arith.constant 0 : i32
    return %c0_i32, %c0_i32_0 : i32, i32
  }
  func.func @transform_15(%arg0: i32, %arg1: i32) -> (i32, i32) {
    %c0_i32 = arith.constant 0 : i32
    %c0_i32_0 = arith.constant 0 : i32
    %c0_i32_1 = arith.constant 0 : i32
    return %c0_i32, %c0_i32_0 : i32, i32
  }
  func.func @transform_16(%arg0: i32, %arg1: i32) -> (i32, i32) {
    %c0_i32 = arith.constant 0 : i32
    %c0_i32_0 = arith.constant 0 : i32
    %c0_i32_1 = arith.constant 0 : i32
    return %c0_i32, %c0_i32_0 : i32, i32
  }
  func.func @transform_17(%arg0: i32, %arg1: i32) -> (i32, i32) {
    %c0_i32 = arith.constant 0 : i32
    %c0_i32_0 = arith.constant 0 : i32
    %c0_i32_1 = arith.constant 0 : i32
    return %c0_i32, %c0_i32_0 : i32, i32
  }
  func.func @transform_18(%arg0: i32, %arg1: i32) -> (i32, i32) {
    %c0_i32 = arith.constant 0 : i32
    %c0_i32_0 = arith.constant 0 : i32
    %c0_i32_1 = arith.constant 0 : i32
    return %c0_i32, %c0_i32_0 : i32, i32
  }
  func.func @transform_19(%arg0: i32, %arg1: i32) -> (i32, i32, i32) {
    %c0_i32 = arith.constant 0 : i32
    %c0_i32_0 = arith.constant 0 : i32
    return %arg0, %arg1, %c0_i32 : i32, i32, i32
  }
}

</mosaic_0001>

<llo_original>
// kernel: tpu_custom_call.1
$region0: #{tpu_custom_call.1}
  #allocation0 [shape = 'u32[]', space=smem, size = 0x4, offset = 0x4, fixed_abs, tag = 'smem constant byte address 0x4 - core index']
  #allocation1 [shape = 'u32[72,128]{1,0:T(1,128)}', space=vmem, size = 0x9000, scoped, tag = 'internal scratch']
  #allocation2 [shape = 'bf16[8,32]{1,0:T(8,128)(2,1)}', space=vmem, size = 0x800, scoped, tag = 'scratch operand']
  #allocation3 [shape = 'bf16[8,32]{1,0:T(8,128)(2,1)}', space=vmem, size = 0x800, scoped, tag = 'scratch operand']
  #allocation4 [shape = 'bf16[8,32]{1,0:T(8,128)(2,1)}', space=vmem, size = 0x800, scoped, tag = 'scratch operand']
  %s0 = inlined_call_operand.vmem [shape: f32[2,8,32], index: 0, kind: input, shape index: {}]
  %s1 = inlined_call_operand.hbm [shape: bf16[2,8,32], index: 1, kind: input, shape index: {}]
  %s2 = inlined_call_operand.hbm [shape: f32[2,1,8], index: 2, kind: input, shape index: {}]
  %s3 = inlined_call_operand.vmem [shape: bf16[32,32], index: 3, kind: input, shape index: {}]
  %s4 = inlined_call_operand.vmem [shape: f32[1,32], index: 4, kind: input, shape index: {}]
  %s5 = inlined_call_operand.vmem [shape: bf16[32,32], index: 5, kind: input, shape index: {}]
  %s6 = inlined_call_operand.vmem [shape: f32[1,32], index: 6, kind: input, shape index: {}]
  %s7 = inlined_call_operand.hbm [shape: bf16[32,32], index: 7, kind: input, shape index: {}]
  %s8 = inlined_call_operand.vmem [shape: f32[1,32], index: 8, kind: input, shape index: {}]
  %s9 = inlined_call_operand.hbm [shape: bf16[32,32], index: 9, kind: input, shape index: {}]
  %s10 = inlined_call_operand.vmem [shape: f32[1,32], index: 10, kind: input, shape index: {}]
  %s11 = inlined_call_operand.vmem [shape: f32[1,32], index: 11, kind: input, shape index: {}]
  %s12 = inlined_call_operand.vmem [shape: f32[1,32], index: 12, kind: input, shape index: {}]
  %s13 = inlined_call_operand.hbm [shape: bf16[32,64], index: 13, kind: input, shape index: {}]
  %s14 = inlined_call_operand.vmem [shape: f32[1,64], index: 14, kind: input, shape index: {}]
  %s15 = inlined_call_operand.vmem [shape: bf16[64,32], index: 15, kind: input, shape index: {}]
  %s16 = inlined_call_operand.vmem [shape: f32[1,32], index: 16, kind: input, shape index: {}]
  %s17 = inlined_call_operand.vmem [shape: f32[1,32], index: 17, kind: input, shape index: {}]
  %s18 = inlined_call_operand.vmem [shape: f32[1,32], index: 18, kind: input, shape index: {}]
  %s19 = inlined_call_operand.hbm [shape: f32[2,8,32], index: 19, kind: output, shape index: {}]
  %s20 = sld [smem:[#allocation0]]
  $region133: #{tpu_custom_call.1} parent=0
    _
  %s22 = ssub.s32 1, %s20
  %s23 = scalar_select 0, %s22, %s20
  $region1: #{tpu_custom_call.1} parent=0
    #allocation5 [shape = 'u8[4096]{0}', space=vmem, size = 0x1000, scoped, tag = 'input window, operand 1']
    #allocation6 [shape = 's32[2]{0}', space=sflag, size = 0x8, scoped, tag = 'scoped memory for tpu_custom_call.1']
    #allocation7 [shape = 's32[2]{0}', space=sflag, size = 0x8, scoped, tag = 'scoped memory for tpu_custom_call.1']
    #allocation8 [shape = 'u8[1024]{0}', space=vmem, size = 0x400, scoped, tag = 'input window, operand 2']
    #allocation9 [shape = 's32[2]{0}', space=sflag, size = 0x8, scoped, tag = 'scoped memory for tpu_custom_call.1']
    #allocation10 [shape = 'u8[8192]{0}', space=vmem, size = 0x2000, scoped, tag = 'input window, operand 7, single buffered']
    #allocation11 [shape = 'u8[8192]{0}', space=vmem, size = 0x2000, scoped, tag = 'input window, operand 9, single buffered']
    #allocation12 [shape = 's32[1]{0}', space=sflag, size = 0x4, scoped, tag = 'scoped memory for tpu_custom_call.1']
    #allocation13 [shape = 'u8[8192]{0}', space=vmem, size = 0x2000, scoped, tag = 'input window, operand 13, single buffered']
    #allocation14 [shape = 'u8[8192]{0}', space=vmem, size = 0x2000, scoped, tag = 'output window, operand 0']
    %24 = vsyncpa [#allocation6], 0
    %s25 = scalar_lea.sflag [#allocation6], 1
    %26 = vsyncpa %s25, 0
    %27 = vsyncpa [#allocation9], 0
    %s28 = scalar_lea.sflag [#allocation9], 1
    %29 = vsyncpa %s28, 0
    %30 = vsyncpa [#allocation12], 0
    %31 = vsyncpa [#allocation7], 0
    %s32 = scalar_lea.sflag [#allocation7], 1
    %33 = vsyncpa %s32, 0
    loop: start=0, step=1, limit=4
    $region2: #{tpu_custom_call.1} parent=1 // loop_pre_header
      _
    $region3: #{tpu_custom_call.1} parent=1 // loop_header
      %s35 = sphi 0, %s39
      %p36 = scmp.ge.s32.totalorder %s35, 4
      %s42 = sphi 0, %s54
      %s43 = sphi 0, %s50
      %s44 = sphi 0, %s42
      %s45 = sphi 0, %s43
      %s46 = sphi 0, %s44
      %s47 = sphi 0, %s45
      %s59 = sphi 0, %s61
      %s62 = sphi 0, %s59
      %s63 = sphi 0, %s62
      %s79 = sphi 0, %s63
      %s85 = sphi 0, %s87
      %s88 = sphi 0, %s85
      %s89 = sphi 0, %s88
      %s105 = sphi 0, %s89
      %s111 = sphi 0, %s113
      %s114 = sphi 0, %s111
      %s115 = sphi 0, %s114
      %s131 = sphi 0, %s115
      %s135 = sphi 0, %s135
      %s137 = sphi 0, %s135
      %s138 = sphi 0, %s137
      %s152 = sphi 0, %s138
      %s156 = sphi 0, %s156
      %s158 = sphi 0, %s156
      %s159 = sphi 0, %s158
      %s173 = sphi 0, %s159
      %s177 = sphi 0, %s177
      %s179 = sphi 0, %s177
      %s180 = sphi 0, %s179
      %s194 = sphi 0, %s180
      %s198 = sphi 0, %s198
      %s200 = sphi 0, %s198
      %s201 = sphi 0, %s200
      %s215 = sphi 0, %s201
      %s219 = sphi 0, %s219
      %s221 = sphi 0, %s219
      %s222 = sphi 0, %s221
      %s236 = sphi 0, %s222
      %s240 = sphi 0, %s240
      %s242 = sphi 0, %s240
      %s243 = sphi 0, %s242
      %s257 = sphi 0, %s243
      %s261 = sphi 0, %s261
      %s263 = sphi 0, %s261
      %s264 = sphi 0, %s263
      %s278 = sphi 0, %s264
      %s282 = sphi 0, %s282
      %s284 = sphi 0, %s282
      %s285 = sphi 0, %s284
      %s299 = sphi 0, %s285
      %s303 = sphi 0, %s303
      %s305 = sphi 0, %s303
      %s306 = sphi 0, %s305
      %s320 = sphi 0, %s306
      %s324 = sphi 0, %s324
      %s326 = sphi 0, %s324
      %s327 = sphi 0, %s326
      %s341 = sphi 0, %s327
      %s345 = sphi 0, %s345
      %s347 = sphi 0, %s345
      %s348 = sphi 0, %s347
      %s362 = sphi 0, %s348
      %s366 = sphi 0, %s366
      %s368 = sphi 0, %s366
      %s369 = sphi 0, %s368
      %s383 = sphi 0, %s369
      %s387 = sphi 0, %s387
      %s389 = sphi 0, %s387
      %s390 = sphi 0, %s389
      %s404 = sphi 0, %s390
      %s408 = sphi 0, %s408
      %s410 = sphi 0, %s408
      %s411 = sphi 0, %s410
      %s425 = sphi 0, %s411
      %s429 = sphi 0, %s429
      %s431 = sphi 0, %s429
      %s432 = sphi 0, %s431
      %s446 = sphi 0, %s432
      %s450 = sphi 0, %s450
      %s452 = sphi 0, %s450
      %s453 = sphi 0, %s452
      %s467 = sphi 0, %s453
      %s475 = sphi 0, %s477
      %s478 = sphi 0, %s475
      %s479 = sphi 0, %s478
      %s495 = sphi 0, %s479
    $region4: #{tpu_custom_call.1} parent=1 // loop_header_branch
      %38 = sbr.rel (%p36) target = $region8
    $region5: #{tpu_custom_call.1} parent=1 // loop_body
      %s40 = ssub.s32 %s35, 1
      %s41 = ssub.s32 %s35, 2
      %s48 = sadd.s32 1, %s43
      %p49 = scmp.ge.s32.totalorder %s48, 1
      %s50 = scalar_select %p49, 0, %s48
      %s51 = sadd.s32 1, %s42
      %s52 = scalar_select %p49, %s51, %s42
      %p53 = scmp.ge.s32.totalorder %s52, 2
      %s54 = scalar_select %p53, 0, %s52
      %s55 = ssub.s32 %s42, %s54
      %s56 = ssub.s32 %s43, %s50
      %s57 = sor.u32 %s55, %s56
      %p58 = scmp.eq.s32.totalorder %s57, 0
      %s60 = sadd.s32 %s59, 1
      %s61 = scalar_select %p58, %s59, %s60
      %p64 = pneg %p58
      %p65 = scmp.eq.s32.totalorder %s35, 1
      %p66 = por %p64, %p65
      %p67 = scmp.ne.s32.totalorder %s59, %s62
      %p68 = scmp.eq.s32.totalorder %s35, 0
      %p69 = por %p67, %p68
      %p70 = scmp.ne.s32.totalorder %s59, %s62
      %p71 = scmp.eq.s32.totalorder %s40, 1
      %p72 = por %p70, %p71
      %p73 = scmp.ne.s32.totalorder %s62, %s63
      %p74 = scmp.eq.s32.totalorder %s40, 0
      %p75 = por %p73, %p74
      %p76 = scmp.ne.s32.totalorder %s62, %s63
      %p77 = scmp.eq.s32.totalorder %s41, 1
      %p78 = por %p76, %p77
      %p80 = scmp.ne.s32.totalorder %s63, %s79
      %p81 = scmp.eq.s32.totalorder %s41, 0
      %p82 = por %p80, %p81
      %s83 = ssub.s32 %s42, %s54
      %p84 = scmp.eq.s32.totalorder %s83, 0
      %s86 = sadd.s32 %s85, 1
      %s87 = scalar_select %p84, %s85, %s86
      %p90 = pneg %p84
      %p91 = scmp.eq.s32.totalorder %s35, 1
      %p92 = por %p90, %p91
      %p93 = scmp.ne.s32.totalorder %s85, %s88
      %p94 = scmp.eq.s32.totalorder %s35, 0
      %p95 = por %p93, %p94
      %p96 = scmp.ne.s32.totalorder %s85, %s88
      %p97 = scmp.eq.s32.totalorder %s40, 1
      %p98 = por %p96, %p97
      %p99 = scmp.ne.s32.totalorder %s88, %s89
      %p100 = scmp.eq.s32.totalorder %s40, 0
      %p101 = por %p99, %p100
      %p102 = scmp.ne.s32.totalorder %s88, %s89
      %p103 = scmp.eq.s32.totalorder %s41, 1
      %p104 = por %p102, %p103
      %p106 = scmp.ne.s32.totalorder %s89, %s105
      %p107 = scmp.eq.s32.totalorder %s41, 0
      %p108 = por %p106, %p107
      %s109 = ssub.s32 %s42, %s54
      %p110 = scmp.eq.s32.totalorder %s109, 0
      %s112 = sadd.s32 %s111, 1
      %s113 = scalar_select %p110, %s111, %s112
      %p116 = pneg %p110
      %p117 = scmp.eq.s32.totalorder %s35, 1
      %p118 = por %p116, %p117
      %p119 = scmp.ne.s32.totalorder %s111, %s114
      %p120 = scmp.eq.s32.totalorder %s35, 0
      %p121 = por %p119, %p120
      %p122 = scmp.ne.s32.totalorder %s111, %s114
      %p123 = scmp.eq.s32.totalorder %s40, 1
      %p124 = por %p122, %p123
      %p125 = scmp.ne.s32.totalorder %s114, %s115
      %p126 = scmp.eq.s32.totalorder %s40, 0
      %p127 = por %p125, %p126
      %p128 = scmp.ne.s32.totalorder %s114, %s115
      %p129 = scmp.eq.s32.totalorder %s41, 1
      %p130 = por %p128, %p129
      %p132 = scmp.ne.s32.totalorder %s115, %s131
      %p133 = scmp.eq.s32.totalorder %s41, 0
      %p134 = por %p132, %p133
      %s136 = sadd.s32 %s135, 1
      %p139 = scmp.eq.s32.totalorder %s35, 1
      %p140 = scmp.ne.s32.totalorder %s135, %s137
      %p141 = scmp.eq.s32.totalorder %s35, 0
      %p142 = por %p140, %p141
      %p143 = scmp.ne.s32.totalorder %s135, %s137
      %p144 = scmp.eq.s32.totalorder %s40, 1
      %p145 = por %p143, %p144
      %p146 = scmp.ne.s32.totalorder %s137, %s138
      %p147 = scmp.eq.s32.totalorder %s40, 0
      %p148 = por %p146, %p147
      %p149 = scmp.ne.s32.totalorder %s137, %s138
      %p150 = scmp.eq.s32.totalorder %s41, 1
      %p151 = por %p149, %p150
      %p153 = scmp.ne.s32.totalorder %s138, %s152
      %p154 = scmp.eq.s32.totalorder %s41, 0
      %p155 = por %p153, %p154
      %s157 = sadd.s32 %s156, 1
      %p160 = scmp.eq.s32.totalorder %s35, 1
      %p161 = scmp.ne.s32.totalorder %s156, %s158
      %p162 = scmp.eq.s32.totalorder %s35, 0
      %p163 = por %p161, %p162
      %p164 = scmp.ne.s32.totalorder %s156, %s158
      %p165 = scmp.eq.s32.totalorder %s40, 1
      %p166 = por %p164, %p165
      %p167 = scmp.ne.s32.totalorder %s158, %s159
      %p168 = scmp.eq.s32.totalorder %s40, 0
      %p169 = por %p167, %p168
      %p170 = scmp.ne.s32.totalorder %s158, %s159
      %p171 = scmp.eq.s32.totalorder %s41, 1
      %p172 = por %p170, %p171
      %p174 = scmp.ne.s32.totalorder %s159, %s173
      %p175 = scmp.eq.s32.totalorder %s41, 0
      %p176 = por %p174, %p175
      %s178 = sadd.s32 %s177, 1
      %p181 = scmp.eq.s32.totalorder %s35, 1
      %p182 = scmp.ne.s32.totalorder %s177, %s179
      %p183 = scmp.eq.s32.totalorder %s35, 0
      %p184 = por %p182, %p183
      %p185 = scmp.ne.s32.totalorder %s177, %s179
      %p186 = scmp.eq.s32.totalorder %s40, 1
      %p187 = por %p185, %p186
      %p188 = scmp.ne.s32.totalorder %s179, %s180
      %p189 = scmp.eq.s32.totalorder %s40, 0
      %p190 = por %p188, %p189
      %p191 = scmp.ne.s32.totalorder %s179, %s180
      %p192 = scmp.eq.s32.totalorder %s41, 1
      %p193 = por %p191, %p192
      %p195 = scmp.ne.s32.totalorder %s180, %s194
      %p196 = scmp.eq.s32.totalorder %s41, 0
      %p197 = por %p195, %p196
      %s199 = sadd.s32 %s198, 1
      %p202 = scmp.eq.s32.totalorder %s35, 1
      %p203 = scmp.ne.s32.totalorder %s198, %s200
      %p204 = scmp.eq.s32.totalorder %s35, 0
      %p205 = por %p203, %p204
      %p206 = scmp.ne.s32.totalorder %s198, %s200
      %p207 = scmp.eq.s32.totalorder %s40, 1
      %p208 = por %p206, %p207
      %p209 = scmp.ne.s32.totalorder %s200, %s201
      %p210 = scmp.eq.s32.totalorder %s40, 0
      %p211 = por %p209, %p210
      %p212 = scmp.ne.s32.totalorder %s200, %s201
      %p213 = scmp.eq.s32.totalorder %s41, 1
      %p214 = por %p212, %p213
      %p216 = scmp.ne.s32.totalorder %s201, %s215
      %p217 = scmp.eq.s32.totalorder %s41, 0
      %p218 = por %p216, %p217
      %s220 = sadd.s32 %s219, 1
      %p223 = scmp.eq.s32.totalorder %s35, 1
      %p224 = scmp.ne.s32.totalorder %s219, %s221
      %p225 = scmp.eq.s32.totalorder %s35, 0
      %p226 = por %p224, %p225
      %p227 = scmp.ne.s32.totalorder %s219, %s221
      %p228 = scmp.eq.s32.totalorder %s40, 1
      %p229 = por %p227, %p228
      %p230 = scmp.ne.s32.totalorder %s221, %s222
      %p231 = scmp.eq.s32.totalorder %s40, 0
      %p232 = por %p230, %p231
      %p233 = scmp.ne.s32.totalorder %s221, %s222
      %p234 = scmp.eq.s32.totalorder %s41, 1
      %p235 = por %p233, %p234
      %p237 = scmp.ne.s32.totalorder %s222, %s236
      %p238 = scmp.eq.s32.totalorder %s41, 0
      %p239 = por %p237, %p238
      %s241 = sadd.s32 %s240, 1
      %p244 = scmp.eq.s32.totalorder %s35, 1
      %p245 = scmp.ne.s32.totalorder %s240, %s242
      %p246 = scmp.eq.s32.totalorder %s35, 0
      %p247 = por %p245, %p246
      %p248 = scmp.ne.s32.totalorder %s240, %s242
      %p249 = scmp.eq.s32.totalorder %s40, 1
      %p250 = por %p248, %p249
      %p251 = scmp.ne.s32.totalorder %s242, %s243
      %p252 = scmp.eq.s32.totalorder %s40, 0
      %p253 = por %p251, %p252
      %p254 = scmp.ne.s32.totalorder %s242, %s243
      %p255 = scmp.eq.s32.totalorder %s41, 1
      %p256 = por %p254, %p255
      %p258 = scmp.ne.s32.totalorder %s243, %s257
      %p259 = scmp.eq.s32.totalorder %s41, 0
      %p260 = por %p258, %p259
      %s262 = sadd.s32 %s261, 1
      %p265 = scmp.eq.s32.totalorder %s35, 1
      %p266 = scmp.ne.s32.totalorder %s261, %s263
      %p267 = scmp.eq.s32.totalorder %s35, 0
      %p268 = por %p266, %p267
      %p269 = scmp.ne.s32.totalorder %s261, %s263
      %p270 = scmp.eq.s32.totalorder %s40, 1
      %p271 = por %p269, %p270
      %p272 = scmp.ne.s32.totalorder %s263, %s264
      %p273 = scmp.eq.s32.totalorder %s40, 0
      %p274 = por %p272, %p273
      %p275 = scmp.ne.s32.totalorder %s263, %s264
      %p276 = scmp.eq.s32.totalorder %s41, 1
      %p277 = por %p275, %p276
      %p279 = scmp.ne.s32.totalorder %s264, %s278
      %p280 = scmp.eq.s32.totalorder %s41, 0
      %p281 = por %p279, %p280
      %s283 = sadd.s32 %s282, 1
      %p286 = scmp.eq.s32.totalorder %s35, 1
      %p287 = scmp.ne.s32.totalorder %s282, %s284
      %p288 = scmp.eq.s32.totalorder %s35, 0
      %p289 = por %p287, %p288
      %p290 = scmp.ne.s32.totalorder %s282, %s284
      %p291 = scmp.eq.s32.totalorder %s40, 1
      %p292 = por %p290, %p291
      %p293 = scmp.ne.s32.totalorder %s284, %s285
      %p294 = scmp.eq.s32.totalorder %s40, 0
      %p295 = por %p293, %p294
      %p296 = scmp.ne.s32.totalorder %s284, %s285
      %p297 = scmp.eq.s32.totalorder %s41, 1
      %p298 = por %p296, %p297
      %p300 = scmp.ne.s32.totalorder %s285, %s299
      %p301 = scmp.eq.s32.totalorder %s41, 0
      %p302 = por %p300, %p301
      %s304 = sadd.s32 %s303, 1
      %p307 = scmp.eq.s32.totalorder %s35, 1
      %p308 = scmp.ne.s32.totalorder %s303, %s305
      %p309 = scmp.eq.s32.totalorder %s35, 0
      %p310 = por %p308, %p309
      %p311 = scmp.ne.s32.totalorder %s303, %s305
      %p312 = scmp.eq.s32.totalorder %s40, 1
      %p313 = por %p311, %p312
      %p314 = scmp.ne.s32.totalorder %s305, %s306
      %p315 = scmp.eq.s32.totalorder %s40, 0
      %p316 = por %p314, %p315
      %p317 = scmp.ne.s32.totalorder %s305, %s306
      %p318 = scmp.eq.s32.totalorder %s41, 1
      %p319 = por %p317, %p318
      %p321 = scmp.ne.s32.totalorder %s306, %s320
      %p322 = scmp.eq.s32.totalorder %s41, 0
      %p323 = por %p321, %p322
      %s325 = sadd.s32 %s324, 1
      %p328 = scmp.eq.s32.totalorder %s35, 1
      %p329 = scmp.ne.s32.totalorder %s324, %s326
      %p330 = scmp.eq.s32.totalorder %s35, 0
      %p331 = por %p329, %p330
      %p332 = scmp.ne.s32.totalorder %s324, %s326
      %p333 = scmp.eq.s32.totalorder %s40, 1
      %p334 = por %p332, %p333
      %p335 = scmp.ne.s32.totalorder %s326, %s327
      %p336 = scmp.eq.s32.totalorder %s40, 0
      %p337 = por %p335, %p336
      %p338 = scmp.ne.s32.totalorder %s326, %s327
      %p339 = scmp.eq.s32.totalorder %s41, 1
      %p340 = por %p338, %p339
      %p342 = scmp.ne.s32.totalorder %s327, %s341
      %p343 = scmp.eq.s32.totalorder %s41, 0
      %p344 = por %p342, %p343
      %s346 = sadd.s32 %s345, 1
      %p349 = scmp.eq.s32.totalorder %s35, 1
      %p350 = scmp.ne.s32.totalorder %s345, %s347
      %p351 = scmp.eq.s32.totalorder %s35, 0
      %p352 = por %p350, %p351
      %p353 = scmp.ne.s32.totalorder %s345, %s347
      %p354 = scmp.eq.s32.totalorder %s40, 1
      %p355 = por %p353, %p354
      %p356 = scmp.ne.s32.totalorder %s347, %s348
      %p357 = scmp.eq.s32.totalorder %s40, 0
      %p358 = por %p356, %p357
      %p359 = scmp.ne.s32.totalorder %s347, %s348
      %p360 = scmp.eq.s32.totalorder %s41, 1
      %p361 = por %p359, %p360
      %p363 = scmp.ne.s32.totalorder %s348, %s362
      %p364 = scmp.eq.s32.totalorder %s41, 0
      %p365 = por %p363, %p364
      %s367 = sadd.s32 %s366, 1
      %p370 = scmp.eq.s32.totalorder %s35, 1
      %p371 = scmp.ne.s32.totalorder %s366, %s368
      %p372 = scmp.eq.s32.totalorder %s35, 0
      %p373 = por %p371, %p372
      %p374 = scmp.ne.s32.totalorder %s366, %s368
      %p375 = scmp.eq.s32.totalorder %s40, 1
      %p376 = por %p374, %p375
      %p377 = scmp.ne.s32.totalorder %s368, %s369
      %p378 = scmp.eq.s32.totalorder %s40, 0
      %p379 = por %p377, %p378
      %p380 = scmp.ne.s32.totalorder %s368, %s369
      %p381 = scmp.eq.s32.totalorder %s41, 1
      %p382 = por %p380, %p381
      %p384 = scmp.ne.s32.totalorder %s369, %s383
      %p385 = scmp.eq.s32.totalorder %s41, 0
      %p386 = por %p384, %p385
      %s388 = sadd.s32 %s387, 1
      %p391 = scmp.eq.s32.totalorder %s35, 1
      %p392 = scmp.ne.s32.totalorder %s387, %s389
      %p393 = scmp.eq.s32.totalorder %s35, 0
      %p394 = por %p392, %p393
      %p395 = scmp.ne.s32.totalorder %s387, %s389
      %p396 = scmp.eq.s32.totalorder %s40, 1
      %p397 = por %p395, %p396
      %p398 = scmp.ne.s32.totalorder %s389, %s390
      %p399 = scmp.eq.s32.totalorder %s40, 0
      %p400 = por %p398, %p399
      %p401 = scmp.ne.s32.totalorder %s389, %s390
      %p402 = scmp.eq.s32.totalorder %s41, 1
      %p403 = por %p401, %p402
      %p405 = scmp.ne.s32.totalorder %s390, %s404
      %p406 = scmp.eq.s32.totalorder %s41, 0
      %p407 = por %p405, %p406
      %s409 = sadd.s32 %s408, 1
      %p412 = scmp.eq.s32.totalorder %s35, 1
      %p413 = scmp.ne.s32.totalorder %s408, %s410
      %p414 = scmp.eq.s32.totalorder %s35, 0
      %p415 = por %p413, %p414
      %p416 = scmp.ne.s32.totalorder %s408, %s410
      %p417 = scmp.eq.s32.totalorder %s40, 1
      %p418 = por %p416, %p417
      %p419 = scmp.ne.s32.totalorder %s410, %s411
      %p420 = scmp.eq.s32.totalorder %s40, 0
      %p421 = por %p419, %p420
      %p422 = scmp.ne.s32.totalorder %s410, %s411
      %p423 = scmp.eq.s32.totalorder %s41, 1
      %p424 = por %p422, %p423
      %p426 = scmp.ne.s32.totalorder %s411, %s425
      %p427 = scmp.eq.s32.totalorder %s41, 0
      %p428 = por %p426, %p427
      %s430 = sadd.s32 %s429, 1
      %p433 = scmp.eq.s32.totalorder %s35, 1
      %p434 = scmp.ne.s32.totalorder %s429, %s431
      %p435 = scmp.eq.s32.totalorder %s35, 0
      %p436 = por %p434, %p435
      %p437 = scmp.ne.s32.totalorder %s429, %s431
      %p438 = scmp.eq.s32.totalorder %s40, 1
      %p439 = por %p437, %p438
      %p440 = scmp.ne.s32.totalorder %s431, %s432
      %p441 = scmp.eq.s32.totalorder %s40, 0
      %p442 = por %p440, %p441
      %p443 = scmp.ne.s32.totalorder %s431, %s432
      %p444 = scmp.eq.s32.totalorder %s41, 1
      %p445 = por %p443, %p444
      %p447 = scmp.ne.s32.totalorder %s432, %s446
      %p448 = scmp.eq.s32.totalorder %s41, 0
      %p449 = por %p447, %p448
      %s451 = sadd.s32 %s450, 1
      %p454 = scmp.eq.s32.totalorder %s35, 1
      %p455 = scmp.ne.s32.totalorder %s450, %s452
      %p456 = scmp.eq.s32.totalorder %s35, 0
      %p457 = por %p455, %p456
      %p458 = scmp.ne.s32.totalorder %s450, %s452
      %p459 = scmp.eq.s32.totalorder %s40, 1
      %p460 = por %p458, %p459
      %p461 = scmp.ne.s32.totalorder %s452, %s453
      %p462 = scmp.eq.s32.totalorder %s40, 0
      %p463 = por %p461, %p462
      %p464 = scmp.ne.s32.totalorder %s452, %s453
      %p465 = scmp.eq.s32.totalorder %s41, 1
      %p466 = por %p464, %p465
      %p468 = scmp.ne.s32.totalorder %s453, %s467
      %p469 = scmp.eq.s32.totalorder %s41, 0
      %p470 = por %p468, %p469
      %s471 = ssub.s32 %s42, %s54
      %s472 = ssub.s32 %s43, %s50
      %s473 = sor.u32 %s471, %s472
      %p474 = scmp.eq.s32.totalorder %s473, 0
      %s476 = sadd.s32 %s475, 1
      %s477 = scalar_select %p474, %s475, %s476
      %p480 = pneg %p474
      %p481 = scmp.eq.s32.totalorder %s35, 1
      %p482 = por %p480, %p481
      %p483 = scmp.ne.s32.totalorder %s475, %s478
      %p484 = scmp.eq.s32.totalorder %s35, 0
      %p485 = por %p483, %p484
      %p486 = scmp.ne.s32.totalorder %s475, %s478
      %p487 = scmp.eq.s32.totalorder %s40, 1
      %p488 = por %p486, %p487
      %p489 = scmp.ne.s32.totalorder %s478, %s479
      %p490 = scmp.eq.s32.totalorder %s40, 0
      %p491 = por %p489, %p490
      %p492 = scmp.ne.s32.totalorder %s478, %s479
      %p493 = scmp.eq.s32.totalorder %s41, 1
      %p494 = por %p492, %p493
      %p496 = scmp.ne.s32.totalorder %s479, %s495
      %p497 = scmp.eq.s32.totalorder %s41, 0
      %p498 = por %p496, %p497
      %p499 = scmp.le.s32.totalorder 1, %s35
      %p500 = scmp.lt.s32.totalorder %s35, 3
      %p501 = pnand %p499, %p500
      %p502 = pneg %p501
      // Predicated region
      $region9: #{tpu_custom_call.1} parent=5 // pred_check
        _
      $region10: #{tpu_custom_call.1} parent=5 // pred_check_branch
        %504 = sbr.rel (%p501) target = $region12
      $region11: #{tpu_custom_call.1} parent=5 // pred_region
        %s505 = ssub.s32 %s35, 1
        // Predicated region
        $region13: #{tpu_custom_call.1} parent=11 // pred_check
          %p506 = pneg %p148
        $region14: #{tpu_custom_call.1} parent=11 // pred_check_branch
          %508 = sbr.rel (%p506) target = $region16
        $region15: #{tpu_custom_call.1} parent=11 // pred_region
          _
        $region16: #{tpu_custom_call.1} parent=11 // pred_fallthru
          _
        // Predicated region
        $region17: #{tpu_custom_call.1} parent=11 // pred_check
          %p509 = pneg %p169
        $region18: #{tpu_custom_call.1} parent=11 // pred_check_branch
          %511 = sbr.rel (%p509) target = $region20
        $region19: #{tpu_custom_call.1} parent=11 // pred_region
          _
        $region20: #{tpu_custom_call.1} parent=11 // pred_fallthru
          _
        // Predicated region
        $region21: #{tpu_custom_call.1} parent=11 // pred_check
          %p512 = pneg %p190
        $region22: #{tpu_custom_call.1} parent=11 // pred_check_branch
          %514 = sbr.rel (%p512) target = $region24
        $region23: #{tpu_custom_call.1} parent=11 // pred_region
          _
        $region24: #{tpu_custom_call.1} parent=11 // pred_fallthru
          _
        // Predicated region
        $region25: #{tpu_custom_call.1} parent=11 // pred_check
          %p515 = pneg %p211
        $region26: #{tpu_custom_call.1} parent=11 // pred_check_branch
          %517 = sbr.rel (%p515) target = $region28
        $region27: #{tpu_custom_call.1} parent=11 // pred_region
          _
        $region28: #{tpu_custom_call.1} parent=11 // pred_fallthru
          _
        // Predicated region
        $region29: #{tpu_custom_call.1} parent=11 // pred_check
          %p518 = pneg %p232
        $region30: #{tpu_custom_call.1} parent=11 // pred_check_branch
          %520 = sbr.rel (%p518) target = $region32
        $region31: #{tpu_custom_call.1} parent=11 // pred_region
          %522 = vsyncadd [#allocation9], 0
          %s523 = sshll.u32 %s7, 4
          %s524 = int_to_ptr.hbm [resolvable:$true] %s523
          %s525 = sshll.u32 [#allocation10], 4
          %s526 = int_to_ptr.vmem [resolvable:$true] %s525
          %531 = dma.hbm_to_vmem [thread:$0]  %s524, 256, %s526, [#allocation9], 64, 64, 4
        $region32: #{tpu_custom_call.1} parent=11 // pred_fallthru
          _
        // Predicated region
        $region33: #{tpu_custom_call.1} parent=11 // pred_check
          %p532 = pneg %p253
        $region34: #{tpu_custom_call.1} parent=11 // pred_check_branch
          %534 = sbr.rel (%p532) target = $region36
        $region35: #{tpu_custom_call.1} parent=11 // pred_region
          _
        $region36: #{tpu_custom_call.1} parent=11 // pred_fallthru
          _
        // Predicated region
        $region37: #{tpu_custom_call.1} parent=11 // pred_check
          %p535 = pneg %p274
        $region38: #{tpu_custom_call.1} parent=11 // pred_check_branch
          %537 = sbr.rel (%p535) target = $region40
        $region39: #{tpu_custom_call.1} parent=11 // pred_region
          %539 = vsyncadd [#allocation12], 0
          %s540 = sshll.u32 %s9, 4
          %s541 = int_to_ptr.hbm [resolvable:$true] %s540
          %s542 = sshll.u32 [#allocation11], 4
          %s543 = int_to_ptr.vmem [resolvable:$true] %s542
          %548 = dma.hbm_to_vmem [thread:$0]  %s541, 256, %s543, [#allocation12], 64, 64, 4
        $region40: #{tpu_custom_call.1} parent=11 // pred_fallthru
          _
        // Predicated region
        $region41: #{tpu_custom_call.1} parent=11 // pred_check
          %p549 = pneg %p295
        $region42: #{tpu_custom_call.1} parent=11 // pred_check_branch
          %551 = sbr.rel (%p549) target = $region44
        $region43: #{tpu_custom_call.1} parent=11 // pred_region
          _
        $region44: #{tpu_custom_call.1} parent=11 // pred_fallthru
          _
        // Predicated region
        $region45: #{tpu_custom_call.1} parent=11 // pred_check
          %p552 = pneg %p316
        $region46: #{tpu_custom_call.1} parent=11 // pred_check_branch
          %554 = sbr.rel (%p552) target = $region48
        $region47: #{tpu_custom_call.1} parent=11 // pred_region
          _
        $region48: #{tpu_custom_call.1} parent=11 // pred_fallthru
          _
        // Predicated region
        $region49: #{tpu_custom_call.1} parent=11 // pred_check
          %p555 = pneg %p337
        $region50: #{tpu_custom_call.1} parent=11 // pred_check_branch
          %557 = sbr.rel (%p555) target = $region52
        $region51: #{tpu_custom_call.1} parent=11 // pred_region
          _
        $region52: #{tpu_custom_call.1} parent=11 // pred_fallthru
          _
        // Predicated region
        $region53: #{tpu_custom_call.1} parent=11 // pred_check
          %p558 = pneg %p358
        $region54: #{tpu_custom_call.1} parent=11 // pred_check_branch
          %560 = sbr.rel (%p558) target = $region56
        $region55: #{tpu_custom_call.1} parent=11 // pred_region
          %562 = vsyncadd [#allocation12], 0
          %s563 = sshll.u32 %s13, 4
          %s564 = int_to_ptr.hbm [resolvable:$true] %s563
          %s565 = sshll.u32 [#allocation13], 4
          %s566 = int_to_ptr.vmem [resolvable:$true] %s565
          %571 = dma.hbm_to_vmem [thread:$0]  %s564, 256, %s566, [#allocation12], 64, 64, 4
        $region56: #{tpu_custom_call.1} parent=11 // pred_fallthru
          _
        // Predicated region
        $region57: #{tpu_custom_call.1} parent=11 // pred_check
          %p572 = pneg %p379
        $region58: #{tpu_custom_call.1} parent=11 // pred_check_branch
          %574 = sbr.rel (%p572) target = $region60
        $region59: #{tpu_custom_call.1} parent=11 // pred_region
          _
        $region60: #{tpu_custom_call.1} parent=11 // pred_fallthru
          _
        // Predicated region
        $region61: #{tpu_custom_call.1} parent=11 // pred_check
          %p575 = pneg %p400
        $region62: #{tpu_custom_call.1} parent=11 // pred_check_branch
          %577 = sbr.rel (%p575) target = $region64
        $region63: #{tpu_custom_call.1} parent=11 // pred_region
          _
        $region64: #{tpu_custom_call.1} parent=11 // pred_fallthru
          _
        // Predicated region
        $region65: #{tpu_custom_call.1} parent=11 // pred_check
          %p578 = pneg %p421
        $region66: #{tpu_custom_call.1} parent=11 // pred_check_branch
          %580 = sbr.rel (%p578) target = $region68
        $region67: #{tpu_custom_call.1} parent=11 // pred_region
          _
        $region68: #{tpu_custom_call.1} parent=11 // pred_fallthru
          _
        // Predicated region
        $region69: #{tpu_custom_call.1} parent=11 // pred_check
          %p581 = pneg %p442
        $region70: #{tpu_custom_call.1} parent=11 // pred_check_branch
          %583 = sbr.rel (%p581) target = $region72
        $region71: #{tpu_custom_call.1} parent=11 // pred_region
          _
        $region72: #{tpu_custom_call.1} parent=11 // pred_fallthru
          _
        // Predicated region
        $region73: #{tpu_custom_call.1} parent=11 // pred_check
          %p584 = pneg %p463
        $region74: #{tpu_custom_call.1} parent=11 // pred_check_branch
          %586 = sbr.rel (%p584) target = $region76
        $region75: #{tpu_custom_call.1} parent=11 // pred_region
          _
        $region76: #{tpu_custom_call.1} parent=11 // pred_fallthru
          _
      $region12: #{tpu_custom_call.1} parent=5 // pred_fallthru
        _
      %p587 = scmp.lt.s32.totalorder %s35, 2
      // Predicated region
      $region77: #{tpu_custom_call.1} parent=5 // pred_check
        %p588 = pneg %p587
      $region78: #{tpu_custom_call.1} parent=5 // pred_check_branch
        %590 = sbr.rel (%p588) target = $region80
      $region79: #{tpu_custom_call.1} parent=5 // pred_region
        // Predicated region
        $region81: #{tpu_custom_call.1} parent=79 // pred_check
          %p591 = pneg %p69
        $region82: #{tpu_custom_call.1} parent=79 // pred_check_branch
          %593 = sbr.rel (%p591) target = $region84
        $region83: #{tpu_custom_call.1} parent=79 // pred_region
          %p594 = scmp.lt.s32.totalorder %s42, 1
          %s595 = scalar_select %p594, %s42, 1
          %p596 = scmp.lt.s32.totalorder %s43, 0
          %s597 = scalar_select %p596, %s43, 0
          %s598 = sadd.s32 %s597, %s595
          %s599 = smul.addr %s598, 8
          %s600 = scalar_lea.vmem %s0, %s599
        $region84: #{tpu_custom_call.1} parent=79 // pred_fallthru
          _
        // Predicated region
        $region85: #{tpu_custom_call.1} parent=79 // pred_check
          %p601 = pneg %p95
        $region86: #{tpu_custom_call.1} parent=79 // pred_check_branch
          %603 = sbr.rel (%p601) target = $region88
        $region87: #{tpu_custom_call.1} parent=79 // pred_region
          %s604 = sand.u32 %s85, 1
          %s605 = scalar_lea.sflag [#allocation6], %s604
          %s606 = sand.u32 %s85, 1
          %s607 = smul.addr %s606, 4
          %s608 = scalar_lea.vmem [#allocation5], %s607
          %610 = vsyncadd %s605, 0
          %s611 = smul.addr %s42, 4
          %s612 = scalar_lea.hbm %s1, %s611
          %s614 = sshll.u32 %s612, 4
          %s615 = int_to_ptr.hbm [resolvable:$true] %s614
          %s616 = sshll.u32 %s608, 4
          %s617 = int_to_ptr.vmem [resolvable:$true] %s616
          %619 = dma.hbm_to_vmem [thread:$0]  %s615, 64, %s617, %s605
        $region88: #{tpu_custom_call.1} parent=79 // pred_fallthru
          _
        // Predicated region
        $region89: #{tpu_custom_call.1} parent=79 // pred_check
          %p620 = pneg %p121
        $region90: #{tpu_custom_call.1} parent=79 // pred_check_branch
          %622 = sbr.rel (%p620) target = $region92
        $region91: #{tpu_custom_call.1} parent=79 // pred_region
          %s623 = sand.u32 %s35, 1
          %s624 = scalar_lea.sflag [#allocation9], %s623
          %s625 = sand.u32 %s111, 1
          %s626 = scalar_lea.vmem [#allocation8], %s625
          %628 = vsyncadd %s624, 0
          %s629 = scalar_lea.hbm %s2, %s42
          %s631 = sshll.u32 %s629, 4
          %s632 = int_to_ptr.hbm [resolvable:$true] %s631
          %s633 = sshll.u32 %s626, 4
          %s634 = int_to_ptr.vmem [resolvable:$true] %s633
          %636 = dma.hbm_to_vmem [thread:$0]  %s632, 16, %s634, %s624
        $region92: #{tpu_custom_call.1} parent=79 // pred_fallthru
          _
      $region80: #{tpu_custom_call.1} parent=5 // pred_fallthru
        _
      %p637 = scmp.le.s32.totalorder 1, %s35
      %p638 = scmp.lt.s32.totalorder %s35, 3
      %p639 = pnand %p637, %p638
      %p640 = pneg %p639
      // Predicated region
      $region93: #{tpu_custom_call.1} parent=5 // pred_check
        _
      $region94: #{tpu_custom_call.1} parent=5 // pred_check_branch
        %642 = sbr.rel (%p639) target = $region96
      $region95: #{tpu_custom_call.1} parent=5 // pred_region
        %s643 = ssub.s32 %s35, 1
        %s644 = sand.u32 %s88, 1
        %s645 = scalar_lea.sflag [#allocation6], %s644
        %s646 = sand.u32 %s88, 1
        %s647 = smul.addr %s646, 4
        %s648 = scalar_lea.vmem [#allocation5], %s647
        // Predicated region
        $region97: #{tpu_custom_call.1} parent=95 // pred_check
          %p649 = pneg %p101
        $region98: #{tpu_custom_call.1} parent=95 // pred_check_branch
          %651 = sbr.rel (%p649) target = $region100
        $region99: #{tpu_custom_call.1} parent=95 // pred_region
          %653 = dma.done %s645, 64
        $region100: #{tpu_custom_call.1} parent=95 // pred_fallthru
          _
        %s654 = sand.u32 %s40, 1
        %s655 = scalar_lea.sflag [#allocation9], %s654
        %s656 = sand.u32 %s114, 1
        %s657 = scalar_lea.vmem [#allocation8], %s656
        // Predicated region
        $region101: #{tpu_custom_call.1} parent=95 // pred_check
          %p658 = pneg %p127
        $region102: #{tpu_custom_call.1} parent=95 // pred_check_branch
          %660 = sbr.rel (%p658) target = $region104
        $region103: #{tpu_custom_call.1} parent=95 // pred_region
          %662 = dma.done %s655, 16
        $region104: #{tpu_custom_call.1} parent=95 // pred_fallthru
          _
        // Predicated region
        $region105: #{tpu_custom_call.1} parent=95 // pred_check
          %p663 = pneg %p232
        $region106: #{tpu_custom_call.1} parent=95 // pred_check_branch
          %665 = sbr.rel (%p663) target = $region108
        $region107: #{tpu_custom_call.1} parent=95 // pred_region
          %667 = dma.done [#allocation9], 256
        $region108: #{tpu_custom_call.1} parent=95 // pred_fallthru
          _
        // Predicated region
        $region109: #{tpu_custom_call.1} parent=95 // pred_check
          %p668 = pneg %p274
        $region110: #{tpu_custom_call.1} parent=95 // pred_check_branch
          %670 = sbr.rel (%p668) target = $region112
        $region111: #{tpu_custom_call.1} parent=95 // pred_region
          %672 = dma.done [#allocation12], 256
        $region112: #{tpu_custom_call.1} parent=95 // pred_fallthru
          _
        // Predicated region
        $region113: #{tpu_custom_call.1} parent=95 // pred_check
          %p673 = pneg %p358
        $region114: #{tpu_custom_call.1} parent=95 // pred_check_branch
          %675 = sbr.rel (%p673) target = $region116
        $region115: #{tpu_custom_call.1} parent=95 // pred_region
          %677 = dma.done [#allocation12], 256
        $region116: #{tpu_custom_call.1} parent=95 // pred_fallthru
          _
        %p678 = scmp.lt.s32.totalorder %s44, 1
        %s679 = scalar_select %p678, %s44, 1
        %p680 = scmp.lt.s32.totalorder %s45, 0
        %s681 = scalar_select %p680, %s45, 0
        %s682 = sadd.s32 %s681, %s679
        %s683 = smul.addr %s682, 8
        %s684 = scalar_lea.vmem %s0, %s683
        %p685 = pneg %p75
        %p686 = pneg %p72
        %s687 = sand.u32 %s88, 1
        %s688 = scalar_lea.sflag [#allocation6], %s687
        %s689 = sand.u32 %s88, 1
        %s690 = smul.addr %s689, 4
        %s691 = scalar_lea.vmem [#allocation5], %s690
        %p692 = pneg %p101
        %p693 = pneg %p98
        %s694 = sand.u32 %s40, 1
        %s695 = scalar_lea.sflag [#allocation9], %s694
        %s696 = sand.u32 %s114, 1
        %s697 = scalar_lea.vmem [#allocation8], %s696
        %p698 = pneg %p127
        %p699 = pneg %p124
        %p700 = pneg %p148
        %p701 = pneg %p145
        %p702 = pneg %p169
        %p703 = pneg %p166
        %p704 = pneg %p190
        %p705 = pneg %p187
        %p706 = pneg %p211
        %p707 = pneg %p208
        %p708 = pneg %p232
        %p709 = pneg %p229
        %p710 = pneg %p253
        %p711 = pneg %p250
        %p712 = pneg %p274
        %p713 = pneg %p271
        %p714 = pneg %p295
        %p715 = pneg %p292
        %p716 = pneg %p316
        %p717 = pneg %p313
        %p718 = pneg %p337
        %p719 = pneg %p334
        %p720 = pneg %p358
        %p721 = pneg %p355
        %p722 = pneg %p379
        %p723 = pneg %p376
        %p724 = pneg %p400
        %p725 = pneg %p397
        %p726 = pneg %p421
        %p727 = pneg %p418
        %p728 = pneg %p442
        %p729 = pneg %p439
        %p730 = pneg %p463
        %p731 = pneg %p460
        %p732 = pneg %p491
        %p733 = pneg %p488
        %s734 = sand.u32 %s478, 1
        %s735 = scalar_lea.sflag [#allocation7], %s734
        %s736 = sand.u32 %s478, 1
        %s737 = smul.addr %s736, 8
        %s738 = scalar_lea.vmem [#allocation14], %s737
        %p739 = scmp.lt.s32.totalorder %s44, 1
        %s740 = scalar_select %p739, %s44, 1
        %p741 = scmp.lt.s32.totalorder %s45, 0
        %s742 = scalar_select %p741, %s45, 0
        %s743 = sadd.s32 %s742, %s740
        %s744 = smul.addr %s743, 8
        %s745 = scalar_lea.vmem %s0, %s744
        %p747 = scmp.eq.s32.totalorder %s45, 0
        // Predicated region
        $region117: #{tpu_custom_call.1} parent=95 // pred_check
          %p748 = pneg %p747
        $region118: #{tpu_custom_call.1} parent=95 // pred_check_branch
          %750 = sbr.rel (%p748) target = $region120
        $region119: #{tpu_custom_call.1} parent=95 // pred_region
          %v751 = vld [vmem:[%s648] sm:$0xf]
          %v752 = vld [vmem:[%s5] sm:$0xf]
          %v753 = vld [vmem:[%s5 + $0x4] sm:$0xf]
          %v754 = vld [vmem:[%s5 + $0x8] sm:$0xf]
          %v755 = vld [vmem:[%s5 + $0xc] sm:$0xf]
          %v756 = vld [vmem:[%s6] sm:$0x1]
          %v758 = vperm.slane %v756, 0
          %v764 = vunpack.c.l.b16 %v752
          %v765 = vunpack.c.l.b16 %v753
          %v766 = vunpack.c.l.b16 %v754
          %v767 = vunpack.c.l.b16 %v755
          %v768 = vpack.c.b16 %v765, %v764
          %v769 = vpack.c.b16 %v767, %v766
          %vm772 = vcmask 261120
          %v774 = vsel %vm772, %v751, 0
          %776 = vmatpush.bf16.msra.mxu0 0
          %777 = vmatpush.bf16.msra.mxu0 0
          %778 = vmatpush.bf16.msra.mxu0 0
          %779 = vmatpush.bf16.msra.mxu0 0
          %780 = vmatpush.bf16.msra.mxu0 0
          %781 = vmatpush.bf16.msra.mxu0 0
          %782 = vmatpush.bf16.msra.mxu0 %v769
          %783 = vmatpush.bf16.msra.mxu0 %v768
          %784 = vmatmul.bf16.gmra.mxu0 %v774
          %v785 = vpop.f32.mrf.mxu0
          %v786 = vadd.f32 %v758, %v785
          %v787 = vpop.f32.mrf.mxu0
          %788 = vdwg.mxu0
          %v789 = vld [vmem:[#allocation10] sm:$0xf]
          %v790 = vld [vmem:[#allocation10 + $0x4] sm:$0xf]
          %v791 = vld [vmem:[#allocation10 + $0x8] sm:$0xf]
          %v792 = vld [vmem:[#allocation10 + $0xc] sm:$0xf]
          %v793 = vld [vmem:[%s8] sm:$0x1]
          %v795 = vperm.slane %v793, 0
          %v801 = vunpack.c.l.b16 %v789
          %v802 = vunpack.c.l.b16 %v790
          %v803 = vunpack.c.l.b16 %v791
          %v804 = vunpack.c.l.b16 %v792
          %v805 = vpack.c.b16 %v802, %v801
          %v806 = vpack.c.b16 %v804, %v803
          %809 = vmatpush.bf16.msra.mxu0 0
          %810 = vmatpush.bf16.msra.mxu0 0
          %811 = vmatpush.bf16.msra.mxu0 0
          %812 = vmatpush.bf16.msra.mxu0 0
          %813 = vmatpush.bf16.msra.mxu0 0
          %814 = vmatpush.bf16.msra.mxu0 0
          %815 = vmatpush.bf16.msra.mxu0 %v806
          %816 = vmatpush.bf16.msra.mxu0 %v805
          %817 = vmatmul.bf16.gmra.mxu0 %v774
          %v818 = vpop.f32.mrf.mxu0
          %v819 = vadd.f32 %v795, %v818
          %v820 = vpop.f32.mrf.mxu0
          %821 = vdwg.mxu0
          %v822 = vpack.c.bf16 %v786, %v786
          %vm823 = vcmask 257024
          %824 = vst.msk [vmem:[#allocation2] sm:$0xf] %vm823, %v822
          %v825 = vpack.c.bf16 %v819, %v819
          %826 = vst.msk [vmem:[#allocation3] sm:$0xf] %vm823, %v825
        $region120: #{tpu_custom_call.1} parent=95 // pred_fallthru
          _
        %v827 = vld [vmem:[%s745] sm:$0xff]
        %v828 = vpack.c.bf16 %v827, %v827
        %v829 = vld [vmem:[%s3] sm:$0xf]
        %v830 = vld [vmem:[%s3 + $0x4] sm:$0xf]
        %v831 = vld [vmem:[%s3 + $0x8] sm:$0xf]
        %v832 = vld [vmem:[%s3 + $0xc] sm:$0xf]
        %v833 = vld [vmem:[%s4] sm:$0x1]
        %v835 = vperm.slane %v833, 0
        %v841 = vunpack.c.l.b16 %v829
        %v842 = vunpack.c.l.b16 %v830
        %v843 = vunpack.c.l.b16 %v831
        %v844 = vunpack.c.l.b16 %v832
        %v845 = vpack.c.b16 %v842, %v841
        %v846 = vpack.c.b16 %v844, %v843
        %vm849 = vcmask 261120
        %v851 = vsel %vm849, %v828, 0
        %853 = vmatpush.bf16.msra.mxu0 0
        %854 = vmatpush.bf16.msra.mxu0 0
        %855 = vmatpush.bf16.msra.mxu0 0
        %856 = vmatpush.bf16.msra.mxu0 0
        %857 = vmatpush.bf16.msra.mxu0 0
        %858 = vmatpush.bf16.msra.mxu0 0
        %859 = vmatpush.bf16.msra.mxu0 %v846
        %860 = vmatpush.bf16.msra.mxu0 %v845
        %861 = vmatmul.bf16.gmra.mxu0 %v851
        %v862 = vpop.f32.mrf.mxu0
        %v863 = vadd.f32 %v835, %v862
        %v864 = vpop.f32.mrf.mxu0
        %865 = vdwg.mxu0
        %v866 = vmul.f32 %v863, 0.35355338
        %v867 = vpack.c.bf16 %v866, %v866
        %v868 = vld [vmem:[%s657] sm:$0x1]
        %v870 = vperm.slane %v868, 0
        %v872 = vld [vmem:[#allocation2] sm:$0xf]
        %v873 = vld [vmem:[#allocation3] sm:$0xf]
        %vm874 = vcmask 64512
        %v876 = vsel %vm874, %v867, 0
        %v879 = vsel %vm874, %v872, 0
        %881 = vmatpush.bf16.xpose.msra.mxu0 0
        %882 = vmatpush.bf16.xpose.msra.mxu0 0
        %883 = vmatpush.bf16.xpose.msra.mxu0 0
        %884 = vmatpush.bf16.xpose.msra.mxu0 0
        %885 = vmatpush.bf16.xpose.msra.mxu0 0
        %886 = vmatpush.bf16.xpose.msra.mxu0 0
        %887 = vmatpush.bf16.xpose.msra.mxu0 0
        %888 = vmatpush.bf16.xpose.msra.mxu0 %v879
        %889 = vmatmul.bf16.gmra.mxu0 %v876
        %v890 = vpop.f32.mrf.mxu0
        %v891 = vadd.f32 %v870, %v890
        %v892 = vpop.f32.mrf.mxu0
        %893 = vdwg.mxu0
        %v894 = vsel %vm874, %v891, -inf
        %895 = vmax.xlane.f32.xlu0 %v894
        %v896 = vpop.xlane.xlu0 %895
        %v897 = vsub.f32 %v891, %v896
        %v898 = vmul.f32 %v897, 1.442695
        %v899 = vpow.pop %v898
        %v900 = vsel %vm874, %v899, 0.0
        %901 = vadd.xlane.f32.xlu0 %v900
        %v902 = vpop.xlane.xlu0 %901
        %v903 = vrcp.pop %v902
        %v904 = vmul.f32 %v899, %v903
        %v905 = vpack.c.bf16 %v904, %v904
        %v907 = vsel %vm874, %v905, 0
        %vm909 = vcmask 1043456
        %v911 = vsel %vm909, %v873, 0
        %913 = vmatpush.bf16.msra.mxu0 0
        %914 = vmatpush.bf16.msra.mxu0 0
        %915 = vmatpush.bf16.msra.mxu0 0
        %916 = vmatpush.bf16.msra.mxu0 0
        %917 = vmatpush.bf16.msra.mxu0 0
        %918 = vmatpush.bf16.msra.mxu0 0
        %919 = vmatpush.bf16.msra.mxu0 0
        %920 = vmatpush.bf16.msra.mxu0 %v911
        %921 = vmatmul.bf16.gmra.mxu0 %v907
        %v922 = vpop.f32.mrf.mxu0
        %v923 = vadd.f32 0.0, %v922
        %v924 = vpop.f32.mrf.mxu0
        %925 = vdwg.mxu0
        %v926 = vpack.c.bf16 %v923, %v923
        %vm927 = vcmask 60416
        %928 = vst.msk [vmem:[#allocation4] sm:$0xf] %vm927, %v926
        %v930 = vunpack.c.l.b16 %v867
        %v931 = vpack.c.b16 %v930, %v930
        %932 = vrot.lane.b32.xlu0 %v931, 120
        %v933 = vpop.permute.xlu0 %932
        %v935 = vunpack.c.l.b16 %v872
        %v936 = vpack.c.b16 %v935, %v935
        %937 = vrot.lane.b32.xlu0 %v936, 120
        %v938 = vpop.permute.xlu0 %937
        %v940 = vsel %vm874, %v933, 0
        %v943 = vsel %vm874, %v938, 0
        %945 = vmatpush.bf16.xpose.msra.mxu0 0
        %946 = vmatpush.bf16.xpose.msra.mxu0 0
        %947 = vmatpush.bf16.xpose.msra.mxu0 0
        %948 = vmatpush.bf16.xpose.msra.mxu0 0
        %949 = vmatpush.bf16.xpose.msra.mxu0 0
        %950 = vmatpush.bf16.xpose.msra.mxu0 0
        %951 = vmatpush.bf16.xpose.msra.mxu0 0
        %952 = vmatpush.bf16.xpose.msra.mxu0 %v943
        %953 = vmatmul.bf16.gmra.mxu0 %v940
        %v954 = vpop.f32.mrf.mxu0
        %v955 = vadd.f32 %v870, %v954
        %v956 = vpop.f32.mrf.mxu0
        %957 = vdwg.mxu0
        %v958 = vsel %vm874, %v955, -inf
        %959 = vmax.xlane.f32.xlu0 %v958
        %v960 = vpop.xlane.xlu0 %959
        %v961 = vsub.f32 %v955, %v960
        %v962 = vmul.f32 %v961, 1.442695
        %v963 = vpow.pop %v962
        %v964 = vsel %vm874, %v963, 0.0
        %965 = vadd.xlane.f32.xlu0 %v964
        %v966 = vpop.xlane.xlu0 %965
        %v967 = vrcp.pop %v966
        %v968 = vmul.f32 %v963, %v967
        %v969 = vpack.c.bf16 %v968, %v968
        %v971 = vunpack.c.l.b16 %v873
        %v972 = vpack.c.b16 %v971, %v971
        %973 = vrot.lane.b32.xlu0 %v972, 120
        %v974 = vpop.permute.xlu0 %973
        %v976 = vsel %vm874, %v969, 0
        %v979 = vsel %vm909, %v974, 0
        %981 = vmatpush.bf16.msra.mxu0 0
        %982 = vmatpush.bf16.msra.mxu0 0
        %983 = vmatpush.bf16.msra.mxu0 0
        %984 = vmatpush.bf16.msra.mxu0 0
        %985 = vmatpush.bf16.msra.mxu0 0
        %986 = vmatpush.bf16.msra.mxu0 0
        %987 = vmatpush.bf16.msra.mxu0 0
        %988 = vmatpush.bf16.msra.mxu0 %v979
        %989 = vmatmul.bf16.gmra.mxu0 %v976
        %v990 = vpop.f32.mrf.mxu0
        %v991 = vadd.f32 0.0, %v990
        %v992 = vpop.f32.mrf.mxu0
        %993 = vdwg.mxu0
        %v994 = vpack.c.bf16 %v991, %v991
        %996 = vrot.lane.b32.xlu0 %v994, 8
        %v997 = vpop.permute.xlu0 %996
        %vm999 = vcmask 126016
        %1000 = vst.msk [vmem:[#allocation4] sm:$0xf] %vm999, %v997
        %1001 = vrot.lane.b32.xlu0 %v931, 112
        %v1002 = vpop.permute.xlu0 %1001
        %1003 = vrot.lane.b32.xlu0 %v936, 112
        %v1004 = vpop.permute.xlu0 %1003
        %v1006 = vsel %vm874, %v1002, 0
        %v1009 = vsel %vm874, %v1004, 0
        %1011 = vmatpush.bf16.xpose.msra.mxu0 0
        %1012 = vmatpush.bf16.xpose.msra.mxu0 0
        %1013 = vmatpush.bf16.xpose.msra.mxu0 0
        %1014 = vmatpush.bf16.xpose.msra.mxu0 0
        %1015 = vmatpush.bf16.xpose.msra.mxu0 0
        %1016 = vmatpush.bf16.xpose.msra.mxu0 0
        %1017 = vmatpush.bf16.xpose.msra.mxu0 0
        %1018 = vmatpush.bf16.xpose.msra.mxu0 %v1009
        %1019 = vmatmul.bf16.gmra.mxu0 %v1006
        %v1020 = vpop.f32.mrf.mxu0
        %v1021 = vadd.f32 %v870, %v1020
        %v1022 = vpop.f32.mrf.mxu0
        %1023 = vdwg.mxu0
        %v1024 = vsel %vm874, %v1021, -inf
        %1025 = vmax.xlane.f32.xlu0 %v1024
        %v1026 = vpop.xlane.xlu0 %1025
        %v1027 = vsub.f32 %v1021, %v1026
        %v1028 = vmul.f32 %v1027, 1.442695
        %v1029 = vpow.pop %v1028
        %v1030 = vsel %vm874, %v1029, 0.0
        %1031 = vadd.xlane.f32.xlu0 %v1030
        %v1032 = vpop.xlane.xlu0 %1031
        %v1033 = vrcp.pop %v1032
        %v1034 = vmul.f32 %v1029, %v1033
        %v1035 = vpack.c.bf16 %v1034, %v1034
        %1036 = vrot.lane.b32.xlu0 %v972, 112
        %v1037 = vpop.permute.xlu0 %1036
        %v1039 = vsel %vm874, %v1035, 0
        %v1042 = vsel %vm909, %v1037, 0
        %1044 = vmatpush.bf16.msra.mxu0 0
        %1045 = vmatpush.bf16.msra.mxu0 0
        %1046 = vmatpush.bf16.msra.mxu0 0
        %1047 = vmatpush.bf16.msra.mxu0 0
        %1048 = vmatpush.bf16.msra.mxu0 0
        %1049 = vmatpush.bf16.msra.mxu0 0
        %1050 = vmatpush.bf16.msra.mxu0 0
        %1051 = vmatpush.bf16.msra.mxu0 %v1042
        %1052 = vmatmul.bf16.gmra.mxu0 %v1039
        %v1053 = vpop.f32.mrf.mxu0
        %v1054 = vadd.f32 0.0, %v1053
        %v1055 = vpop.f32.mrf.mxu0
        %1056 = vdwg.mxu0
        %v1057 = vpack.c.bf16 %v1054, %v1054
        %1059 = vrot.lane.b32.xlu0 %v1057, 16
        %v1060 = vpop.permute.xlu0 %1059
        %vm1062 = vcmask 191616
        %1063 = vst.msk [vmem:[#allocation4] sm:$0xf] %vm1062, %v1060
        %1064 = vrot.lane.b32.xlu0 %v931, 104
        %v1065 = vpop.permute.xlu0 %1064
        %1066 = vrot.lane.b32.xlu0 %v936, 104
        %v1067 = vpop.permute.xlu0 %1066
        %v1069 = vsel %vm874, %v1065, 0
        %v1072 = vsel %vm874, %v1067, 0
        %1074 = vmatpush.bf16.xpose.msra.mxu0 0
        %1075 = vmatpush.bf16.xpose.msra.mxu0 0
        %1076 = vmatpush.bf16.xpose.msra.mxu0 0
        %1077 = vmatpush.bf16.xpose.msra.mxu0 0
        %1078 = vmatpush.bf16.xpose.msra.mxu0 0
        %1079 = vmatpush.bf16.xpose.msra.mxu0 0
        %1080 = vmatpush.bf16.xpose.msra.mxu0 0
        %1081 = vmatpush.bf16.xpose.msra.mxu0 %v1072
        %1082 = vmatmul.bf16.gmra.mxu0 %v1069
        %v1083 = vpop.f32.mrf.mxu0
        %v1084 = vadd.f32 %v870, %v1083
        %v1085 = vpop.f32.mrf.mxu0
        %1086 = vdwg.mxu0
        %v1087 = vsel %vm874, %v1084, -inf
        %1088 = vmax.xlane.f32.xlu0 %v1087
        %v1089 = vpop.xlane.xlu0 %1088
        %v1090 = vsub.f32 %v1084, %v1089
        %v1091 = vmul.f32 %v1090, 1.442695
        %v1092 = vpow.pop %v1091
        %v1093 = vsel %vm874, %v1092, 0.0
        %1094 = vadd.xlane.f32.xlu0 %v1093
        %v1095 = vpop.xlane.xlu0 %1094
        %v1096 = vrcp.pop %v1095
        %v1097 = vmul.f32 %v1092, %v1096
        %v1098 = vpack.c.bf16 %v1097, %v1097
        %1099 = vrot.lane.b32.xlu0 %v972, 104
        %v1100 = vpop.permute.xlu0 %1099
        %v1102 = vsel %vm874, %v1098, 0
        %v1105 = vsel %vm909, %v1100, 0
        %1107 = vmatpush.bf16.msra.mxu0 0
        %1108 = vmatpush.bf16.msra.mxu0 0
        %1109 = vmatpush.bf16.msra.mxu0 0
        %1110 = vmatpush.bf16.msra.mxu0 0
        %1111 = vmatpush.bf16.msra.mxu0 0
        %1112 = vmatpush.bf16.msra.mxu0 0
        %1113 = vmatpush.bf16.msra.mxu0 0
        %1114 = vmatpush.bf16.msra.mxu0 %v1105
        %1115 = vmatmul.bf16.gmra.mxu0 %v1102
        %v1116 = vpop.f32.mrf.mxu0
        %v1117 = vadd.f32 0.0, %v1116
        %v1118 = vpop.f32.mrf.mxu0
        %1119 = vdwg.mxu0
        %v1120 = vpack.c.bf16 %v1117, %v1117
        %1122 = vrot.lane.b32.xlu0 %v1120, 24
        %v1123 = vpop.permute.xlu0 %1122
        %vm1125 = vcmask 257216
        %1126 = vst.msk [vmem:[#allocation4] sm:$0xf] %vm1125, %v1123
        %v1127 = vld [vmem:[#allocation4] sm:$0xf]
        %v1128 = vld [vmem:[#allocation11] sm:$0xf]
        %v1129 = vld [vmem:[#allocation11 + $0x4] sm:$0xf]
        %v1130 = vld [vmem:[#allocation11 + $0x8] sm:$0xf]
        %v1131 = vld [vmem:[#allocation11 + $0xc] sm:$0xf]
        %v1132 = vld [vmem:[%s10] sm:$0x1]
        %v1134 = vperm.slane %v1132, 0
        %v1140 = vunpack.c.l.b16 %v1128
        %v1141 = vunpack.c.l.b16 %v1129
        %v1142 = vunpack.c.l.b16 %v1130
        %v1143 = vunpack.c.l.b16 %v1131
        %v1144 = vpack.c.b16 %v1141, %v1140
        %v1145 = vpack.c.b16 %v1143, %v1142
        %v1149 = vsel %vm849, %v1127, 0
        %1151 = vmatpush.bf16.msra.mxu0 0
        %1152 = vmatpush.bf16.msra.mxu0 0
        %1153 = vmatpush.bf16.msra.mxu0 0
        %1154 = vmatpush.bf16.msra.mxu0 0
        %1155 = vmatpush.bf16.msra.mxu0 0
        %1156 = vmatpush.bf16.msra.mxu0 0
        %1157 = vmatpush.bf16.msra.mxu0 %v1145
        %1158 = vmatpush.bf16.msra.mxu0 %v1144
        %1159 = vmatmul.bf16.gmra.mxu0 %v1149
        %v1160 = vpop.f32.mrf.mxu0
        %v1161 = vadd.f32 %v1134, %v1160
        %v1162 = vpop.f32.mrf.mxu0
        %1163 = vdwg.mxu0
        %v1164 = vadd.f32 %v827, %v1161
        %v1165 = vsel %vm849, %v1164, 0.0
        %1166 = vadd.xlane.f32.xlu0 %v1165
        %v1167 = vpop.xlane.xlu0 %1166
        %v1168 = vrcp.pop 32.0
        %v1169 = vmul.f32 32.0, %v1168
        %v1170 = vsub.f32 1.0, %v1169
        %v1171 = vmul.f32 %v1168, %v1170
        %v1172 = vadd.f32 %v1168, %v1171
        %vm1173 = vweird.f32 %v1168
        %v1174 = vsel %vm1173, %v1168, %v1172
        %v1175 = vmul.f32 %v1167, %v1174
        %v1176 = vsub.f32 %v1164, %v1175
        %v1177 = vmul.f32 %v1176, %v1176
        %v1178 = vsel %vm849, %v1177, 0.0
        %1179 = vadd.xlane.f32.xlu0 %v1178
        %v1180 = vpop.xlane.xlu0 %1179
        %v1181 = vmul.f32 %v1180, %v1174
        %v1182 = vadd.f32 %v1181, 1e-05
        %v1183 = vrsqrt.pop %v1182
        %v1184 = vmul.f32 %v1183, %v1182
        %v1185 = vmul.f32 %v1184, %v1183
        %v1186 = vmul.f32 0.5, %v1185
        %v1187 = vsub.f32 1.5, %v1186
        %v1188 = vmul.f32 %v1183, %v1187
        %vm1189 = vweird.f32 %v1182
        %vm1190 = vweird.f32 %v1183
        %vm1191 = vmor %vm1189, %vm1190
        %v1192 = vsel %vm1191, %v1183, %v1188
        %v1193 = vmul.f32 %v1176, %v1192
        %v1194 = vld [vmem:[%s11] sm:$0x1]
        %v1196 = vperm.slane %v1194, 0
        %v1198 = vmul.f32 %v1193, %v1196
        %v1199 = vld [vmem:[%s12] sm:$0x1]
        %v1201 = vperm.slane %v1199, 0
        %v1203 = vadd.f32 %v1198, %v1201
        %v1204 = vpack.c.bf16 %v1203, %v1203
        %v1205 = vld [vmem:[#allocation13] sm:$0xf]
        %v1206 = vld [vmem:[#allocation13 + $0x4] sm:$0xf]
        %v1207 = vld [vmem:[#allocation13 + $0x8] sm:$0xf]
        %v1208 = vld [vmem:[#allocation13 + $0xc] sm:$0xf]
        %v1209 = vld [vmem:[%s14] sm:$0x1]
        %v1211 = vperm.slane %v1209, 0
        %v1217 = vunpack.c.l.b16 %v1205
        %v1218 = vunpack.c.l.b16 %v1206
        %v1219 = vunpack.c.l.b16 %v1207
        %v1220 = vunpack.c.l.b16 %v1208
        %v1221 = vpack.c.b16 %v1218, %v1217
        %v1222 = vpack.c.b16 %v1220, %v1219
        %v1226 = vsel %vm849, %v1204, 0
        %1228 = vmatpush.bf16.msra.mxu0 0
        %1229 = vmatpush.bf16.msra.mxu0 0
        %1230 = vmatpush.bf16.msra.mxu0 0
        %1231 = vmatpush.bf16.msra.mxu0 0
        %1232 = vmatpush.bf16.msra.mxu0 0
        %1233 = vmatpush.bf16.msra.mxu0 0
        %1234 = vmatpush.bf16.msra.mxu0 %v1222
        %1235 = vmatpush.bf16.msra.mxu0 %v1221
        %1236 = vmatmul.bf16.gmra.mxu0 %v1226
        %v1237 = vpop.f32.mrf.mxu0
        %v1238 = vadd.f32 %v1211, %v1237
        %v1239 = vpop.f32.mrf.mxu0
        %1240 = vdwg.mxu0
        %v1241 = vmax.f32 %v1238, 0.0
        %v1242 = vpack.c.bf16 %v1241, %v1241
        %v1243 = vld [vmem:[%s15] sm:$0xf]
        %v1244 = vld [vmem:[%s15 + $0x4] sm:$0xf]
        %v1245 = vld [vmem:[%s15 + $0x8] sm:$0xf]
        %v1246 = vld [vmem:[%s15 + $0xc] sm:$0xf]
        %v1247 = vld [vmem:[%s15 + $0x10] sm:$0xf]
        %v1248 = vld [vmem:[%s15 + $0x14] sm:$0xf]
        %v1249 = vld [vmem:[%s15 + $0x18] sm:$0xf]
        %v1250 = vld [vmem:[%s15 + $0x1c] sm:$0xf]
        %v1251 = vld [vmem:[%s16] sm:$0x1]
        %v1253 = vperm.slane %v1251, 0
        %v1263 = vunpack.c.l.b16 %v1243
        %v1264 = vunpack.c.l.b16 %v1244
        %v1265 = vunpack.c.l.b16 %v1245
        %v1266 = vunpack.c.l.b16 %v1246
        %v1267 = vunpack.c.l.b16 %v1247
        %v1268 = vunpack.c.l.b16 %v1248
        %v1269 = vunpack.c.l.b16 %v1249
        %v1270 = vunpack.c.l.b16 %v1250
        %v1271 = vpack.c.b16 %v1264, %v1263
        %v1272 = vpack.c.b16 %v1266, %v1265
        %v1273 = vpack.c.b16 %v1268, %v1267
        %v1274 = vpack.c.b16 %v1270, %v1269
        %vm1279 = vcmask 523264
        %v1281 = vsel %vm1279, %v1242, 0
        %1283 = vmatpush.bf16.msra.mxu0 0
        %1284 = vmatpush.bf16.msra.mxu0 0
        %1285 = vmatpush.bf16.msra.mxu0 0
        %1286 = vmatpush.bf16.msra.mxu0 0
        %1287 = vmatpush.bf16.msra.mxu0 %v1274
        %1288 = vmatpush.bf16.msra.mxu0 %v1273
        %1289 = vmatpush.bf16.msra.mxu0 %v1272
        %1290 = vmatpush.bf16.msra.mxu0 %v1271
        %1291 = vmatmul.bf16.gmra.mxu0 %v1281
        %v1292 = vpop.f32.mrf.mxu0
        %v1293 = vadd.f32 %v1253, %v1292
        %v1294 = vpop.f32.mrf.mxu0
        %1295 = vdwg.mxu0
        %v1296 = vadd.f32 %v1203, %v1293
        %v1297 = vsel %vm849, %v1296, 0.0
        %1298 = vadd.xlane.f32.xlu0 %v1297
        %v1299 = vpop.xlane.xlu0 %1298
        %v1300 = vmul.f32 %v1299, %v1174
        %v1301 = vsub.f32 %v1296, %v1300
        %v1302 = vmul.f32 %v1301, %v1301
        %v1303 = vsel %vm849, %v1302, 0.0
        %1304 = vadd.xlane.f32.xlu0 %v1303
        %v1305 = vpop.xlane.xlu0 %1304
        %v1306 = vmul.f32 %v1305, %v1174
        %v1307 = vadd.f32 %v1306, 1e-05
        %v1308 = vrsqrt.pop %v1307
        %v1309 = vmul.f32 %v1308, %v1307
        %v1310 = vmul.f32 %v1309, %v1308
        %v1311 = vmul.f32 0.5, %v1310
        %v1312 = vsub.f32 1.5, %v1311
        %v1313 = vmul.f32 %v1308, %v1312
        %vm1314 = vweird.f32 %v1307
        %vm1315 = vweird.f32 %v1308
        %vm1316 = vmor %vm1314, %vm1315
        %v1317 = vsel %vm1316, %v1308, %v1313
        %v1318 = vmul.f32 %v1301, %v1317
        %v1319 = vld [vmem:[%s17] sm:$0x1]
        %v1321 = vperm.slane %v1319, 0
        %v1323 = vmul.f32 %v1318, %v1321
        %v1324 = vld [vmem:[%s18] sm:$0x1]
        %v1326 = vperm.slane %v1324, 0
        %v1328 = vadd.f32 %v1323, %v1326
        %1329 = vst.msk [vmem:[%s738] sm:$0xff] %vm849, %v1328
        %s1330 = sand.u32 %s478, 1
        %s1331 = scalar_lea.sflag [#allocation7], %s1330
        %s1332 = sand.u32 %s478, 1
        %s1333 = smul.addr %s1332, 8
        %s1334 = scalar_lea.vmem [#allocation14], %s1333
        // Predicated region
        $region121: #{tpu_custom_call.1} parent=95 // pred_check
          %p1335 = pneg %p488
        $region122: #{tpu_custom_call.1} parent=95 // pred_check_branch
          %1337 = sbr.rel (%p1335) target = $region124
        $region123: #{tpu_custom_call.1} parent=95 // pred_region
          %1339 = vsyncadd %s1331, 0
          %s1340 = sadd.s32 %s45, %s44
          %s1341 = smul.addr %s1340, 8
          %s1342 = scalar_lea.hbm %s19, %s1341
          %s1344 = sshll.u32 %s1334, 4
          %s1345 = int_to_ptr.vmem [resolvable:$true] %s1344
          %s1346 = sshll.u32 %s1342, 4
          %s1347 = int_to_ptr.hbm [resolvable:$true] %s1346
          %1349 = dma.vmem_to_hbm [thread:$0]  %s1345, 128, %s1347, %s1331
        $region124: #{tpu_custom_call.1} parent=95 // pred_fallthru
          _
      $region96: #{tpu_custom_call.1} parent=5 // pred_fallthru
        _
      %p1350 = scmp.le.s32.totalorder 2, %s35
      // Predicated region
      $region125: #{tpu_custom_call.1} parent=5 // pred_check
        %p1351 = pneg %p1350
      $region126: #{tpu_custom_call.1} parent=5 // pred_check_branch
        %1353 = sbr.rel (%p1351) target = $region128
      $region127: #{tpu_custom_call.1} parent=5 // pred_region
        %s1354 = ssub.s32 %s35, 2
        // Predicated region
        $region129: #{tpu_custom_call.1} parent=127 // pred_check
          %p1355 = pneg %p494
        $region130: #{tpu_custom_call.1} parent=127 // pred_check_branch
          %1357 = sbr.rel (%p1355) target = $region132
        $region131: #{tpu_custom_call.1} parent=127 // pred_region
          %s1358 = sand.u32 %s479, 1
          %s1359 = scalar_lea.sflag [#allocation7], %s1358
          %s1360 = sand.u32 %s479, 1
          %s1361 = smul.addr %s1360, 8
          %s1362 = scalar_lea.vmem [#allocation14], %s1361
          %1364 = dma.done %s1359, 128
        $region132: #{tpu_custom_call.1} parent=127 // pred_fallthru
          _
      $region128: #{tpu_custom_call.1} parent=5 // pred_fallthru
        _
    $region6: #{tpu_custom_call.1} parent=1 // loop_footer
      %s39 = sadd.s32 1, %s35
    $region7: #{tpu_custom_call.1} parent=1 // loop_footer_branch
      %34 = sbr.rel target = $region3
    $region8: #{tpu_custom_call.1} parent=1 // loop_exit
      _
    %1365 = vsyncpa [#allocation6], 1
    %s1366 = scalar_lea.sflag [#allocation6], 1
    %1367 = vsyncpa %s1366, 1
    %1368 = vsyncpa [#allocation9], 1
    %s1369 = scalar_lea.sflag [#allocation9], 1
    %1370 = vsyncpa %s1369, 1
    %1371 = vsyncpa [#allocation12], 1
    %1372 = vsyncpa [#allocation7], 1
    %s1373 = scalar_lea.sflag [#allocation7], 1
    %1374 = vsyncpa %s1373, 1

// kernel: tpu_custom_call.1
$region0: #{tpu_custom_call.1}
  #allocation0 [shape = 'u32[]', space=smem, size = 0x4, offset = 0x4, fixed_abs, tag = 'smem constant byte address 0x4 - core index']
  #allocation1 [shape = 'u32[72,128]{1,0:T(1,128)}', space=vmem, size = 0x9000, scoped, tag = 'internal scratch']
  #allocation2 [shape = 'bf16[8,32]{1,0:T(8,128)(2,1)}', space=vmem, size = 0x800, scoped, tag = 'scratch operand']
  #allocation3 [shape = 'bf16[8,32]{1,0:T(8,128)(2,1)}', space=vmem, size = 0x800, scoped, tag = 'scratch operand']
  #allocation4 [shape = 'bf16[8,32]{1,0:T(8,128)(2,1)}', space=vmem, size = 0x800, scoped, tag = 'scratch operand']
  %s0 = inlined_call_operand.vmem [shape: f32[2,8,32], index: 0, kind: input, shape index: {}]
  %s1 = inlined_call_operand.hbm [shape: bf16[2,8,32], index: 1, kind: input, shape index: {}]
  %s2 = inlined_call_operand.hbm [shape: f32[2,1,8], index: 2, kind: input, shape index: {}]
  %s3 = inlined_call_operand.vmem [shape: bf16[32,32], index: 3, kind: input, shape index: {}]
  %s4 = inlined_call_operand.vmem [shape: f32[1,32], index: 4, kind: input, shape index: {}]
  %s5 = inlined_call_operand.vmem [shape: bf16[32,32], index: 5, kind: input, shape index: {}]
  %s6 = inlined_call_operand.vmem [shape: f32[1,32], index: 6, kind: input, shape index: {}]
  %s7 = inlined_call_operand.hbm [shape: bf16[32,32], index: 7, kind: input, shape index: {}]
  %s8 = inlined_call_operand.vmem [shape: f32[1,32], index: 8, kind: input, shape index: {}]
  %s9 = inlined_call_operand.hbm [shape: bf16[32,32], index: 9, kind: input, shape index: {}]
  %s10 = inlined_call_operand.vmem [shape: f32[1,32], index: 10, kind: input, shape index: {}]
  %s11 = inlined_call_operand.vmem [shape: f32[1,32], index: 11, kind: input, shape index: {}]
  %s12 = inlined_call_operand.vmem [shape: f32[1,32], index: 12, kind: input, shape index: {}]
  %s13 = inlined_call_operand.hbm [shape: bf16[32,64], index: 13, kind: input, shape index: {}]
  %s14 = inlined_call_operand.vmem [shape: f32[1,64], index: 14, kind: input, shape index: {}]
  %s15 = inlined_call_operand.vmem [shape: bf16[64,32], index: 15, kind: input, shape index: {}]
  %s16 = inlined_call_operand.vmem [shape: f32[1,32], index: 16, kind: input, shape index: {}]
  %s17 = inlined_call_operand.vmem [shape: f32[1,32], index: 17, kind: input, shape index: {}]
  %s18 = inlined_call_operand.vmem [shape: f32[1,32], index: 18, kind: input, shape index: {}]
  %s19 = inlined_call_operand.hbm [shape: f32[2,8,32], index: 19, kind: output, shape index: {}]
  %s20 = sld [smem:[#allocation0]]
  $region133: #{tpu_custom_call.1} parent=0
    _
  %s22 = ssub.s32 1, %s20
  %s23 = scalar_select 0, %s22, %s20
  $region1: #{tpu_custom_call.1} parent=0
    #allocation5 [shape = 'u8[4096]{0}', space=vmem, size = 0x1000, scoped, tag = 'input window, operand 1']
    #allocation6 [shape = 's32[2]{0}', space=sflag, size = 0x8, scoped, tag = 'scoped memory for tpu_custom_call.1']
    #allocation7 [shape = 's32[2]{0}', space=sflag, size = 0x8, scoped, tag = 'scoped memory for tpu_custom_call.1']
    #allocation8 [shape = 'u8[1024]{0}', space=vmem, size = 0x400, scoped, tag = 'input window, operand 2']
    #allocation9 [shape = 's32[2]{0}', space=sflag, size = 0x8, scoped, tag = 'scoped memory for tpu_custom_call.1']
    #allocation10 [shape = 'u8[8192]{0}', space=vmem, size = 0x2000, scoped, tag = 'input window, operand 7, single buffered']
    #allocation11 [shape = 'u8[8192]{0}', space=vmem, size = 0x2000, scoped, tag = 'input window, operand 9, single buffered']
    #allocation12 [shape = 's32[1]{0}', space=sflag, size = 0x4, scoped, tag = 'scoped memory for tpu_custom_call.1']
    #allocation13 [shape = 'u8[8192]{0}', space=vmem, size = 0x2000, scoped, tag = 'input window, operand 13, single buffered']
    #allocation14 [shape = 'u8[8192]{0}', space=vmem, size = 0x2000, scoped, tag = 'output window, operand 0']
    %24 = vsyncpa [#allocation6], 0
    %s25 = scalar_lea.sflag [#allocation6], 1
    %26 = vsyncpa %s25, 0
    %27 = vsyncpa [#allocation9], 0
    %s28 = scalar_lea.sflag [#allocation9], 1
    %29 = vsyncpa %s28, 0
    %30 = vsyncpa [#allocation12], 0
    %31 = vsyncpa [#allocation7], 0
    %s32 = scalar_lea.sflag [#allocation7], 1
    %33 = vsyncpa %s32, 0
    loop: start=0, step=1, limit=4
    $region2: #{tpu_custom_call.1} parent=1 // loop_pre_header
      _
    $region3: #{tpu_custom_call.1} parent=1 // loop_header
      %s35 = sphi 0, %s39
      %p36 = scmp.ge.s32.totalorder %s35, 4
      %s42 = sphi 0, %s54
      %s43 = sphi 0, %s50
      %s44 = sphi 0, %s42
      %s45 = sphi 0, %s43
      %s46 = sphi 0, %s44
      %s47 = sphi 0, %s45
      %s59 = sphi 0, %s61
      %s62 = sphi 0, %s59
      %s63 = sphi 0, %s62
      %s79 = sphi 0, %s63
      %s85 = sphi 0, %s87
      %s88 = sphi 0, %s85
      %s89 = sphi 0, %s88
      %s105 = sphi 0, %s89
      %s111 = sphi 0, %s113
      %s114 = sphi 0, %s111
      %s115 = sphi 0, %s114
      %s131 = sphi 0, %s115
      %s135 = sphi 0, %s135
      %s137 = sphi 0, %s135
      %s138 = sphi 0, %s137
      %s152 = sphi 0, %s138
      %s156 = sphi 0, %s156
      %s158 = sphi 0, %s156
      %s159 = sphi 0, %s158
      %s173 = sphi 0, %s159
      %s177 = sphi 0, %s177
      %s179 = sphi 0, %s177
      %s180 = sphi 0, %s179
      %s194 = sphi 0, %s180
      %s198 = sphi 0, %s198
      %s200 = sphi 0, %s198
      %s201 = sphi 0, %s200
      %s215 = sphi 0, %s201
      %s219 = sphi 0, %s219
      %s221 = sphi 0, %s219
      %s222 = sphi 0, %s221
      %s236 = sphi 0, %s222
      %s240 = sphi 0, %s240
      %s242 = sphi 0, %s240
      %s243 = sphi 0, %s242
      %s257 = sphi 0, %s243
      %s261 = sphi 0, %s261
      %s263 = sphi 0, %s261
      %s264 = sphi 0, %s263
      %s278 = sphi 0, %s264
      %s282 = sphi 0, %s282
      %s284 = sphi 0, %s282
      %s285 = sphi 0, %s284
      %s299 = sphi 0, %s285
      %s303 = sphi 0, %s303
      %s305 = sphi 0, %s303
      %s306 = sphi 0, %s305
      %s320 = sphi 0, %s306
      %s324 = sphi 0, %s324
      %s326 = sphi 0, %s324
      %s327 = sphi 0, %s326
      %s341 = sphi 0, %s327
      %s345 = sphi 0, %s345
      %s347 = sphi 0, %s345
      %s348 = sphi 0, %s347
      %s362 = sphi 0, %s348
      %s366 = sphi 0, %s366
      %s368 = sphi 0, %s366
      %s369 = sphi 0, %s368
      %s383 = sphi 0, %s369
      %s387 = sphi 0, %s387
      %s389 = sphi 0, %s387
      %s390 = sphi 0, %s389
      %s404 = sphi 0, %s390
      %s408 = sphi 0, %s408
      %s410 = sphi 0, %s408
      %s411 = sphi 0, %s410
      %s425 = sphi 0, %s411
      %s429 = sphi 0, %s429
      %s431 = sphi 0, %s429
      %s432 = sphi 0, %s431
      %s446 = sphi 0, %s432
      %s450 = sphi 0, %s450
      %s452 = sphi 0, %s450
      %s453 = sphi 0, %s452
      %s467 = sphi 0, %s453
      %s475 = sphi 0, %s477
      %s478 = sphi 0, %s475
      %s479 = sphi 0, %s478
      %s495 = sphi 0, %s479
    $region4: #{tpu_custom_call.1} parent=1 // loop_header_branch
      %38 = sbr.rel (%p36) target = $region8
    $region5: #{tpu_custom_call.1} parent=1 // loop_body
      %s40 = ssub.s32 %s35, 1
      %s41 = ssub.s32 %s35, 2
      %s48 = sadd.s32 1, %s43
      %p49 = scmp.ge.s32.totalorder %s48, 1
      %s50 = scalar_select %p49, 0, %s48
      %s51 = sadd.s32 1, %s42
      %s52 = scalar_select %p49, %s51, %s42
      %p53 = scmp.ge.s32.totalorder %s52, 2
      %s54 = scalar_select %p53, 0, %s52
      %s55 = ssub.s32 %s42, %s54
      %s56 = ssub.s32 %s43, %s50
      %s57 = sor.u32 %s55, %s56
      %p58 = scmp.eq.s32.totalorder %s57, 0
      %s60 = sadd.s32 %s59, 1
      %s61 = scalar_select %p58, %s59, %s60
      %p64 = pneg %p58
      %p65 = scmp.eq.s32.totalorder %s35, 1
      %p66 = por %p64, %p65
      %p67 = scmp.ne.s32.totalorder %s59, %s62
      %p68 = scmp.eq.s32.totalorder %s35, 0
      %p69 = por %p67, %p68
      %p70 = scmp.ne.s32.totalorder %s59, %s62
      %p71 = scmp.eq.s32.totalorder %s40, 1
      %p72 = por %p70, %p71
      %p73 = scmp.ne.s32.totalorder %s62, %s63
      %p74 = scmp.eq.s32.totalorder %s40, 0
      %p75 = por %p73, %p74
      %p76 = scmp.ne.s32.totalorder %s62, %s63
      %p77 = scmp.eq.s32.totalorder %s41, 1
      %p78 = por %p76, %p77
      %p80 = scmp.ne.s32.totalorder %s63, %s79
      %p81 = scmp.eq.s32.totalorder %s41, 0
      %p82 = por %p80, %p81
      %s83 = ssub.s32 %s42, %s54
      %p84 = scmp.eq.s32.totalorder %s83, 0
      %s86 = sadd.s32 %s85, 1
      %s87 = scalar_select %p84, %s85, %s86
      %p90 = pneg %p84
      %p91 = scmp.eq.s32.totalorder %s35, 1
      %p92 = por %p90, %p91
      %p93 = scmp.ne.s32.totalorder %s85, %s88
      %p94 = scmp.eq.s32.totalorder %s35, 0
      %p95 = por %p93, %p94
      %p96 = scmp.ne.s32.totalorder %s85, %s88
      %p97 = scmp.eq.s32.totalorder %s40, 1
      %p98 = por %p96, %p97
      %p99 = scmp.ne.s32.totalorder %s88, %s89
      %p100 = scmp.eq.s32.totalorder %s40, 0
      %p101 = por %p99, %p100
      %p102 = scmp.ne.s32.totalorder %s88, %s89
      %p103 = scmp.eq.s32.totalorder %s41, 1
      %p104 = por %p102, %p103
      %p106 = scmp.ne.s32.totalorder %s89, %s105
      %p107 = scmp.eq.s32.totalorder %s41, 0
      %p108 = por %p106, %p107
      %s109 = ssub.s32 %s42, %s54
      %p110 = scmp.eq.s32.totalorder %s109, 0
      %s112 = sadd.s32 %s111, 1
      %s113 = scalar_select %p110, %s111, %s112
      %p116 = pneg %p110
      %p117 = scmp.eq.s32.totalorder %s35, 1
      %p118 = por %p116, %p117
      %p119 = scmp.ne.s32.totalorder %s111, %s114
      %p120 = scmp.eq.s32.totalorder %s35, 0
      %p121 = por %p119, %p120
      %p122 = scmp.ne.s32.totalorder %s111, %s114
      %p123 = scmp.eq.s32.totalorder %s40, 1
      %p124 = por %p122, %p123
      %p125 = scmp.ne.s32.totalorder %s114, %s115
      %p126 = scmp.eq.s32.totalorder %s40, 0
      %p127 = por %p125, %p126
      %p128 = scmp.ne.s32.totalorder %s114, %s115
      %p129 = scmp.eq.s32.totalorder %s41, 1
      %p130 = por %p128, %p129
      %p132 = scmp.ne.s32.totalorder %s115, %s131
      %p133 = scmp.eq.s32.totalorder %s41, 0
      %p134 = por %p132, %p133
      %s136 = sadd.s32 %s135, 1
      %p139 = scmp.eq.s32.totalorder %s35, 1
      %p140 = scmp.ne.s32.totalorder %s135, %s137
      %p141 = scmp.eq.s32.totalorder %s35, 0
      %p142 = por %p140, %p141
      %p143 = scmp.ne.s32.totalorder %s135, %s137
      %p144 = scmp.eq.s32.totalorder %s40, 1
      %p145 = por %p143, %p144
      %p146 = scmp.ne.s32.totalorder %s137, %s138
      %p147 = scmp.eq.s32.totalorder %s40, 0
      %p148 = por %p146, %p147
      %p149 = scmp.ne.s32.totalorder %s137, %s138
      %p150 = scmp.eq.s32.totalorder %s41, 1
      %p151 = por %p149, %p150
      %p153 = scmp.ne.s32.totalorder %s138, %s152
      %p154 = scmp.eq.s32.totalorder %s41, 0
      %p155 = por %p153, %p154
      %s157 = sadd.s32 %s156, 1
      %p160 = scmp.eq.s32.totalorder %s35, 1
      %p161 = scmp.ne.s32.totalorder %s156, %s158
      %p162 = scmp.eq.s32.totalorder %s35, 0
      %p163 = por %p161, %p162
      %p164 = scmp.ne.s32.totalorder %s156, %s158
      %p165 = scmp.eq.s32.totalorder %s40, 1
      %p166 = por %p164, %p165
      %p167 = scmp.ne.s32.totalorder %s158, %s159
      %p168 = scmp.eq.s32.totalorder %s40, 0
      %p169 = por %p167, %p168
      %p170 = scmp.ne.s32.totalorder %s158, %s159
      %p171 = scmp.eq.s32.totalorder %s41, 1
      %p172 = por %p170, %p171
      %p174 = scmp.ne.s32.totalorder %s159, %s173
      %p175 = scmp.eq.s32.totalorder %s41, 0
      %p176 = por %p174, %p175
      %s178 = sadd.s32 %s177, 1
      %p181 = scmp.eq.s32.totalorder %s35, 1
      %p182 = scmp.ne.s32.totalorder %s177, %s179
      %p183 = scmp.eq.s32.totalorder %s35, 0
      %p184 = por %p182, %p183
      %p185 = scmp.ne.s32.totalorder %s177, %s179
      %p186 = scmp.eq.s32.totalorder %s40, 1
      %p187 = por %p185, %p186
      %p188 = scmp.ne.s32.totalorder %s179, %s180
      %p189 = scmp.eq.s32.totalorder %s40, 0
      %p190 = por %p188, %p189
      %p191 = scmp.ne.s32.totalorder %s179, %s180
      %p192 = scmp.eq.s32.totalorder %s41, 1
      %p193 = por %p191, %p192
      %p195 = scmp.ne.s32.totalorder %s180, %s194
      %p196 = scmp.eq.s32.totalorder %s41, 0
      %p197 = por %p195, %p196
      %s199 = sadd.s32 %s198, 1
      %p202 = scmp.eq.s32.totalorder %s35, 1
      %p203 = scmp.ne.s32.totalorder %s198, %s200
      %p204 = scmp.eq.s32.totalorder %s35, 0
      %p205 = por %p203, %p204
      %p206 = scmp.ne.s32.totalorder %s198, %s200
      %p207 = scmp.eq.s32.totalorder %s40, 1
      %p208 = por %p206, %p207
      %p209 = scmp.ne.s32.totalorder %s200, %s201
      %p210 = scmp.eq.s32.totalorder %s40, 0
      %p211 = por %p209, %p210
      %p212 = scmp.ne.s32.totalorder %s200, %s201
      %p213 = scmp.eq.s32.totalorder %s41, 1
      %p214 = por %p212, %p213
      %p216 = scmp.ne.s32.totalorder %s201, %s215
      %p217 = scmp.eq.s32.totalorder %s41, 0
      %p218 = por %p216, %p217
      %s220 = sadd.s32 %s219, 1
      %p223 = scmp.eq.s32.totalorder %s35, 1
      %p224 = scmp.ne.s32.totalorder %s219, %s221
      %p225 = scmp.eq.s32.totalorder %s35, 0
      %p226 = por %p224, %p225
      %p227 = scmp.ne.s32.totalorder %s219, %s221
      %p228 = scmp.eq.s32.totalorder %s40, 1
      %p229 = por %p227, %p228
      %p230 = scmp.ne.s32.totalorder %s221, %s222
      %p231 = scmp.eq.s32.totalorder %s40, 0
      %p232 = por %p230, %p231
      %p233 = scmp.ne.s32.totalorder %s221, %s222
      %p234 = scmp.eq.s32.totalorder %s41, 1
      %p235 = por %p233, %p234
      %p237 = scmp.ne.s32.totalorder %s222, %s236
      %p238 = scmp.eq.s32.totalorder %s41, 0
      %p239 = por %p237, %p238
      %s241 = sadd.s32 %s240, 1
      %p244 = scmp.eq.s32.totalorder %s35, 1
      %p245 = scmp.ne.s32.totalorder %s240, %s242
      %p246 = scmp.eq.s32.totalorder %s35, 0
      %p247 = por %p245, %p246
      %p248 = scmp.ne.s32.totalorder %s240, %s242
      %p249 = scmp.eq.s32.totalorder %s40, 1
      %p250 = por %p248, %p249
      %p251 = scmp.ne.s32.totalorder %s242, %s243
      %p252 = scmp.eq.s32.totalorder %s40, 0
      %p253 = por %p251, %p252
      %p254 = scmp.ne.s32.totalorder %s242, %s243
      %p255 = scmp.eq.s32.totalorder %s41, 1
      %p256 = por %p254, %p255
      %p258 = scmp.ne.s32.totalorder %s243, %s257
      %p259 = scmp.eq.s32.totalorder %s41, 0
      %p260 = por %p258, %p259
      %s262 = sadd.s32 %s261, 1
      %p265 = scmp.eq.s32.totalorder %s35, 1
      %p266 = scmp.ne.s32.totalorder %s261, %s263
      %p267 = scmp.eq.s32.totalorder %s35, 0
      %p268 = por %p266, %p267
      %p269 = scmp.ne.s32.totalorder %s261, %s263
      %p270 = scmp.eq.s32.totalorder %s40, 1
      %p271 = por %p269, %p270
      %p272 = scmp.ne.s32.totalorder %s263, %s264
      %p273 = scmp.eq.s32.totalorder %s40, 0
      %p274 = por %p272, %p273
      %p275 = scmp.ne.s32.totalorder %s263, %s264
      %p276 = scmp.eq.s32.totalorder %s41, 1
      %p277 = por %p275, %p276
      %p279 = scmp.ne.s32.totalorder %s264, %s278
      %p280 = scmp.eq.s32.totalorder %s41, 0
      %p281 = por %p279, %p280
      %s283 = sadd.s32 %s282, 1
      %p286 = scmp.eq.s32.totalorder %s35, 1
      %p287 = scmp.ne.s32.totalorder %s282, %s284
      %p288 = scmp.eq.s32.totalorder %s35, 0
      %p289 = por %p287, %p288
      %p290 = scmp.ne.s32.totalorder %s282, %s284
      %p291 = scmp.eq.s32.totalorder %s40, 1
      %p292 = por %p290, %p291
      %p293 = scmp.ne.s32.totalorder %s284, %s285
      %p294 = scmp.eq.s32.totalorder %s40, 0
      %p295 = por %p293, %p294
      %p296 = scmp.ne.s32.totalorder %s284, %s285
      %p297 = scmp.eq.s32.totalorder %s41, 1
      %p298 = por %p296, %p297
      %p300 = scmp.ne.s32.totalorder %s285, %s299
      %p301 = scmp.eq.s32.totalorder %s41, 0
      %p302 = por %p300, %p301
      %s304 = sadd.s32 %s303, 1
      %p307 = scmp.eq.s32.totalorder %s35, 1
      %p308 = scmp.ne.s32.totalorder %s303, %s305
      %p309 = scmp.eq.s32.totalorder %s35, 0
      %p310 = por %p308, %p309
      %p311 = scmp.ne.s32.totalorder %s303, %s305
      %p312 = scmp.eq.s32.totalorder %s40, 1
      %p313 = por %p311, %p312
      %p314 = scmp.ne.s32.totalorder %s305, %s306
      %p315 = scmp.eq.s32.totalorder %s40, 0
      %p316 = por %p314, %p315
      %p317 = scmp.ne.s32.totalorder %s305, %s306
      %p318 = scmp.eq.s32.totalorder %s41, 1
      %p319 = por %p317, %p318
      %p321 = scmp.ne.s32.totalorder %s306, %s320
      %p322 = scmp.eq.s32.totalorder %s41, 0
      %p323 = por %p321, %p322
      %s325 = sadd.s32 %s324, 1
      %p328 = scmp.eq.s32.totalorder %s35, 1
      %p329 = scmp.ne.s32.totalorder %s324, %s326
      %p330 = scmp.eq.s32.totalorder %s35, 0
      %p331 = por %p329, %p330
      %p332 = scmp.ne.s32.totalorder %s324, %s326
      %p333 = scmp.eq.s32.totalorder %s40, 1
      %p334 = por %p332, %p333
      %p335 = scmp.ne.s32.totalorder %s326, %s327
      %p336 = scmp.eq.s32.totalorder %s40, 0
      %p337 = por %p335, %p336
      %p338 = scmp.ne.s32.totalorder %s326, %s327
      %p339 = scmp.eq.s32.totalorder %s41, 1
      %p340 = por %p338, %p339
      %p342 = scmp.ne.s32.totalorder %s327, %s341
      %p343 = scmp.eq.s32.totalorder %s41, 0
      %p344 = por %p342, %p343
      %s346 = sadd.s32 %s345, 1
      %p349 = scmp.eq.s32.totalorder %s35, 1
      %p350 = scmp.ne.s32.totalorder %s345, %s347
      %p351 = scmp.eq.s32.totalorder %s35, 0
      %p352 = por %p350, %p351
      %p353 = scmp.ne.s32.totalorder %s345, %s347
      %p354 = scmp.eq.s32.totalorder %s40, 1
      %p355 = por %p353, %p354
      %p356 = scmp.ne.s32.totalorder %s347, %s348
      %p357 = scmp.eq.s32.totalorder %s40, 0
      %p358 = por %p356, %p357
      %p359 = scmp.ne.s32.totalorder %s347, %s348
      %p360 = scmp.eq.s32.totalorder %s41, 1
      %p361 = por %p359, %p360
      %p363 = scmp.ne.s32.totalorder %s348, %s362
      %p364 = scmp.eq.s32.totalorder %s41, 0
      %p365 = por %p363, %p364
      %s367 = sadd.s32 %s366, 1
      %p370 = scmp.eq.s32.totalorder %s35, 1
      %p371 = scmp.ne.s32.totalorder %s366, %s368
      %p372 = scmp.eq.s32.totalorder %s35, 0
      %p373 = por %p371, %p372
      %p374 = scmp.ne.s32.totalorder %s366, %s368
      %p375 = scmp.eq.s32.totalorder %s40, 1
      %p376 = por %p374, %p375
      %p377 = scmp.ne.s32.totalorder %s368, %s369
      %p378 = scmp.eq.s32.totalorder %s40, 0
      %p379 = por %p377, %p378
      %p380 = scmp.ne.s32.totalorder %s368, %s369
      %p381 = scmp.eq.s32.totalorder %s41, 1
      %p382 = por %p380, %p381
      %p384 = scmp.ne.s32.totalorder %s369, %s383
      %p385 = scmp.eq.s32.totalorder %s41, 0
      %p386 = por %p384, %p385
      %s388 = sadd.s32 %s387, 1
      %p391 = scmp.eq.s32.totalorder %s35, 1
      %p392 = scmp.ne.s32.totalorder %s387, %s389
      %p393 = scmp.eq.s32.totalorder %s35, 0
      %p394 = por %p392, %p393
      %p395 = scmp.ne.s32.totalorder %s387, %s389
      %p396 = scmp.eq.s32.totalorder %s40, 1
      %p397 = por %p395, %p396
      %p398 = scmp.ne.s32.totalorder %s389, %s390
      %p399 = scmp.eq.s32.totalorder %s40, 0
      %p400 = por %p398, %p399
      %p401 = scmp.ne.s32.totalorder %s389, %s390
      %p402 = scmp.eq.s32.totalorder %s41, 1
      %p403 = por %p401, %p402
      %p405 = scmp.ne.s32.totalorder %s390, %s404
      %p406 = scmp.eq.s32.totalorder %s41, 0
      %p407 = por %p405, %p406
      %s409 = sadd.s32 %s408, 1
      %p412 = scmp.eq.s32.totalorder %s35, 1
      %p413 = scmp.ne.s32.totalorder %s408, %s410
      %p414 = scmp.eq.s32.totalorder %s35, 0
      %p415 = por %p413, %p414
      %p416 = scmp.ne.s32.totalorder %s408, %s410
      %p417 = scmp.eq.s32.totalorder %s40, 1
      %p418 = por %p416, %p417
      %p419 = scmp.ne.s32.totalorder %s410, %s411
      %p420 = scmp.eq.s32.totalorder %s40, 0
      %p421 = por %p419, %p420
      %p422 = scmp.ne.s32.totalorder %s410, %s411
      %p423 = scmp.eq.s32.totalorder %s41, 1
      %p424 = por %p422, %p423
      %p426 = scmp.ne.s32.totalorder %s411, %s425
      %p427 = scmp.eq.s32.totalorder %s41, 0
      %p428 = por %p426, %p427
      %s430 = sadd.s32 %s429, 1
      %p433 = scmp.eq.s32.totalorder %s35, 1
      %p434 = scmp.ne.s32.totalorder %s429, %s431
      %p435 = scmp.eq.s32.totalorder %s35, 0
      %p436 = por %p434, %p435
      %p437 = scmp.ne.s32.totalorder %s429, %s431
      %p438 = scmp.eq.s32.totalorder %s40, 1
      %p439 = por %p437, %p438
      %p440 = scmp.ne.s32.totalorder %s431, %s432
      %p441 = scmp.eq.s32.totalorder %s40, 0
      %p442 = por %p440, %p441
      %p443 = scmp.ne.s32.totalorder %s431, %s432
      %p444 = scmp.eq.s32.totalorder %s41, 1
      %p445 = por %p443, %p444
      %p447 = scmp.ne.s32.totalorder %s432, %s446
      %p448 = scmp.eq.s32.totalorder %s41, 0
      %p449 = por %p447, %p448
      %s451 = sadd.s32 %s450, 1
      %p454 = scmp.eq.s32.totalorder %s35, 1
      %p455 = scmp.ne.s32.totalorder %s450, %s452
      %p456 = scmp.eq.s32.totalorder %s35, 0
      %p457 = por %p455, %p456
      %p458 = scmp.ne.s32.totalorder %s450, %s452
      %p459 = scmp.eq.s32.totalorder %s40, 1
      %p460 = por %p458, %p459
      %p461 = scmp.ne.s32.totalorder %s452, %s453
      %p462 = scmp.eq.s32.totalorder %s40, 0
      %p463 = por %p461, %p462
      %p464 = scmp.ne.s32.totalorder %s452, %s453
      %p465 = scmp.eq.s32.totalorder %s41, 1
      %p466 = por %p464, %p465
      %p468 = scmp.ne.s32.totalorder %s453, %s467
      %p469 = scmp.eq.s32.totalorder %s41, 0
      %p470 = por %p468, %p469
      %s471 = ssub.s32 %s42, %s54
      %s472 = ssub.s32 %s43, %s50
      %s473 = sor.u32 %s471, %s472
      %p474 = scmp.eq.s32.totalorder %s473, 0
      %s476 = sadd.s32 %s475, 1
      %s477 = scalar_select %p474, %s475, %s476
      %p480 = pneg %p474
      %p481 = scmp.eq.s32.totalorder %s35, 1
      %p482 = por %p480, %p481
      %p483 = scmp.ne.s32.totalorder %s475, %s478
      %p484 = scmp.eq.s32.totalorder %s35, 0
      %p485 = por %p483, %p484
      %p486 = scmp.ne.s32.totalorder %s475, %s478
      %p487 = scmp.eq.s32.totalorder %s40, 1
      %p488 = por %p486, %p487
      %p489 = scmp.ne.s32.totalorder %s478, %s479
      %p490 = scmp.eq.s32.totalorder %s40, 0
      %p491 = por %p489, %p490
      %p492 = scmp.ne.s32.totalorder %s478, %s479
      %p493 = scmp.eq.s32.totalorder %s41, 1
      %p494 = por %p492, %p493
      %p496 = scmp.ne.s32.totalorder %s479, %s495
      %p497 = scmp.eq.s32.totalorder %s41, 0
      %p498 = por %p496, %p497
      %p499 = scmp.le.s32.totalorder 1, %s35
      %p500 = scmp.lt.s32.totalorder %s35, 3
      %p501 = pnand %p499, %p500
      %p502 = pneg %p501
      // Predicated region
      $region9: #{tpu_custom_call.1} parent=5 // pred_check
        _
      $region10: #{tpu_custom_call.1} parent=5 // pred_check_branch
        %504 = sbr.rel (%p501) target = $region12
      $region11: #{tpu_custom_call.1} parent=5 // pred_region
        %s505 = ssub.s32 %s35, 1
        // Predicated region
        $region13: #{tpu_custom_call.1} parent=11 // pred_check
          %p506 = pneg %p148
        $region14: #{tpu_custom_call.1} parent=11 // pred_check_branch
          %508 = sbr.rel (%p506) target = $region16
        $region15: #{tpu_custom_call.1} parent=11 // pred_region
          _
        $region16: #{tpu_custom_call.1} parent=11 // pred_fallthru
          _
        // Predicated region
        $region17: #{tpu_custom_call.1} parent=11 // pred_check
          %p509 = pneg %p169
        $region18: #{tpu_custom_call.1} parent=11 // pred_check_branch
          %511 = sbr.rel (%p509) target = $region20
        $region19: #{tpu_custom_call.1} parent=11 // pred_region
          _
        $region20: #{tpu_custom_call.1} parent=11 // pred_fallthru
          _
        // Predicated region
        $region21: #{tpu_custom_call.1} parent=11 // pred_check
          %p512 = pneg %p190
        $region22: #{tpu_custom_call.1} parent=11 // pred_check_branch
          %514 = sbr.rel (%p512) target = $region24
        $region23: #{tpu_custom_call.1} parent=11 // pred_region
          _
        $region24: #{tpu_custom_call.1} parent=11 // pred_fallthru
          _
        // Predicated region
        $region25: #{tpu_custom_call.1} parent=11 // pred_check
          %p515 = pneg %p211
        $region26: #{tpu_custom_call.1} parent=11 // pred_check_branch
          %517 = sbr.rel (%p515) target = $region28
        $region27: #{tpu_custom_call.1} parent=11 // pred_region
          _
        $region28: #{tpu_custom_call.1} parent=11 // pred_fallthru
          _
        // Predicated region
        $region29: #{tpu_custom_call.1} parent=11 // pred_check
          %p518 = pneg %p232
        $region30: #{tpu_custom_call.1} parent=11 // pred_check_branch
          %520 = sbr.rel (%p518) target = $region32
        $region31: #{tpu_custom_call.1} parent=11 // pred_region
          %522 = vsyncadd [#allocation9], 0
          %s523 = sshll.u32 %s7, 4
          %s524 = int_to_ptr.hbm [resolvable:$true] %s523
          %s525 = sshll.u32 [#allocation10], 4
          %s526 = int_to_ptr.vmem [resolvable:$true] %s525
          %531 = dma.hbm_to_vmem [thread:$0]  %s524, 256, %s526, [#allocation9], 64, 64, 4
        $region32: #{tpu_custom_call.1} parent=11 // pred_fallthru
          _
        // Predicated region
        $region33: #{tpu_custom_call.1} parent=11 // pred_check
          %p532 = pneg %p253
        $region34: #{tpu_custom_call.1} parent=11 // pred_check_branch
          %534 = sbr.rel (%p532) target = $region36
        $region35: #{tpu_custom_call.1} parent=11 // pred_region
          _
        $region36: #{tpu_custom_call.1} parent=11 // pred_fallthru
          _
        // Predicated region
        $region37: #{tpu_custom_call.1} parent=11 // pred_check
          %p535 = pneg %p274
        $region38: #{tpu_custom_call.1} parent=11 // pred_check_branch
          %537 = sbr.rel (%p535) target = $region40
        $region39: #{tpu_custom_call.1} parent=11 // pred_region
          %539 = vsyncadd [#allocation12], 0
          %s540 = sshll.u32 %s9, 4
          %s541 = int_to_ptr.hbm [resolvable:$true] %s540
          %s542 = sshll.u32 [#allocation11], 4
          %s543 = int_to_ptr.vmem [resolvable:$true] %s542
          %548 = dma.hbm_to_vmem [thread:$0]  %s541, 256, %s543, [#allocation12], 64, 64, 4
        $region40: #{tpu_custom_call.1} parent=11 // pred_fallthru
          _
        // Predicated region
        $region41: #{tpu_custom_call.1} parent=11 // pred_check
          %p549 = pneg %p295
        $region42: #{tpu_custom_call.1} parent=11 // pred_check_branch
          %551 = sbr.rel (%p549) target = $region44
        $region43: #{tpu_custom_call.1} parent=11 // pred_region
          _
        $region44: #{tpu_custom_call.1} parent=11 // pred_fallthru
          _
        // Predicated region
        $region45: #{tpu_custom_call.1} parent=11 // pred_check
          %p552 = pneg %p316
        $region46: #{tpu_custom_call.1} parent=11 // pred_check_branch
          %554 = sbr.rel (%p552) target = $region48
        $region47: #{tpu_custom_call.1} parent=11 // pred_region
          _
        $region48: #{tpu_custom_call.1} parent=11 // pred_fallthru
          _
        // Predicated region
        $region49: #{tpu_custom_call.1} parent=11 // pred_check
          %p555 = pneg %p337
        $region50: #{tpu_custom_call.1} parent=11 // pred_check_branch
          %557 = sbr.rel (%p555) target = $region52
        $region51: #{tpu_custom_call.1} parent=11 // pred_region
          _
        $region52: #{tpu_custom_call.1} parent=11 // pred_fallthru
          _
        // Predicated region
        $region53: #{tpu_custom_call.1} parent=11 // pred_check
          %p558 = pneg %p358
        $region54: #{tpu_custom_call.1} parent=11 // pred_check_branch
          %560 = sbr.rel (%p558) target = $region56
        $region55: #{tpu_custom_call.1} parent=11 // pred_region
          %562 = vsyncadd [#allocation12], 0
          %s563 = sshll.u32 %s13, 4
          %s564 = int_to_ptr.hbm [resolvable:$true] %s563
          %s565 = sshll.u32 [#allocation13], 4
          %s566 = int_to_ptr.vmem [resolvable:$true] %s565
          %571 = dma.hbm_to_vmem [thread:$0]  %s564, 256, %s566, [#allocation12], 64, 64, 4
        $region56: #{tpu_custom_call.1} parent=11 // pred_fallthru
          _
        // Predicated region
        $region57: #{tpu_custom_call.1} parent=11 // pred_check
          %p572 = pneg %p379
        $region58: #{tpu_custom_call.1} parent=11 // pred_check_branch
          %574 = sbr.rel (%p572) target = $region60
        $region59: #{tpu_custom_call.1} parent=11 // pred_region
          _
        $region60: #{tpu_custom_call.1} parent=11 // pred_fallthru
          _
        // Predicated region
        $region61: #{tpu_custom_call.1} parent=11 // pred_check
          %p575 = pneg %p400
        $region62: #{tpu_custom_call.1} parent=11 // pred_check_branch
          %577 = sbr.rel (%p575) target = $region64
        $region63: #{tpu_custom_call.1} parent=11 // pred_region
          _
        $region64: #{tpu_custom_call.1} parent=11 // pred_fallthru
          _
        // Predicated region
        $region65: #{tpu_custom_call.1} parent=11 // pred_check
          %p578 = pneg %p421
        $region66: #{tpu_custom_call.1} parent=11 // pred_check_branch
          %580 = sbr.rel (%p578) target = $region68
        $region67: #{tpu_custom_call.1} parent=11 // pred_region
          _
        $region68: #{tpu_custom_call.1} parent=11 // pred_fallthru
          _
        // Predicated region
        $region69: #{tpu_custom_call.1} parent=11 // pred_check
          %p581 = pneg %p442
        $region70: #{tpu_custom_call.1} parent=11 // pred_check_branch
          %583 = sbr.rel (%p581) target = $region72
        $region71: #{tpu_custom_call.1} parent=11 // pred_region
          _
        $region72: #{tpu_custom_call.1} parent=11 // pred_fallthru
          _
        // Predicated region
        $region73: #{tpu_custom_call.1} parent=11 // pred_check
          %p584 = pneg %p463
        $region74: #{tpu_custom_call.1} parent=11 // pred_check_branch
          %586 = sbr.rel (%p584) target = $region76
        $region75: #{tpu_custom_call.1} parent=11 // pred_region
          _
        $region76: #{tpu_custom_call.1} parent=11 // pred_fallthru
          _
      $region12: #{tpu_custom_call.1} parent=5 // pred_fallthru
        _
      %p587 = scmp.lt.s32.totalorder %s35, 2
      // Predicated region
      $region77: #{tpu_custom_call.1} parent=5 // pred_check
        %p588 = pneg %p587
      $region78: #{tpu_custom_call.1} parent=5 // pred_check_branch
        %590 = sbr.rel (%p588) target = $region80
      $region79: #{tpu_custom_call.1} parent=5 // pred_region
        // Predicated region
        $region81: #{tpu_custom_call.1} parent=79 // pred_check
          %p591 = pneg %p69
        $region82: #{tpu_custom_call.1} parent=79 // pred_check_branch
          %593 = sbr.rel (%p591) target = $region84
        $region83: #{tpu_custom_call.1} parent=79 // pred_region
          %p594 = scmp.lt.s32.totalorder %s42, 1
          %s595 = scalar_select %p594, %s42, 1
          %p596 = scmp.lt.s32.totalorder %s43, 0
          %s597 = scalar_select %p596, %s43, 0
          %s598 = sadd.s32 %s597, %s595
          %s599 = smul.addr %s598, 8
          %s600 = scalar_lea.vmem %s0, %s599
        $region84: #{tpu_custom_call.1} parent=79 // pred_fallthru
          _
        // Predicated region
        $region85: #{tpu_custom_call.1} parent=79 // pred_check
          %p601 = pneg %p95
        $region86: #{tpu_custom_call.1} parent=79 // pred_check_branch
          %603 = sbr.rel (%p601) target = $region88
        $region87: #{tpu_custom_call.1} parent=79 // pred_region
          %s604 = sand.u32 %s85, 1
          %s605 = scalar_lea.sflag [#allocation6], %s604
          %s606 = sand.u32 %s85, 1
          %s607 = smul.addr %s606, 4
          %s608 = scalar_lea.vmem [#allocation5], %s607
          %610 = vsyncadd %s605, 0
          %s611 = smul.addr %s42, 4
          %s612 = scalar_lea.hbm %s1, %s611
          %s614 = sshll.u32 %s612, 4
          %s615 = int_to_ptr.hbm [resolvable:$true] %s614
          %s616 = sshll.u32 %s608, 4
          %s617 = int_to_ptr.vmem [resolvable:$true] %s616
          %619 = dma.hbm_to_vmem [thread:$0]  %s615, 64, %s617, %s605
        $region88: #{tpu_custom_call.1} parent=79 // pred_fallthru
          _
        // Predicated region
        $region89: #{tpu_custom_call.1} parent=79 // pred_check
          %p620 = pneg %p121
        $region90: #{tpu_custom_call.1} parent=79 // pred_check_branch
          %622 = sbr.rel (%p620) target = $region92
        $region91: #{tpu_custom_call.1} parent=79 // pred_region
          %s623 = sand.u32 %s35, 1
          %s624 = scalar_lea.sflag [#allocation9], %s623
          %s625 = sand.u32 %s111, 1
          %s626 = scalar_lea.vmem [#allocation8], %s625
          %628 = vsyncadd %s624, 0
          %s629 = scalar_lea.hbm %s2, %s42
          %s631 = sshll.u32 %s629, 4
          %s632 = int_to_ptr.hbm [resolvable:$true] %s631
          %s633 = sshll.u32 %s626, 4
          %s634 = int_to_ptr.vmem [resolvable:$true] %s633
          %636 = dma.hbm_to_vmem [thread:$0]  %s632, 16, %s634, %s624
        $region92: #{tpu_custom_call.1} parent=79 // pred_fallthru
          _
      $region80: #{tpu_custom_call.1} parent=5 // pred_fallthru
        _
      %p637 = scmp.le.s32.totalorder 1, %s35
      %p638 = scmp.lt.s32.totalorder %s35, 3
      %p639 = pnand %p637, %p638
      %p640 = pneg %p639
      // Predicated region
      $region93: #{tpu_custom_call.1} parent=5 // pred_check
        _
      $region94: #{tpu_custom_call.1} parent=5 // pred_check_branch
        %642 = sbr.rel (%p639) target = $region96
      $region95: #{tpu_custom_call.1} parent=5 // pred_region
        %s643 = ssub.s32 %s35, 1
        %s644 = sand.u32 %s88, 1
        %s645 = scalar_lea.sflag [#allocation6], %s644
        %s646 = sand.u32 %s88, 1
        %s647 = smul.addr %s646, 4
        %s648 = scalar_lea.vmem [#allocation5], %s647
        // Predicated region
        $region97: #{tpu_custom_call.1} parent=95 // pred_check
          %p649 = pneg %p101
        $region98: #{tpu_custom_call.1} parent=95 // pred_check_branch
          %651 = sbr.rel (%p649) target = $region100
        $region99: #{tpu_custom_call.1} parent=95 // pred_region
          %653 = dma.done %s645, 64
        $region100: #{tpu_custom_call.1} parent=95 // pred_fallthru
          _
        %s654 = sand.u32 %s40, 1
        %s655 = scalar_lea.sflag [#allocation9], %s654
        %s656 = sand.u32 %s114, 1
        %s657 = scalar_lea.vmem [#allocation8], %s656
        // Predicated region
        $region101: #{tpu_custom_call.1} parent=95 // pred_check
          %p658 = pneg %p127
        $region102: #{tpu_custom_call.1} parent=95 // pred_check_branch
          %660 = sbr.rel (%p658) target = $region104
        $region103: #{tpu_custom_call.1} parent=95 // pred_region
          %662 = dma.done %s655, 16
        $region104: #{tpu_custom_call.1} parent=95 // pred_fallthru
          _
        // Predicated region
        $region105: #{tpu_custom_call.1} parent=95 // pred_check
          %p663 = pneg %p232
        $region106: #{tpu_custom_call.1} parent=95 // pred_check_branch
          %665 = sbr.rel (%p663) target = $region108
        $region107: #{tpu_custom_call.1} parent=95 // pred_region
          %667 = dma.done [#allocation9], 256
        $region108: #{tpu_custom_call.1} parent=95 // pred_fallthru
          _
        // Predicated region
        $region109: #{tpu_custom_call.1} parent=95 // pred_check
          %p668 = pneg %p274
        $region110: #{tpu_custom_call.1} parent=95 // pred_check_branch
          %670 = sbr.rel (%p668) target = $region112
        $region111: #{tpu_custom_call.1} parent=95 // pred_region
          %672 = dma.done [#allocation12], 256
        $region112: #{tpu_custom_call.1} parent=95 // pred_fallthru
          _
        // Predicated region
        $region113: #{tpu_custom_call.1} parent=95 // pred_check
          %p673 = pneg %p358
        $region114: #{tpu_custom_call.1} parent=95 // pred_check_branch
          %675 = sbr.rel (%p673) target = $region116
        $region115: #{tpu_custom_call.1} parent=95 // pred_region
          %677 = dma.done [#allocation12], 256
        $region116: #{tpu_custom_call.1} parent=95 // pred_fallthru
          _
        %p678 = scmp.lt.s32.totalorder %s44, 1
        %s679 = scalar_select %p678, %s44, 1
        %p680 = scmp.lt.s32.totalorder %s45, 0
        %s681 = scalar_select %p680, %s45, 0
        %s682 = sadd.s32 %s681, %s679
        %s683 = smul.addr %s682, 8
        %s684 = scalar_lea.vmem %s0, %s683
        %p685 = pneg %p75
        %p686 = pneg %p72
        %s687 = sand.u32 %s88, 1
        %s688 = scalar_lea.sflag [#allocation6], %s687
        %s689 = sand.u32 %s88, 1
        %s690 = smul.addr %s689, 4
        %s691 = scalar_lea.vmem [#allocation5], %s690
        %p692 = pneg %p101
        %p693 = pneg %p98
        %s694 = sand.u32 %s40, 1
        %s695 = scalar_lea.sflag [#allocation9], %s694
        %s696 = sand.u32 %s114, 1
        %s697 = scalar_lea.vmem [#allocation8], %s696
        %p698 = pneg %p127
        %p699 = pneg %p124
        %p700 = pneg %p148
        %p701 = pneg %p145
        %p702 = pneg %p169
        %p703 = pneg %p166
        %p704 = pneg %p190
        %p705 = pneg %p187
        %p706 = pneg %p211
        %p707 = pneg %p208
        %p708 = pneg %p232
        %p709 = pneg %p229
        %p710 = pneg %p253
        %p711 = pneg %p250
        %p712 = pneg %p274
        %p713 = pneg %p271
        %p714 = pneg %p295
        %p715 = pneg %p292
        %p716 = pneg %p316
        %p717 = pneg %p313
        %p718 = pneg %p337
        %p719 = pneg %p334
        %p720 = pneg %p358
        %p721 = pneg %p355
        %p722 = pneg %p379
        %p723 = pneg %p376
        %p724 = pneg %p400
        %p725 = pneg %p397
        %p726 = pneg %p421
        %p727 = pneg %p418
        %p728 = pneg %p442
        %p729 = pneg %p439
        %p730 = pneg %p463
        %p731 = pneg %p460
        %p732 = pneg %p491
        %p733 = pneg %p488
        %s734 = sand.u32 %s478, 1
        %s735 = scalar_lea.sflag [#allocation7], %s734
        %s736 = sand.u32 %s478, 1
        %s737 = smul.addr %s736, 8
        %s738 = scalar_lea.vmem [#allocation14], %s737
        %p739 = scmp.lt.s32.totalorder %s44, 1
        %s740 = scalar_select %p739, %s44, 1
        %p741 = scmp.lt.s32.totalorder %s45, 0
        %s742 = scalar_select %p741, %s45, 0
        %s743 = sadd.s32 %s742, %s740
        %s744 = smul.addr %s743, 8
        %s745 = scalar_lea.vmem %s0, %s744
        %p747 = scmp.eq.s32.totalorder %s45, 0
        // Predicated region
        $region117: #{tpu_custom_call.1} parent=95 // pred_check
          %p748 = pneg %p747
        $region118: #{tpu_custom_call.1} parent=95 // pred_check_branch
          %750 = sbr.rel (%p748) target = $region120
        $region119: #{tpu_custom_call.1} parent=95 // pred_region
          %v751 = vld [vmem:[%s648] sm:$0xf]
          %v752 = vld [vmem:[%s5] sm:$0xf]
          %v753 = vld [vmem:[%s5 + $0x4] sm:$0xf]
          %v754 = vld [vmem:[%s5 + $0x8] sm:$0xf]
          %v755 = vld [vmem:[%s5 + $0xc] sm:$0xf]
          %v756 = vld [vmem:[%s6] sm:$0x1]
          %v758 = vperm.slane %v756, 0
          %v764 = vunpack.c.l.b16 %v752
          %v765 = vunpack.c.l.b16 %v753
          %v766 = vunpack.c.l.b16 %v754
          %v767 = vunpack.c.l.b16 %v755
          %v768 = vpack.c.b16 %v765, %v764
          %v769 = vpack.c.b16 %v767, %v766
          %vm772 = vcmask 261120
          %v774 = vsel %vm772, %v751, 0
          %776 = vmatpush.bf16.msra.mxu0 0
          %777 = vmatpush.bf16.msra.mxu0 0
          %778 = vmatpush.bf16.msra.mxu0 0
          %779 = vmatpush.bf16.msra.mxu0 0
          %780 = vmatpush.bf16.msra.mxu0 0
          %781 = vmatpush.bf16.msra.mxu0 0
          %782 = vmatpush.bf16.msra.mxu0 %v769
          %783 = vmatpush.bf16.msra.mxu0 %v768
          %784 = vmatmul.bf16.gmra.mxu0 %v774
          %v785 = vpop.f32.mrf.mxu0
          %v786 = vadd.f32 %v758, %v785
          %v787 = vpop.f32.mrf.mxu0
          %788 = vdwg.mxu0
          %v789 = vld [vmem:[#allocation10] sm:$0xf]
          %v790 = vld [vmem:[#allocation10 + $0x4] sm:$0xf]
          %v791 = vld [vmem:[#allocation10 + $0x8] sm:$0xf]
          %v792 = vld [vmem:[#allocation10 + $0xc] sm:$0xf]
          %v793 = vld [vmem:[%s8] sm:$0x1]
          %v795 = vperm.slane %v793, 0
          %v801 = vunpack.c.l.b16 %v789
          %v802 = vunpack.c.l.b16 %v790
          %v803 = vunpack.c.l.b16 %v791
          %v804 = vunpack.c.l.b16 %v792
          %v805 = vpack.c.b16 %v802, %v801
          %v806 = vpack.c.b16 %v804, %v803
          %809 = vmatpush.bf16.msra.mxu0 0
          %810 = vmatpush.bf16.msra.mxu0 0
          %811 = vmatpush.bf16.msra.mxu0 0
          %812 = vmatpush.bf16.msra.mxu0 0
          %813 = vmatpush.bf16.msra.mxu0 0
          %814 = vmatpush.bf16.msra.mxu0 0
          %815 = vmatpush.bf16.msra.mxu0 %v806
          %816 = vmatpush.bf16.msra.mxu0 %v805
          %817 = vmatmul.bf16.gmra.mxu0 %v774
          %v818 = vpop.f32.mrf.mxu0
          %v819 = vadd.f32 %v795, %v818
          %v820 = vpop.f32.mrf.mxu0
          %821 = vdwg.mxu0
          %v822 = vpack.c.bf16 %v786, %v786
          %vm823 = vcmask 257024
          %824 = vst.msk [vmem:[#allocation2] sm:$0xf] %vm823, %v822
          %v825 = vpack.c.bf16 %v819, %v819
          %826 = vst.msk [vmem:[#allocation3] sm:$0xf] %vm823, %v825
        $region120: #{tpu_custom_call.1} parent=95 // pred_fallthru
          _
        %v827 = vld [vmem:[%s745] sm:$0xff]
        %v828 = vpack.c.bf16 %v827, %v827
        %v829 = vld [vmem:[%s3] sm:$0xf]
        %v830 = vld [vmem:[%s3 + $0x4] sm:$0xf]
        %v831 = vld [vmem:[%s3 + $0x8] sm:$0xf]
        %v832 = vld [vmem:[%s3 + $0xc] sm:$0xf]
        %v833 = vld [vmem:[%s4] sm:$0x1]
        %v835 = vperm.slane %v833, 0
        %v841 = vunpack.c.l.b16 %v829
        %v842 = vunpack.c.l.b16 %v830
        %v843 = vunpack.c.l.b16 %v831
        %v844 = vunpack.c.l.b16 %v832
        %v845 = vpack.c.b16 %v842, %v841
        %v846 = vpack.c.b16 %v844, %v843
        %vm849 = vcmask 261120
        %v851 = vsel %vm849, %v828, 0
        %853 = vmatpush.bf16.msra.mxu0 0
        %854 = vmatpush.bf16.msra.mxu0 0
        %855 = vmatpush.bf16.msra.mxu0 0
        %856 = vmatpush.bf16.msra.mxu0 0
        %857 = vmatpush.bf16.msra.mxu0 0
        %858 = vmatpush.bf16.msra.mxu0 0
        %859 = vmatpush.bf16.msra.mxu0 %v846
        %860 = vmatpush.bf16.msra.mxu0 %v845
        %861 = vmatmul.bf16.gmra.mxu0 %v851
        %v862 = vpop.f32.mrf.mxu0
        %v863 = vadd.f32 %v835, %v862
        %v864 = vpop.f32.mrf.mxu0
        %865 = vdwg.mxu0
        %v866 = vmul.f32 %v863, 0.35355338
        %v867 = vpack.c.bf16 %v866, %v866
        %v868 = vld [vmem:[%s657] sm:$0x1]
        %v870 = vperm.slane %v868, 0
        %v872 = vld [vmem:[#allocation2] sm:$0xf]
        %v873 = vld [vmem:[#allocation3] sm:$0xf]
        %vm874 = vcmask 64512
        %v876 = vsel %vm874, %v867, 0
        %v879 = vsel %vm874, %v872, 0
        %881 = vmatpush.bf16.xpose.msra.mxu0 0
        %882 = vmatpush.bf16.xpose.msra.mxu0 0
        %883 = vmatpush.bf16.xpose.msra.mxu0 0
        %884 = vmatpush.bf16.xpose.msra.mxu0 0
        %885 = vmatpush.bf16.xpose.msra.mxu0 0
        %886 = vmatpush.bf16.xpose.msra.mxu0 0
        %887 = vmatpush.bf16.xpose.msra.mxu0 0
        %888 = vmatpush.bf16.xpose.msra.mxu0 %v879
        %889 = vmatmul.bf16.gmra.mxu0 %v876
        %v890 = vpop.f32.mrf.mxu0
        %v891 = vadd.f32 %v870, %v890
        %v892 = vpop.f32.mrf.mxu0
        %893 = vdwg.mxu0
        %v894 = vsel %vm874, %v891, -inf
        %895 = vmax.xlane.f32.xlu0 %v894
        %v896 = vpop.xlane.xlu0 %895
        %v897 = vsub.f32 %v891, %v896
        %v898 = vmul.f32 %v897, 1.442695
        %v899 = vpow.pop %v898
        %v900 = vsel %vm874, %v899, 0.0
        %901 = vadd.xlane.f32.xlu0 %v900
        %v902 = vpop.xlane.xlu0 %901
        %v903 = vrcp.pop %v902
        %v904 = vmul.f32 %v899, %v903
        %v905 = vpack.c.bf16 %v904, %v904
        %v907 = vsel %vm874, %v905, 0
        %vm909 = vcmask 1043456
        %v911 = vsel %vm909, %v873, 0
        %913 = vmatpush.bf16.msra.mxu0 0
        %914 = vmatpush.bf16.msra.mxu0 0
        %915 = vmatpush.bf16.msra.mxu0 0
        %916 = vmatpush.bf16.msra.mxu0 0
        %917 = vmatpush.bf16.msra.mxu0 0
        %918 = vmatpush.bf16.msra.mxu0 0
        %919 = vmatpush.bf16.msra.mxu0 0
        %920 = vmatpush.bf16.msra.mxu0 %v911
        %921 = vmatmul.bf16.gmra.mxu0 %v907
        %v922 = vpop.f32.mrf.mxu0
        %v923 = vadd.f32 0.0, %v922
        %v924 = vpop.f32.mrf.mxu0
        %925 = vdwg.mxu0
        %v926 = vpack.c.bf16 %v923, %v923
        %vm927 = vcmask 60416
        %928 = vst.msk [vmem:[#allocation4] sm:$0xf] %vm927, %v926
        %v930 = vunpack.c.l.b16 %v867
        %v931 = vpack.c.b16 %v930, %v930
        %932 = vrot.lane.b32.xlu0 %v931, 120
        %v933 = vpop.permute.xlu0 %932
        %v935 = vunpack.c.l.b16 %v872
        %v936 = vpack.c.b16 %v935, %v935
        %937 = vrot.lane.b32.xlu0 %v936, 120
        %v938 = vpop.permute.xlu0 %937
        %v940 = vsel %vm874, %v933, 0
        %v943 = vsel %vm874, %v938, 0
        %945 = vmatpush.bf16.xpose.msra.mxu0 0
        %946 = vmatpush.bf16.xpose.msra.mxu0 0
        %947 = vmatpush.bf16.xpose.msra.mxu0 0
        %948 = vmatpush.bf16.xpose.msra.mxu0 0
        %949 = vmatpush.bf16.xpose.msra.mxu0 0
        %950 = vmatpush.bf16.xpose.msra.mxu0 0
        %951 = vmatpush.bf16.xpose.msra.mxu0 0
        %952 = vmatpush.bf16.xpose.msra.mxu0 %v943
        %953 = vmatmul.bf16.gmra.mxu0 %v940
        %v954 = vpop.f32.mrf.mxu0
        %v955 = vadd.f32 %v870, %v954
        %v956 = vpop.f32.mrf.mxu0
        %957 = vdwg.mxu0
        %v958 = vsel %vm874, %v955, -inf
        %959 = vmax.xlane.f32.xlu0 %v958
        %v960 = vpop.xlane.xlu0 %959
        %v961 = vsub.f32 %v955, %v960
        %v962 = vmul.f32 %v961, 1.442695
        %v963 = vpow.pop %v962
        %v964 = vsel %vm874, %v963, 0.0
        %965 = vadd.xlane.f32.xlu0 %v964
        %v966 = vpop.xlane.xlu0 %965
        %v967 = vrcp.pop %v966
        %v968 = vmul.f32 %v963, %v967
        %v969 = vpack.c.bf16 %v968, %v968
        %v971 = vunpack.c.l.b16 %v873
        %v972 = vpack.c.b16 %v971, %v971
        %973 = vrot.lane.b32.xlu0 %v972, 120
        %v974 = vpop.permute.xlu0 %973
        %v976 = vsel %vm874, %v969, 0
        %v979 = vsel %vm909, %v974, 0
        %981 = vmatpush.bf16.msra.mxu0 0
        %982 = vmatpush.bf16.msra.mxu0 0
        %983 = vmatpush.bf16.msra.mxu0 0
        %984 = vmatpush.bf16.msra.mxu0 0
        %985 = vmatpush.bf16.msra.mxu0 0
        %986 = vmatpush.bf16.msra.mxu0 0
        %987 = vmatpush.bf16.msra.mxu0 0
        %988 = vmatpush.bf16.msra.mxu0 %v979
        %989 = vmatmul.bf16.gmra.mxu0 %v976
        %v990 = vpop.f32.mrf.mxu0
        %v991 = vadd.f32 0.0, %v990
        %v992 = vpop.f32.mrf.mxu0
        %993 = vdwg.mxu0
        %v994 = vpack.c.bf16 %v991, %v991
        %996 = vrot.lane.b32.xlu0 %v994, 8
        %v997 = vpop.permute.xlu0 %996
        %vm999 = vcmask 126016
        %1000 = vst.msk [vmem:[#allocation4] sm:$0xf] %vm999, %v997
        %1001 = vrot.lane.b32.xlu0 %v931, 112
        %v1002 = vpop.permute.xlu0 %1001
        %1003 = vrot.lane.b32.xlu0 %v936, 112
        %v1004 = vpop.permute.xlu0 %1003
        %v1006 = vsel %vm874, %v1002, 0
        %v1009 = vsel %vm874, %v1004, 0
        %1011 = vmatpush.bf16.xpose.msra.mxu0 0
        %1012 = vmatpush.bf16.xpose.msra.mxu0 0
        %1013 = vmatpush.bf16.xpose.msra.mxu0 0
        %1014 = vmatpush.bf16.xpose.msra.mxu0 0
        %1015 = vmatpush.bf16.xpose.msra.mxu0 0
        %1016 = vmatpush.bf16.xpose.msra.mxu0 0
        %1017 = vmatpush.bf16.xpose.msra.mxu0 0
        %1018 = vmatpush.bf16.xpose.msra.mxu0 %v1009
        %1019 = vmatmul.bf16.gmra.mxu0 %v1006
        %v1020 = vpop.f32.mrf.mxu0
        %v1021 = vadd.f32 %v870, %v1020
        %v1022 = vpop.f32.mrf.mxu0
        %1023 = vdwg.mxu0
        %v1024 = vsel %vm874, %v1021, -inf
        %1025 = vmax.xlane.f32.xlu0 %v1024
        %v1026 = vpop.xlane.xlu0 %1025
        %v1027 = vsub.f32 %v1021, %v1026
        %v1028 = vmul.f32 %v1027, 1.442695
        %v1029 = vpow.pop %v1028
        %v1030 = vsel %vm874, %v1029, 0.0
        %1031 = vadd.xlane.f32.xlu0 %v1030
        %v1032 = vpop.xlane.xlu0 %1031
        %v1033 = vrcp.pop %v1032
        %v1034 = vmul.f32 %v1029, %v1033
        %v1035 = vpack.c.bf16 %v1034, %v1034
        %1036 = vrot.lane.b32.xlu0 %v972, 112
        %v1037 = vpop.permute.xlu0 %1036
        %v1039 = vsel %vm874, %v1035, 0
        %v1042 = vsel %vm909, %v1037, 0
        %1044 = vmatpush.bf16.msra.mxu0 0
        %1045 = vmatpush.bf16.msra.mxu0 0
        %1046 = vmatpush.bf16.msra.mxu0 0
        %1047 = vmatpush.bf16.msra.mxu0 0
        %1048 = vmatpush.bf16.msra.mxu0 0
        %1049 = vmatpush.bf16.msra.mxu0 0
        %1050 = vmatpush.bf16.msra.mxu0 0
        %1051 = vmatpush.bf16.msra.mxu0 %v1042
        %1052 = vmatmul.bf16.gmra.mxu0 %v1039
        %v1053 = vpop.f32.mrf.mxu0
        %v1054 = vadd.f32 0.0, %v1053
        %v1055 = vpop.f32.mrf.mxu0
        %1056 = vdwg.mxu0
        %v1057 = vpack.c.bf16 %v1054, %v1054
        %1059 = vrot.lane.b32.xlu0 %v1057, 16
        %v1060 = vpop.permute.xlu0 %1059
        %vm1062 = vcmask 191616
        %1063 = vst.msk [vmem:[#allocation4] sm:$0xf] %vm1062, %v1060
        %1064 = vrot.lane.b32.xlu0 %v931, 104
        %v1065 = vpop.permute.xlu0 %1064
        %1066 = vrot.lane.b32.xlu0 %v936, 104
        %v1067 = vpop.permute.xlu0 %1066
        %v1069 = vsel %vm874, %v1065, 0
        %v1072 = vsel %vm874, %v1067, 0
        %1074 = vmatpush.bf16.xpose.msra.mxu0 0
        %1075 = vmatpush.bf16.xpose.msra.mxu0 0
        %1076 = vmatpush.bf16.xpose.msra.mxu0 0
        %1077 = vmatpush.bf16.xpose.msra.mxu0 0
        %1078 = vmatpush.bf16.xpose.msra.mxu0 0
        %1079 = vmatpush.bf16.xpose.msra.mxu0 0
        %1080 = vmatpush.bf16.xpose.msra.mxu0 0
        %1081 = vmatpush.bf16.xpose.msra.mxu0 %v1072
        %1082 = vmatmul.bf16.gmra.mxu0 %v1069
        %v1083 = vpop.f32.mrf.mxu0
        %v1084 = vadd.f32 %v870, %v1083
        %v1085 = vpop.f32.mrf.mxu0
        %1086 = vdwg.mxu0
        %v1087 = vsel %vm874, %v1084, -inf
        %1088 = vmax.xlane.f32.xlu0 %v1087
        %v1089 = vpop.xlane.xlu0 %1088
        %v1090 = vsub.f32 %v1084, %v1089
        %v1091 = vmul.f32 %v1090, 1.442695
        %v1092 = vpow.pop %v1091
        %v1093 = vsel %vm874, %v1092, 0.0
        %1094 = vadd.xlane.f32.xlu0 %v1093
        %v1095 = vpop.xlane.xlu0 %1094
        %v1096 = vrcp.pop %v1095
        %v1097 = vmul.f32 %v1092, %v1096
        %v1098 = vpack.c.bf16 %v1097, %v1097
        %1099 = vrot.lane.b32.xlu0 %v972, 104
        %v1100 = vpop.permute.xlu0 %1099
        %v1102 = vsel %vm874, %v1098, 0
        %v1105 = vsel %vm909, %v1100, 0
        %1107 = vmatpush.bf16.msra.mxu0 0
        %1108 = vmatpush.bf16.msra.mxu0 0
        %1109 = vmatpush.bf16.msra.mxu0 0
        %1110 = vmatpush.bf16.msra.mxu0 0
        %1111 = vmatpush.bf16.msra.mxu0 0
        %1112 = vmatpush.bf16.msra.mxu0 0
        %1113 = vmatpush.bf16.msra.mxu0 0
        %1114 = vmatpush.bf16.msra.mxu0 %v1105
        %1115 = vmatmul.bf16.gmra.mxu0 %v1102
        %v1116 = vpop.f32.mrf.mxu0
        %v1117 = vadd.f32 0.0, %v1116
        %v1118 = vpop.f32.mrf.mxu0
        %1119 = vdwg.mxu0
        %v1120 = vpack.c.bf16 %v1117, %v1117
        %1122 = vrot.lane.b32.xlu0 %v1120, 24
        %v1123 = vpop.permute.xlu0 %1122
        %vm1125 = vcmask 257216
        %1126 = vst.msk [vmem:[#allocation4] sm:$0xf] %vm1125, %v1123
        %v1127 = vld [vmem:[#allocation4] sm:$0xf]
        %v1128 = vld [vmem:[#allocation11] sm:$0xf]
        %v1129 = vld [vmem:[#allocation11 + $0x4] sm:$0xf]
        %v1130 = vld [vmem:[#allocation11 + $0x8] sm:$0xf]
        %v1131 = vld [vmem:[#allocation11 + $0xc] sm:$0xf]
        %v1132 = vld [vmem:[%s10] sm:$0x1]
        %v1134 = vperm.slane %v1132, 0
        %v1140 = vunpack.c.l.b16 %v1128
        %v1141 = vunpack.c.l.b16 %v1129
        %v1142 = vunpack.c.l.b16 %v1130
        %v1143 = vunpack.c.l.b16 %v1131
        %v1144 = vpack.c.b16 %v1141, %v1140
        %v1145 = vpack.c.b16 %v1143, %v1142
        %v1149 = vsel %vm849, %v1127, 0
        %1151 = vmatpush.bf16.msra.mxu0 0
        %1152 = vmatpush.bf16.msra.mxu0 0
        %1153 = vmatpush.bf16.msra.mxu0 0
        %1154 = vmatpush.bf16.msra.mxu0 0
        %1155 = vmatpush.bf16.msra.mxu0 0
        %1156 = vmatpush.bf16.msra.mxu0 0
        %1157 = vmatpush.bf16.msra.mxu0 %v1145
        %1158 = vmatpush.bf16.msra.mxu0 %v1144
        %1159 = vmatmul.bf16.gmra.mxu0 %v1149
        %v1160 = vpop.f32.mrf.mxu0
        %v1161 = vadd.f32 %v1134, %v1160
        %v1162 = vpop.f32.mrf.mxu0
        %1163 = vdwg.mxu0
        %v1164 = vadd.f32 %v827, %v1161
        %v1165 = vsel %vm849, %v1164, 0.0
        %1166 = vadd.xlane.f32.xlu0 %v1165
        %v1167 = vpop.xlane.xlu0 %1166
        %v1168 = vrcp.pop 32.0
        %v1169 = vmul.f32 32.0, %v1168
        %v1170 = vsub.f32 1.0, %v1169
        %v1171 = vmul.f32 %v1168, %v1170
        %v1172 = vadd.f32 %v1168, %v1171
        %vm1173 = vweird.f32 %v1168
        %v1174 = vsel %vm1173, %v1168, %v1172
        %v1175 = vmul.f32 %v1167, %v1174
        %v1176 = vsub.f32 %v1164, %v1175
        %v1177 = vmul.f32 %v1176, %v1176
        %v1178 = vsel %vm849, %v1177, 0.0
        %1179 = vadd.xlane.f32.xlu0 %v1178
        %v1180 = vpop.xlane.xlu0 %1179
        %v1181 = vmul.f32 %v1180, %v1174
        %v1182 = vadd.f32 %v1181, 1e-05
        %v1183 = vrsqrt.pop %v1182
        %v1184 = vmul.f32 %v1183, %v1182
        %v1185 = vmul.f32 %v1184, %v1183
        %v1186 = vmul.f32 0.5, %v1185
        %v1187 = vsub.f32 1.5, %v1186
        %v1188 = vmul.f32 %v1183, %v1187
        %vm1189 = vweird.f32 %v1182
        %vm1190 = vweird.f32 %v1183
        %vm1191 = vmor %vm1189, %vm1190
        %v1192 = vsel %vm1191, %v1183, %v1188
        %v1193 = vmul.f32 %v1176, %v1192
        %v1194 = vld [vmem:[%s11] sm:$0x1]
        %v1196 = vperm.slane %v1194, 0
        %v1198 = vmul.f32 %v1193, %v1196
        %v1199 = vld [vmem:[%s12] sm:$0x1]
        %v1201 = vperm.slane %v1199, 0
        %v1203 = vadd.f32 %v1198, %v1201
        %v1204 = vpack.c.bf16 %v1203, %v1203
        %v1205 = vld [vmem:[#allocation13] sm:$0xf]
        %v1206 = vld [vmem:[#allocation13 + $0x4] sm:$0xf]
        %v1207 = vld [vmem:[#allocation13 + $0x8] sm:$0xf]
        %v1208 = vld [vmem:[#allocation13 + $0xc] sm:$0xf]
        %v1209 = vld [vmem:[%s14] sm:$0x1]
        %v1211 = vperm.slane %v1209, 0
        %v1217 = vunpack.c.l.b16 %v1205
        %v1218 = vunpack.c.l.b16 %v1206
        %v1219 = vunpack.c.l.b16 %v1207
        %v1220 = vunpack.c.l.b16 %v1208
        %v1221 = vpack.c.b16 %v1218, %v1217
        %v1222 = vpack.c.b16 %v1220, %v1219
        %v1226 = vsel %vm849, %v1204, 0
        %1228 = vmatpush.bf16.msra.mxu0 0
        %1229 = vmatpush.bf16.msra.mxu0 0
        %1230 = vmatpush.bf16.msra.mxu0 0
        %1231 = vmatpush.bf16.msra.mxu0 0
        %1232 = vmatpush.bf16.msra.mxu0 0
        %1233 = vmatpush.bf16.msra.mxu0 0
        %1234 = vmatpush.bf16.msra.mxu0 %v1222
        %1235 = vmatpush.bf16.msra.mxu0 %v1221
        %1236 = vmatmul.bf16.gmra.mxu0 %v1226
        %v1237 = vpop.f32.mrf.mxu0
        %v1238 = vadd.f32 %v1211, %v1237
        %v1239 = vpop.f32.mrf.mxu0
        %1240 = vdwg.mxu0
        %v1241 = vmax.f32 %v1238, 0.0
        %v1242 = vpack.c.bf16 %v1241, %v1241
        %v1243 = vld [vmem:[%s15] sm:$0xf]
        %v1244 = vld [vmem:[%s15 + $0x4] sm:$0xf]
        %v1245 = vld [vmem:[%s15 + $0x8] sm:$0xf]
        %v1246 = vld [vmem:[%s15 + $0xc] sm:$0xf]
        %v1247 = vld [vmem:[%s15 + $0x10] sm:$0xf]
        %v1248 = vld [vmem:[%s15 + $0x14] sm:$0xf]
        %v1249 = vld [vmem:[%s15 + $0x18] sm:$0xf]
        %v1250 = vld [vmem:[%s15 + $0x1c] sm:$0xf]
        %v1251 = vld [vmem:[%s16] sm:$0x1]
        %v1253 = vperm.slane %v1251, 0
        %v1263 = vunpack.c.l.b16 %v1243
        %v1264 = vunpack.c.l.b16 %v1244
        %v1265 = vunpack.c.l.b16 %v1245
        %v1266 = vunpack.c.l.b16 %v1246
        %v1267 = vunpack.c.l.b16 %v1247
        %v1268 = vunpack.c.l.b16 %v1248
        %v1269 = vunpack.c.l.b16 %v1249
        %v1270 = vunpack.c.l.b16 %v1250
        %v1271 = vpack.c.b16 %v1264, %v1263
        %v1272 = vpack.c.b16 %v1266, %v1265
        %v1273 = vpack.c.b16 %v1268, %v1267
        %v1274 = vpack.c.b16 %v1270, %v1269
        %vm1279 = vcmask 523264
        %v1281 = vsel %vm1279, %v1242, 0
        %1283 = vmatpush.bf16.msra.mxu0 0
        %1284 = vmatpush.bf16.msra.mxu0 0
        %1285 = vmatpush.bf16.msra.mxu0 0
        %1286 = vmatpush.bf16.msra.mxu0 0
        %1287 = vmatpush.bf16.msra.mxu0 %v1274
        %1288 = vmatpush.bf16.msra.mxu0 %v1273
        %1289 = vmatpush.bf16.msra.mxu0 %v1272
        %1290 = vmatpush.bf16.msra.mxu0 %v1271
        %1291 = vmatmul.bf16.gmra.mxu0 %v1281
        %v1292 = vpop.f32.mrf.mxu0
        %v1293 = vadd.f32 %v1253, %v1292
        %v1294 = vpop.f32.mrf.mxu0
        %1295 = vdwg.mxu0
        %v1296 = vadd.f32 %v1203, %v1293
        %v1297 = vsel %vm849, %v1296, 0.0
        %1298 = vadd.xlane.f32.xlu0 %v1297
        %v1299 = vpop.xlane.xlu0 %1298
        %v1300 = vmul.f32 %v1299, %v1174
        %v1301 = vsub.f32 %v1296, %v1300
        %v1302 = vmul.f32 %v1301, %v1301
        %v1303 = vsel %vm849, %v1302, 0.0
        %1304 = vadd.xlane.f32.xlu0 %v1303
        %v1305 = vpop.xlane.xlu0 %1304
        %v1306 = vmul.f32 %v1305, %v1174
        %v1307 = vadd.f32 %v1306, 1e-05
        %v1308 = vrsqrt.pop %v1307
        %v1309 = vmul.f32 %v1308, %v1307
        %v1310 = vmul.f32 %v1309, %v1308
        %v1311 = vmul.f32 0.5, %v1310
        %v1312 = vsub.f32 1.5, %v1311
        %v1313 = vmul.f32 %v1308, %v1312
        %vm1314 = vweird.f32 %v1307
        %vm1315 = vweird.f32 %v1308
        %vm1316 = vmor %vm1314, %vm1315
        %v1317 = vsel %vm1316, %v1308, %v1313
        %v1318 = vmul.f32 %v1301, %v1317
        %v1319 = vld [vmem:[%s17] sm:$0x1]
        %v1321 = vperm.slane %v1319, 0
        %v1323 = vmul.f32 %v1318, %v1321
        %v1324 = vld [vmem:[%s18] sm:$0x1]
        %v1326 = vperm.slane %v1324, 0
        %v1328 = vadd.f32 %v1323, %v1326
        %1329 = vst.msk [vmem:[%s738] sm:$0xff] %vm849, %v1328
        %s1330 = sand.u32 %s478, 1
        %s1331 = scalar_lea.sflag [#allocation7], %s1330
        %s1332 = sand.u32 %s478, 1
        %s1333 = smul.addr %s1332, 8
        %s1334 = scalar_lea.vmem [#allocation14], %s1333
        // Predicated region
        $region121: #{tpu_custom_call.1} parent=95 // pred_check
          %p1335 = pneg %p488
        $region122: #{tpu_custom_call.1} parent=95 // pred_check_branch
          %1337 = sbr.rel (%p1335) target = $region124
        $region123: #{tpu_custom_call.1} parent=95 // pred_region
          %1339 = vsyncadd %s1331, 0
          %s1340 = sadd.s32 %s45, %s44
          %s1341 = smul.addr %s1340, 8
          %s1342 = scalar_lea.hbm %s19, %s1341
          %s1344 = sshll.u32 %s1334, 4
          %s1345 = int_to_ptr.vmem [resolvable:$true] %s1344
          %s1346 = sshll.u32 %s1342, 4
          %s1347 = int_to_ptr.hbm [resolvable:$true] %s1346
          %1349 = dma.vmem_to_hbm [thread:$0]  %s1345, 128, %s1347, %s1331
        $region124: #{tpu_custom_call.1} parent=95 // pred_fallthru
          _
      $region96: #{tpu_custom_call.1} parent=5 // pred_fallthru
        _
      %p1350 = scmp.le.s32.totalorder 2, %s35
      // Predicated region
      $region125: #{tpu_custom_call.1} parent=5 // pred_check
        %p1351 = pneg %p1350
      $region126: #{tpu_custom_call.1} parent=5 // pred_check_branch
        %1353 = sbr.rel (%p1351) target = $region128
      $region127: #{tpu_custom_call.1} parent=5 // pred_region
        %s1354 = ssub.s32 %s35, 2
        // Predicated region
        $region129: #{tpu_custom_call.1} parent=127 // pred_check
          %p1355 = pneg %p494
        $region130: #{tpu_custom_call.1} parent=127 // pred_check_branch
          %1357 = sbr.rel (%p1355) target = $region132
        $region131: #{tpu_custom_call.1} parent=127 // pred_region
          %s1358 = sand.u32 %s479, 1
          %s1359 = scalar_lea.sflag [#allocation7], %s1358
          %s1360 = sand.u32 %s479, 1
          %s1361 = smul.addr %s1360, 8
          %s1362 = scalar_lea.vmem [#allocation14], %s1361
          %1364 = dma.done %s1359, 128
        $region132: #{tpu_custom_call.1} parent=127 // pred_fallthru
          _
      $region128: #{tpu_custom_call.1} parent=5 // pred_fallthru
        _
    $region6: #{tpu_custom_call.1} parent=1 // loop_footer
      %s39 = sadd.s32 1, %s35
    $region7: #{tpu_custom_call.1} parent=1 // loop_footer_branch
      %34 = sbr.rel target = $region3
    $region8: #{tpu_custom_call.1} parent=1 // loop_exit
      _
    %1365 = vsyncpa [#allocation6], 1
    %s1366 = scalar_lea.sflag [#allocation6], 1
    %1367 = vsyncpa %s1366, 1
    %1368 = vsyncpa [#allocation9], 1
    %s1369 = scalar_lea.sflag [#allocation9], 1
    %1370 = vsyncpa %s1369, 1
    %1371 = vsyncpa [#allocation12], 1
    %1372 = vsyncpa [#allocation7], 1
    %s1373 = scalar_lea.sflag [#allocation7], 1
    %1374 = vsyncpa %s1373, 1

</llo_original>
